<compile_context>
chip_gen: v7x
topology: tpu7x:2x2x1
jax: 0.10.0
libtpu: 0.0.40
codegen_flags: <defaults>
</compile_context>

<pallas_src>
import functools

import jax
import jax.numpy as jnp
import numpy as np
from jax import lax
from jax.experimental import pallas as pl
from jax.experimental.pallas import tpu as pltpu

_LANES = 128
_VMEM_LIMIT = 32 * 1024 * 1024  # fits v5e/v6e (128 MiB) and v7x (64 MiB) comfortably


# ---------------------------------------------------------------------------
# Pallas kernels
# ---------------------------------------------------------------------------
def _conv_relu_pool_kernel(x_ref, w_ref, b_ref, o_ref, *, taps, out_rows):
    """Fused valid conv + bias + ReLU + 2x2/2 maxpool for one image.

    x_ref: [H, W*Cin]          fp32; row h, column w*Cin + c (NHWC rows).
    w_ref: [taps, W*Cin, 256]  bf16 block-Toeplitz weights; columns [0,128)
                               produce even output columns (w=2j), columns
                               [128,256) odd ones (w=2j+1), so the W-pool pair
                               sits exactly 128 lanes apart.
    b_ref: [1, 256]            fp32 bias tiled per output column.
    o_ref: [out_rows, 128]     fp32 pooled output, column j*Cout + co.
    """
    nc = b_ref.shape[-1]
    acc_e = jnp.zeros((out_rows, nc), jnp.float32)   # conv rows 2r
    acc_o = jnp.zeros((out_rows, nc), jnp.float32)   # conv rows 2r + 1
    for k in range(taps):
        w_k = w_ref[k]                                            # [W*Cin, 256] bf16
        x_e = x_ref[pl.ds(k, out_rows, 2), :].astype(jnp.bfloat16)
        x_o = x_ref[pl.ds(k + 1, out_rows, 2), :].astype(jnp.bfloat16)
        acc_e = acc_e + jnp.dot(x_e, w_k, preferred_element_type=jnp.float32)
        acc_o = acc_o + jnp.dot(x_o, w_k, preferred_element_type=jnp.float32)
    acc = jnp.maximum(acc_e, acc_o) + b_ref[...]     # H-pool (rows) + bias
    acc = jnp.maximum(acc, 0.0)                      # ReLU (commutes with max)
    half = nc // 2
    o_ref[...] = jnp.maximum(acc[:, :half], acc[:, half:])   # W-pool (columns)


def _fc_fused_kernel(x_ref, w1_ref, b1_ref, w2_ref, b2_ref, w3_ref, b3_ref, o_ref):
    """fc1 + ReLU + fc2 + ReLU + fc3; intermediates stay in vregs (no HBM)."""
    h = jnp.dot(x_ref[...].astype(jnp.bfloat16), w1_ref[...],
                preferred_element_type=jnp.float32) + b1_ref[...]
    h = jnp.maximum(h, 0.0)
    h = jnp.dot(h.astype(jnp.bfloat16), w2_ref[...],
                preferred_element_type=jnp.float32) + b2_ref[...]
    h = jnp.maximum(h, 0.0)
    h = jnp.dot(h.astype(jnp.bfloat16), w3_ref[...],
                preferred_element_type=jnp.float32) + b3_ref[...]
    o_ref[...] = h.astype(o_ref.dtype)


# ---------------------------------------------------------------------------
# pallas_call wrappers
# ---------------------------------------------------------------------------
def conv_relu_pool(x_rows, w_big, bias, *, out_rows):
    """x_rows: [B, H, W*Cin] fp32 -> [B, out_rows, 128] fp32 (pooled, lane-dense)."""
    B, H, WC = x_rows.shape
    taps, _, nc = w_big.shape
    kernel = functools.partial(_conv_relu_pool_kernel, taps=taps, out_rows=out_rows)
    return pl.pallas_call(
        kernel,
        out_shape=jax.ShapeDtypeStruct((B, out_rows, nc // 2), jnp.float32),
        grid=(B,),
        in_specs=[
            pl.BlockSpec((None, H, WC), lambda b: (b, 0, 0)),
            pl.BlockSpec((taps, WC, nc), lambda b: (0, 0, 0)),
            pl.BlockSpec((1, nc), lambda b: (0, 0)),
        ],
        out_specs=pl.BlockSpec((None, out_rows, nc // 2), lambda b: (b, 0, 0)),
        compiler_params=pltpu.CompilerParams(
            dimension_semantics=("parallel",),
            vmem_limit_bytes=_VMEM_LIMIT,
        ),
    )(x_rows, w_big, bias)


def fc_head(x, fc):
    """Fused fc1/fc2/fc3. x: [B, 640] fp32 -> [B, 128] fp32 (cols 10..127 zero)."""
    B, F = x.shape
    tm = B if B <= 256 else 256          # 8-aligned row tiles once B is large
    return pl.pallas_call(
        _fc_fused_kernel,
        out_shape=jax.ShapeDtypeStruct((B, _LANES), jnp.float32),
        grid=(pl.cdiv(B, tm),),
        in_specs=[
            pl.BlockSpec((tm, F), lambda i: (i, 0)),
            pl.BlockSpec((F, _LANES), lambda i: (0, 0)),
            pl.BlockSpec((1, _LANES), lambda i: (0, 0)),
            pl.BlockSpec((_LANES, _LANES), lambda i: (0, 0)),
            pl.BlockSpec((1, _LANES), lambda i: (0, 0)),
            pl.BlockSpec((_LANES, _LANES), lambda i: (0, 0)),
            pl.BlockSpec((1, _LANES), lambda i: (0, 0)),
        ],
        out_specs=pl.BlockSpec((tm, _LANES), lambda i: (i, 0)),
        compiler_params=pltpu.CompilerParams(
            dimension_semantics=("parallel",),
            vmem_limit_bytes=_VMEM_LIMIT,
        ),
    )(x, fc["w1"], fc["b1"], fc["w2"], fc["b2"], fc["w3"], fc["b3"])


# ---------------------------------------------------------------------------
# One-time (offline) parameter packing
# ---------------------------------------------------------------------------
def _pack_conv(w, b, *, in_cols, wo_half):
    """Pack torch conv weight [Cout, Cin, KH, KW] into BigW [KH, in_cols, 256].

    BigW row index = flattened NHWC input column (w*Cin + c).
    Output column j*Cout + co        -> conv output at (row, w=2j,   co)
    Output column 128 + j*Cout + co  -> conv output at (row, w=2j+1, co)
    """
    w = np.asarray(w, np.float32)
    b = np.asarray(b, np.float32)
    cout, cin, kh, kw = w.shape
    assert ((2 * wo_half - 1) + (kw - 1) + 1) * cin <= in_cols
    big = np.zeros((kh, in_cols, 2 * _LANES), np.float32)
    bias = np.zeros((1, 2 * _LANES), np.float32)
    w_t = w.transpose(2, 3, 1, 0)                      # [kh, kw, cin, cout]
    for j in range(wo_half):
        for par in range(2):                           # even / odd output column
            wo = 2 * j + par
            col = par * _LANES + j * cout
            bias[0, col:col + cout] = b
            for k in range(kw):
                row = (wo + k) * cin
                big[:, row:row + cin, col:col + cout] = w_t[:, k]
    return jnp.asarray(big, jnp.bfloat16), jnp.asarray(bias, jnp.float32)


def pack_params(p):
    packed = {}
    packed["c1_w"], packed["c1_b"] = _pack_conv(p["conv1_w"], p["conv1_b"],
                                                in_cols=32 * 3, wo_half=14)
    packed["c2_w"], packed["c2_b"] = _pack_conv(p["conv2_w"], p["conv2_b"],
                                                in_cols=_LANES, wo_half=5)

    # fc1: fold the PyTorch NCHW flatten order (c*25 + h*5 + w) into the packed
    # weight so the conv2 output layout (h, w*16 + c, 128-col stride per h) is
    # consumed directly -> no runtime transpose. All fc N dims padded to 128 so
    # every output store is a full-lane store; pads are zero so ReLU keeps them 0.
    fc1 = np.asarray(p["fc1_w"], np.float32)                         # [120, 400]
    w1 = np.zeros((5, _LANES, _LANES), np.float32)
    w1[:, :80, :120] = (fc1.reshape(120, 16, 5, 5)
                        .transpose(2, 3, 1, 0).reshape(5, 80, 120))
    b1 = np.zeros((1, _LANES), np.float32)
    b1[0, :120] = np.asarray(p["fc1_b"], np.float32)

    w2 = np.zeros((_LANES, _LANES), np.float32)
    w2[:120, :84] = np.asarray(p["fc2_w"], np.float32).T
    b2 = np.zeros((1, _LANES), np.float32)
    b2[0, :84] = np.asarray(p["fc2_b"], np.float32)

    w3 = np.zeros((_LANES, _LANES), np.float32)
    w3[:84, :10] = np.asarray(p["fc3_w"], np.float32).T
    b3 = np.zeros((1, _LANES), np.float32)
    b3[0, :10] = np.asarray(p["fc3_b"], np.float32)

    packed["fc"] = dict(
        w1=jnp.asarray(w1.reshape(5 * _LANES, _LANES), jnp.bfloat16),
        b1=jnp.asarray(b1),
        w2=jnp.asarray(w2, jnp.bfloat16), b2=jnp.asarray(b2),
        w3=jnp.asarray(w3, jnp.bfloat16), b3=jnp.asarray(b3))
    return packed


# ---------------------------------------------------------------------------
# Forward pass
# ---------------------------------------------------------------------------
def dropnet_forward(x_nchw, packed):
    # TODO(synk): dropout with p > 0 not implemented (module default p=0 -> identity).
    B = x_nchw.shape[0]
    x = jnp.transpose(x_nchw, (0, 2, 3, 1)).reshape(B, 32, 32 * 3)      # NHWC rows
    y = conv_relu_pool(x, packed["c1_w"], packed["c1_b"], out_rows=14)   # [B,14,128]
    y = conv_relu_pool(y, packed["c2_w"], packed["c2_b"], out_rows=5)    # [B, 5,128]
    y = y.reshape(B, 5 * _LANES)                                         # lane-dense flatten
    out = fc_head(y, packed["fc"])                                       # [B, 128]
    return out[:, :10]


# ---------------------------------------------------------------------------
# Reference + setup
# ---------------------------------------------------------------------------
def init_params(key):
    """Deterministic synthetic parameters with PyTorch shapes."""
    def uni(k, shape, fan_in):
        bound = 1.0 / jnp.sqrt(jnp.float32(fan_in))
        return jax.random.uniform(k, shape, jnp.float32, -bound, bound)
    ks = jax.random.split(key, 10)
    return {
        "conv1_w": uni(ks[0], (6, 3, 5, 5), 75),   "conv1_b": uni(ks[1], (6,), 75),
        "conv2_w": uni(ks[2], (16, 6, 5, 5), 150), "conv2_b": uni(ks[3], (16,), 150),
        "fc1_w": uni(ks[4], (120, 400), 400),      "fc1_b": uni(ks[5], (120,), 400),
        "fc2_w": uni(ks[6], (84, 120), 120),       "fc2_b": uni(ks[7], (84,), 120),
        "fc3_w": uni(ks[8], (10, 84), 84),         "fc3_b": uni(ks[9], (10,), 84),
    }


def dropnet_reference(x, p):
    dn = ("NCHW", "OIHW", "NCHW")
    y = lax.conv_general_dilated(x, p["conv1_w"], (1, 1), "VALID", dimension_numbers=dn)
    y = jnp.maximum(y + p["conv1_b"][None, :, None, None], 0.0)
    y = lax.reduce_window(y, -jnp.inf, lax.max, (1, 1, 2, 2), (1, 1, 2, 2), "VALID")
    y = lax.conv_general_dilated(y, p["conv2_w"], (1, 1), "VALID", dimension_numbers=dn)
    y = jnp.maximum(y + p["conv2_b"][None, :, None, None], 0.0)
    y = lax.reduce_window(y, -jnp.inf, lax.max, (1, 1, 2, 2), (1, 1, 2, 2), "VALID")
    y = y.reshape(y.shape[0], -1)
    y = jnp.maximum(y @ p["fc1_w"].T + p["fc1_b"], 0.0)
    y = jnp.maximum(y @ p["fc2_w"].T + p["fc2_b"], 0.0)
    return y @ p["fc3_w"].T + p["fc3_b"]


if __name__ == "__main__":
    key = jax.random.PRNGKey(0)
    k_x, k_p = jax.random.split(key)
    # Input must be 32x32 so two (conv5 + pool2) stages give 16 x 5 x 5 = 400 = fc1 in.
    x = jax.random.normal(k_x, (2, 3, 32, 32), dtype=jnp.float32)
    params = init_params(k_p)
    packed = pack_params(params)

    out = jax.jit(dropnet_forward)(x, packed)
    out = jax.block_until_ready(out)
    assert out.shape == (2, 10), out.shape

    # Correctness vs plain-JAX fp32 reference (kernel matmuls use bf16 operands).
    ref = dropnet_reference(x, params)
    np.testing.assert_allclose(np.asarray(out), np.asarray(ref), rtol=5e-2, atol=5e-2)
    print("KERNEL_OK")
</pallas_src>

<mosaic_0001>
module attributes {stable_mosaic.version = 11 : i64} {
  func.func @_conv_relu_pool_kernel(%arg0: i32, %arg1: memref<1x32x96xf32, #tpu.memory_space<vmem>>, %arg2: memref<5x96x256xbf16, #tpu.memory_space<vmem>>, %arg3: memref<1x256xf32, #tpu.memory_space<vmem>>, %arg4: memref<1x14x128xf32, #tpu.memory_space<vmem>>) attributes {dimension_semantics = [#tpu.dimension_semantics<parallel>], iteration_bounds = array<i64: 2>, scalar_prefetch = 0 : i64, scratch_operands = 0 : i64, tpu.core_type = #tpu.core_type<tc>, window_params = [{transform_indices = @transform_0, window_bounds = array<i64: 1, 32, 96>}, {pipeline_mode = #tpu.pipeline_mode<synchronous>, transform_indices = @transform_1, window_bounds = array<i64: 5, 96, 256>}, {pipeline_mode = #tpu.pipeline_mode<synchronous>, transform_indices = @transform_2, window_bounds = array<i64: 1, 256>}, {transform_indices = @transform_3, window_bounds = array<i64: 1, 14, 128>}]} {
    %cst = arith.constant 0.000000e+00 : f32
    %0 = vector.broadcast %cst : f32 to vector<14x256xf32>
    %cst_0 = arith.constant 0.000000e+00 : f32
    %1 = vector.broadcast %cst_0 : f32 to vector<14x256xf32>
    %c0 = arith.constant 0 : index
    %c0_1 = arith.constant 0 : index
    %c0_2 = arith.constant 0 : index
    %2 = vector.load %arg2[%c0, %c0_1, %c0_2] : memref<5x96x256xbf16, #tpu.memory_space<vmem>>, vector<1x96x256xbf16>
    %3 = vector.shape_cast %2 : vector<1x96x256xbf16> to vector<96x256xbf16>
    %c0_3 = arith.constant 0 : index
    %c0_4 = arith.constant 0 : index
    %c0_5 = arith.constant 0 : index
    %4 = tpu.strided_load %arg1[%c0_3, %c0_4, %c0_5] {strides = array<i32: 1, 2, 1>} : memref<1x32x96xf32, #tpu.memory_space<vmem>>, vector<1x14x96xf32>
    %5 = vector.shape_cast %4 : vector<1x14x96xf32> to vector<14x96xf32>
    %6 = arith.truncf %5 : vector<14x96xf32> to vector<14x96xbf16>
    %c0_6 = arith.constant 0 : index
    %c1 = arith.constant 1 : index
    %c0_7 = arith.constant 0 : index
    %7 = tpu.strided_load %arg1[%c0_6, %c1, %c0_7] {strides = array<i32: 1, 2, 1>} : memref<1x32x96xf32, #tpu.memory_space<vmem>>, vector<1x14x96xf32>
    %8 = vector.shape_cast %7 : vector<1x14x96xf32> to vector<14x96xf32>
    %9 = arith.truncf %8 : vector<14x96xf32> to vector<14x96xbf16>
    %cst_8 = arith.constant dense<0.000000e+00> : vector<14x256xf32>
    %10 = tpu.matmul %6, %3, %cst_8 {dimension_numbers = #tpu.dot_dimension_numbers<[1], [0], [0], [1], [0, 0, 1, 1], [], []>} : vector<14x96xbf16>, vector<96x256xbf16>, vector<14x256xf32> -> vector<14x256xf32>
    %11 = arith.addf %0, %10 : vector<14x256xf32>
    %cst_9 = arith.constant dense<0.000000e+00> : vector<14x256xf32>
    %12 = tpu.matmul %9, %3, %cst_9 {dimension_numbers = #tpu.dot_dimension_numbers<[1], [0], [0], [1], [0, 0, 1, 1], [], []>} : vector<14x96xbf16>, vector<96x256xbf16>, vector<14x256xf32> -> vector<14x256xf32>
    %13 = arith.addf %1, %12 : vector<14x256xf32>
    %c1_10 = arith.constant 1 : index
    %c0_11 = arith.constant 0 : index
    %c0_12 = arith.constant 0 : index
    %14 = vector.load %arg2[%c1_10, %c0_11, %c0_12] : memref<5x96x256xbf16, #tpu.memory_space<vmem>>, vector<1x96x256xbf16>
    %15 = vector.shape_cast %14 : vector<1x96x256xbf16> to vector<96x256xbf16>
    %c0_13 = arith.constant 0 : index
    %c1_14 = arith.constant 1 : index
    %c0_15 = arith.constant 0 : index
    %16 = tpu.strided_load %arg1[%c0_13, %c1_14, %c0_15] {strides = array<i32: 1, 2, 1>} : memref<1x32x96xf32, #tpu.memory_space<vmem>>, vector<1x14x96xf32>
    %17 = vector.shape_cast %16 : vector<1x14x96xf32> to vector<14x96xf32>
    %18 = arith.truncf %17 : vector<14x96xf32> to vector<14x96xbf16>
    %c0_16 = arith.constant 0 : index
    %c2 = arith.constant 2 : index
    %c0_17 = arith.constant 0 : index
    %19 = tpu.strided_load %arg1[%c0_16, %c2, %c0_17] {strides = array<i32: 1, 2, 1>} : memref<1x32x96xf32, #tpu.memory_space<vmem>>, vector<1x14x96xf32>
    %20 = vector.shape_cast %19 : vector<1x14x96xf32> to vector<14x96xf32>
    %21 = arith.truncf %20 : vector<14x96xf32> to vector<14x96xbf16>
    %cst_18 = arith.constant dense<0.000000e+00> : vector<14x256xf32>
    %22 = tpu.matmul %18, %15, %cst_18 {dimension_numbers = #tpu.dot_dimension_numbers<[1], [0], [0], [1], [0, 0, 1, 1], [], []>} : vector<14x96xbf16>, vector<96x256xbf16>, vector<14x256xf32> -> vector<14x256xf32>
    %23 = arith.addf %11, %22 : vector<14x256xf32>
    %cst_19 = arith.constant dense<0.000000e+00> : vector<14x256xf32>
    %24 = tpu.matmul %21, %15, %cst_19 {dimension_numbers = #tpu.dot_dimension_numbers<[1], [0], [0], [1], [0, 0, 1, 1], [], []>} : vector<14x96xbf16>, vector<96x256xbf16>, vector<14x256xf32> -> vector<14x256xf32>
    %25 = arith.addf %13, %24 : vector<14x256xf32>
    %c2_20 = arith.constant 2 : index
    %c0_21 = arith.constant 0 : index
    %c0_22 = arith.constant 0 : index
    %26 = vector.load %arg2[%c2_20, %c0_21, %c0_22] : memref<5x96x256xbf16, #tpu.memory_space<vmem>>, vector<1x96x256xbf16>
    %27 = vector.shape_cast %26 : vector<1x96x256xbf16> to vector<96x256xbf16>
    %c0_23 = arith.constant 0 : index
    %c2_24 = arith.constant 2 : index
    %c0_25 = arith.constant 0 : index
    %28 = tpu.strided_load %arg1[%c0_23, %c2_24, %c0_25] {strides = array<i32: 1, 2, 1>} : memref<1x32x96xf32, #tpu.memory_space<vmem>>, vector<1x14x96xf32>
    %29 = vector.shape_cast %28 : vector<1x14x96xf32> to vector<14x96xf32>
    %30 = arith.truncf %29 : vector<14x96xf32> to vector<14x96xbf16>
    %c0_26 = arith.constant 0 : index
    %c3 = arith.constant 3 : index
    %c0_27 = arith.constant 0 : index
    %31 = tpu.strided_load %arg1[%c0_26, %c3, %c0_27] {strides = array<i32: 1, 2, 1>} : memref<1x32x96xf32, #tpu.memory_space<vmem>>, vector<1x14x96xf32>
    %32 = vector.shape_cast %31 : vector<1x14x96xf32> to vector<14x96xf32>
    %33 = arith.truncf %32 : vector<14x96xf32> to vector<14x96xbf16>
    %cst_28 = arith.constant dense<0.000000e+00> : vector<14x256xf32>
    %34 = tpu.matmul %30, %27, %cst_28 {dimension_numbers = #tpu.dot_dimension_numbers<[1], [0], [0], [1], [0, 0, 1, 1], [], []>} : vector<14x96xbf16>, vector<96x256xbf16>, vector<14x256xf32> -> vector<14x256xf32>
    %35 = arith.addf %23, %34 : vector<14x256xf32>
    %cst_29 = arith.constant dense<0.000000e+00> : vector<14x256xf32>
    %36 = tpu.matmul %33, %27, %cst_29 {dimension_numbers = #tpu.dot_dimension_numbers<[1], [0], [0], [1], [0, 0, 1, 1], [], []>} : vector<14x96xbf16>, vector<96x256xbf16>, vector<14x256xf32> -> vector<14x256xf32>
    %37 = arith.addf %25, %36 : vector<14x256xf32>
    %c3_30 = arith.constant 3 : index
    %c0_31 = arith.constant 0 : index
    %c0_32 = arith.constant 0 : index
    %38 = vector.load %arg2[%c3_30, %c0_31, %c0_32] : memref<5x96x256xbf16, #tpu.memory_space<vmem>>, vector<1x96x256xbf16>
    %39 = vector.shape_cast %38 : vector<1x96x256xbf16> to vector<96x256xbf16>
    %c0_33 = arith.constant 0 : index
    %c3_34 = arith.constant 3 : index
    %c0_35 = arith.constant 0 : index
    %40 = tpu.strided_load %arg1[%c0_33, %c3_34, %c0_35] {strides = array<i32: 1, 2, 1>} : memref<1x32x96xf32, #tpu.memory_space<vmem>>, vector<1x14x96xf32>
    %41 = vector.shape_cast %40 : vector<1x14x96xf32> to vector<14x96xf32>
    %42 = arith.truncf %41 : vector<14x96xf32> to vector<14x96xbf16>
    %c0_36 = arith.constant 0 : index
    %c4 = arith.constant 4 : index
    %c0_37 = arith.constant 0 : index
    %43 = tpu.strided_load %arg1[%c0_36, %c4, %c0_37] {strides = array<i32: 1, 2, 1>} : memref<1x32x96xf32, #tpu.memory_space<vmem>>, vector<1x14x96xf32>
    %44 = vector.shape_cast %43 : vector<1x14x96xf32> to vector<14x96xf32>
    %45 = arith.truncf %44 : vector<14x96xf32> to vector<14x96xbf16>
    %cst_38 = arith.constant dense<0.000000e+00> : vector<14x256xf32>
    %46 = tpu.matmul %42, %39, %cst_38 {dimension_numbers = #tpu.dot_dimension_numbers<[1], [0], [0], [1], [0, 0, 1, 1], [], []>} : vector<14x96xbf16>, vector<96x256xbf16>, vector<14x256xf32> -> vector<14x256xf32>
    %47 = arith.addf %35, %46 : vector<14x256xf32>
    %cst_39 = arith.constant dense<0.000000e+00> : vector<14x256xf32>
    %48 = tpu.matmul %45, %39, %cst_39 {dimension_numbers = #tpu.dot_dimension_numbers<[1], [0], [0], [1], [0, 0, 1, 1], [], []>} : vector<14x96xbf16>, vector<96x256xbf16>, vector<14x256xf32> -> vector<14x256xf32>
    %49 = arith.addf %37, %48 : vector<14x256xf32>
    %c4_40 = arith.constant 4 : index
    %c0_41 = arith.constant 0 : index
    %c0_42 = arith.constant 0 : index
    %50 = vector.load %arg2[%c4_40, %c0_41, %c0_42] : memref<5x96x256xbf16, #tpu.memory_space<vmem>>, vector<1x96x256xbf16>
    %51 = vector.shape_cast %50 : vector<1x96x256xbf16> to vector<96x256xbf16>
    %c0_43 = arith.constant 0 : index
    %c4_44 = arith.constant 4 : index
    %c0_45 = arith.constant 0 : index
    %52 = tpu.strided_load %arg1[%c0_43, %c4_44, %c0_45] {strides = array<i32: 1, 2, 1>} : memref<1x32x96xf32, #tpu.memory_space<vmem>>, vector<1x14x96xf32>
    %53 = vector.shape_cast %52 : vector<1x14x96xf32> to vector<14x96xf32>
    %54 = arith.truncf %53 : vector<14x96xf32> to vector<14x96xbf16>
    %c0_46 = arith.constant 0 : index
    %c5 = arith.constant 5 : index
    %c0_47 = arith.constant 0 : index
    %55 = tpu.strided_load %arg1[%c0_46, %c5, %c0_47] {strides = array<i32: 1, 2, 1>} : memref<1x32x96xf32, #tpu.memory_space<vmem>>, vector<1x14x96xf32>
    %56 = vector.shape_cast %55 : vector<1x14x96xf32> to vector<14x96xf32>
    %57 = arith.truncf %56 : vector<14x96xf32> to vector<14x96xbf16>
    %cst_48 = arith.constant dense<0.000000e+00> : vector<14x256xf32>
    %58 = tpu.matmul %54, %51, %cst_48 {dimension_numbers = #tpu.dot_dimension_numbers<[1], [0], [0], [1], [0, 0, 1, 1], [], []>} : vector<14x96xbf16>, vector<96x256xbf16>, vector<14x256xf32> -> vector<14x256xf32>
    %59 = arith.addf %47, %58 : vector<14x256xf32>
    %cst_49 = arith.constant dense<0.000000e+00> : vector<14x256xf32>
    %60 = tpu.matmul %57, %51, %cst_49 {dimension_numbers = #tpu.dot_dimension_numbers<[1], [0], [0], [1], [0, 0, 1, 1], [], []>} : vector<14x96xbf16>, vector<96x256xbf16>, vector<14x256xf32> -> vector<14x256xf32>
    %61 = arith.addf %49, %60 : vector<14x256xf32>
    %62 = arith.maximumf %59, %61 : vector<14x256xf32>
    %c0_50 = arith.constant 0 : index
    %c0_51 = arith.constant 0 : index
    %63 = vector.load %arg3[%c0_50, %c0_51] : memref<1x256xf32, #tpu.memory_space<vmem>>, vector<1x256xf32>
    %64 = vector.broadcast %63 : vector<1x256xf32> to vector<14x256xf32>
    %65 = arith.addf %62, %64 : vector<14x256xf32>
    %cst_52 = arith.constant 0.000000e+00 : f32
    %66 = vector.broadcast %cst_52 : f32 to vector<14x256xf32>
    %67 = arith.maximumf %65, %66 : vector<14x256xf32>
    %68 = vector.extract_strided_slice %67 {offsets = [0, 0], sizes = [14, 128], strides = [1, 1]} : vector<14x256xf32> to vector<14x128xf32>
    %69 = vector.extract_strided_slice %67 {offsets = [0, 128], sizes = [14, 128], strides = [1, 1]} : vector<14x256xf32> to vector<14x128xf32>
    %70 = arith.maximumf %68, %69 : vector<14x128xf32>
    %c0_53 = arith.constant 0 : index
    %c0_54 = arith.constant 0 : index
    %c0_55 = arith.constant 0 : index
    %71 = vector.load %arg4[%c0_53, %c0_54, %c0_55] : memref<1x14x128xf32, #tpu.memory_space<vmem>>, vector<1x14x128xf32>
    %72 = vector.shape_cast %71 : vector<1x14x128xf32> to vector<14x128xf32>
    %73 = vector.shape_cast %70 : vector<14x128xf32> to vector<1x14x128xf32>
    tpu.vector_store %arg4[%c0_53, %c0_54, %c0_55], %73 {strides = array<i32>} : memref<1x14x128xf32, #tpu.memory_space<vmem>>, vector<1x14x128xf32>,
    return
  }
  func.func @transform_0(%arg0: i32) -> (i32, i32, i32) {
    %c0_i32 = arith.constant 0 : i32
    %c0_i32_0 = arith.constant 0 : i32
    %c0_i32_1 = arith.constant 0 : i32
    return %arg0, %c0_i32, %c0_i32_0 : i32, i32, i32
  }
  func.func @transform_1(%arg0: i32) -> (i32, i32, i32) {
    %c0_i32 = arith.constant 0 : i32
    %c0_i32_0 = arith.constant 0 : i32
    %c0_i32_1 = arith.constant 0 : i32
    %c0_i32_2 = arith.constant 0 : i32
    return %c0_i32, %c0_i32_0, %c0_i32_1 : i32, i32, i32
  }
  func.func @transform_2(%arg0: i32) -> (i32, i32) {
    %c0_i32 = arith.constant 0 : i32
    %c0_i32_0 = arith.constant 0 : i32
    %c0_i32_1 = arith.constant 0 : i32
    return %c0_i32, %c0_i32_0 : i32, i32
  }
  func.func @transform_3(%arg0: i32) -> (i32, i32, i32) {
    %c0_i32 = arith.constant 0 : i32
    %c0_i32_0 = arith.constant 0 : i32
    %c0_i32_1 = arith.constant 0 : i32
    return %arg0, %c0_i32, %c0_i32_0 : i32, i32, i32
  }
}

module attributes {stable_mosaic.version = 11 : i64} {
  func.func @_conv_relu_pool_kernel(%arg0: i32, %arg1: memref<1x14x128xf32, #tpu.memory_space<vmem>>, %arg2: memref<5x128x256xbf16, #tpu.memory_space<vmem>>, %arg3: memref<1x256xf32, #tpu.memory_space<vmem>>, %arg4: memref<1x5x128xf32, #tpu.memory_space<vmem>>) attributes {dimension_semantics = [#tpu.dimension_semantics<parallel>], iteration_bounds = array<i64: 2>, scalar_prefetch = 0 : i64, scratch_operands = 0 : i64, tpu.core_type = #tpu.core_type<tc>, window_params = [{transform_indices = @transform_0, window_bounds = array<i64: 1, 14, 128>}, {pipeline_mode = #tpu.pipeline_mode<synchronous>, transform_indices = @transform_1, window_bounds = array<i64: 5, 128, 256>}, {pipeline_mode = #tpu.pipeline_mode<synchronous>, transform_indices = @transform_2, window_bounds = array<i64: 1, 256>}, {transform_indices = @transform_3, window_bounds = array<i64: 1, 5, 128>}]} {
    %cst = arith.constant 0.000000e+00 : f32
    %0 = vector.broadcast %cst : f32 to vector<5x256xf32>
    %cst_0 = arith.constant 0.000000e+00 : f32
    %1 = vector.broadcast %cst_0 : f32 to vector<5x256xf32>
    %c0 = arith.constant 0 : index
    %c0_1 = arith.constant 0 : index
    %c0_2 = arith.constant 0 : index
    %2 = vector.load %arg2[%c0, %c0_1, %c0_2] : memref<5x128x256xbf16, #tpu.memory_space<vmem>>, vector<1x128x256xbf16>
    %3 = vector.shape_cast %2 : vector<1x128x256xbf16> to vector<128x256xbf16>
    %c0_3 = arith.constant 0 : index
    %c0_4 = arith.constant 0 : index
    %c0_5 = arith.constant 0 : index
    %4 = tpu.strided_load %arg1[%c0_3, %c0_4, %c0_5] {strides = array<i32: 1, 2, 1>} : memref<1x14x128xf32, #tpu.memory_space<vmem>>, vector<1x5x128xf32>
    %5 = vector.shape_cast %4 : vector<1x5x128xf32> to vector<5x128xf32>
    %6 = arith.truncf %5 : vector<5x128xf32> to vector<5x128xbf16>
    %c0_6 = arith.constant 0 : index
    %c1 = arith.constant 1 : index
    %c0_7 = arith.constant 0 : index
    %7 = tpu.strided_load %arg1[%c0_6, %c1, %c0_7] {strides = array<i32: 1, 2, 1>} : memref<1x14x128xf32, #tpu.memory_space<vmem>>, vector<1x5x128xf32>
    %8 = vector.shape_cast %7 : vector<1x5x128xf32> to vector<5x128xf32>
    %9 = arith.truncf %8 : vector<5x128xf32> to vector<5x128xbf16>
    %cst_8 = arith.constant dense<0.000000e+00> : vector<5x256xf32>
    %10 = tpu.matmul %6, %3, %cst_8 {dimension_numbers = #tpu.dot_dimension_numbers<[1], [0], [0], [1], [0, 0, 1, 1], [], []>} : vector<5x128xbf16>, vector<128x256xbf16>, vector<5x256xf32> -> vector<5x256xf32>
    %11 = arith.addf %0, %10 : vector<5x256xf32>
    %cst_9 = arith.constant dense<0.000000e+00> : vector<5x256xf32>
    %12 = tpu.matmul %9, %3, %cst_9 {dimension_numbers = #tpu.dot_dimension_numbers<[1], [0], [0], [1], [0, 0, 1, 1], [], []>} : vector<5x128xbf16>, vector<128x256xbf16>, vector<5x256xf32> -> vector<5x256xf32>
    %13 = arith.addf %1, %12 : vector<5x256xf32>
    %c1_10 = arith.constant 1 : index
    %c0_11 = arith.constant 0 : index
    %c0_12 = arith.constant 0 : index
    %14 = vector.load %arg2[%c1_10, %c0_11, %c0_12] : memref<5x128x256xbf16, #tpu.memory_space<vmem>>, vector<1x128x256xbf16>
    %15 = vector.shape_cast %14 : vector<1x128x256xbf16> to vector<128x256xbf16>
    %c0_13 = arith.constant 0 : index
    %c1_14 = arith.constant 1 : index
    %c0_15 = arith.constant 0 : index
    %16 = tpu.strided_load %arg1[%c0_13, %c1_14, %c0_15] {strides = array<i32: 1, 2, 1>} : memref<1x14x128xf32, #tpu.memory_space<vmem>>, vector<1x5x128xf32>
    %17 = vector.shape_cast %16 : vector<1x5x128xf32> to vector<5x128xf32>
    %18 = arith.truncf %17 : vector<5x128xf32> to vector<5x128xbf16>
    %c0_16 = arith.constant 0 : index
    %c2 = arith.constant 2 : index
    %c0_17 = arith.constant 0 : index
    %19 = tpu.strided_load %arg1[%c0_16, %c2, %c0_17] {strides = array<i32: 1, 2, 1>} : memref<1x14x128xf32, #tpu.memory_space<vmem>>, vector<1x5x128xf32>
    %20 = vector.shape_cast %19 : vector<1x5x128xf32> to vector<5x128xf32>
    %21 = arith.truncf %20 : vector<5x128xf32> to vector<5x128xbf16>
    %cst_18 = arith.constant dense<0.000000e+00> : vector<5x256xf32>
    %22 = tpu.matmul %18, %15, %cst_18 {dimension_numbers = #tpu.dot_dimension_numbers<[1], [0], [0], [1], [0, 0, 1, 1], [], []>} : vector<5x128xbf16>, vector<128x256xbf16>, vector<5x256xf32> -> vector<5x256xf32>
    %23 = arith.addf %11, %22 : vector<5x256xf32>
    %cst_19 = arith.constant dense<0.000000e+00> : vector<5x256xf32>
    %24 = tpu.matmul %21, %15, %cst_19 {dimension_numbers = #tpu.dot_dimension_numbers<[1], [0], [0], [1], [0, 0, 1, 1], [], []>} : vector<5x128xbf16>, vector<128x256xbf16>, vector<5x256xf32> -> vector<5x256xf32>
    %25 = arith.addf %13, %24 : vector<5x256xf32>
    %c2_20 = arith.constant 2 : index
    %c0_21 = arith.constant 0 : index
    %c0_22 = arith.constant 0 : index
    %26 = vector.load %arg2[%c2_20, %c0_21, %c0_22] : memref<5x128x256xbf16, #tpu.memory_space<vmem>>, vector<1x128x256xbf16>
    %27 = vector.shape_cast %26 : vector<1x128x256xbf16> to vector<128x256xbf16>
    %c0_23 = arith.constant 0 : index
    %c2_24 = arith.constant 2 : index
    %c0_25 = arith.constant 0 : index
    %28 = tpu.strided_load %arg1[%c0_23, %c2_24, %c0_25] {strides = array<i32: 1, 2, 1>} : memref<1x14x128xf32, #tpu.memory_space<vmem>>, vector<1x5x128xf32>
    %29 = vector.shape_cast %28 : vector<1x5x128xf32> to vector<5x128xf32>
    %30 = arith.truncf %29 : vector<5x128xf32> to vector<5x128xbf16>
    %c0_26 = arith.constant 0 : index
    %c3 = arith.constant 3 : index
    %c0_27 = arith.constant 0 : index
    %31 = tpu.strided_load %arg1[%c0_26, %c3, %c0_27] {strides = array<i32: 1, 2, 1>} : memref<1x14x128xf32, #tpu.memory_space<vmem>>, vector<1x5x128xf32>
    %32 = vector.shape_cast %31 : vector<1x5x128xf32> to vector<5x128xf32>
    %33 = arith.truncf %32 : vector<5x128xf32> to vector<5x128xbf16>
    %cst_28 = arith.constant dense<0.000000e+00> : vector<5x256xf32>
    %34 = tpu.matmul %30, %27, %cst_28 {dimension_numbers = #tpu.dot_dimension_numbers<[1], [0], [0], [1], [0, 0, 1, 1], [], []>} : vector<5x128xbf16>, vector<128x256xbf16>, vector<5x256xf32> -> vector<5x256xf32>
    %35 = arith.addf %23, %34 : vector<5x256xf32>
    %cst_29 = arith.constant dense<0.000000e+00> : vector<5x256xf32>
    %36 = tpu.matmul %33, %27, %cst_29 {dimension_numbers = #tpu.dot_dimension_numbers<[1], [0], [0], [1], [0, 0, 1, 1], [], []>} : vector<5x128xbf16>, vector<128x256xbf16>, vector<5x256xf32> -> vector<5x256xf32>
    %37 = arith.addf %25, %36 : vector<5x256xf32>
    %c3_30 = arith.constant 3 : index
    %c0_31 = arith.constant 0 : index
    %c0_32 = arith.constant 0 : index
    %38 = vector.load %arg2[%c3_30, %c0_31, %c0_32] : memref<5x128x256xbf16, #tpu.memory_space<vmem>>, vector<1x128x256xbf16>
    %39 = vector.shape_cast %38 : vector<1x128x256xbf16> to vector<128x256xbf16>
    %c0_33 = arith.constant 0 : index
    %c3_34 = arith.constant 3 : index
    %c0_35 = arith.constant 0 : index
    %40 = tpu.strided_load %arg1[%c0_33, %c3_34, %c0_35] {strides = array<i32: 1, 2, 1>} : memref<1x14x128xf32, #tpu.memory_space<vmem>>, vector<1x5x128xf32>
    %41 = vector.shape_cast %40 : vector<1x5x128xf32> to vector<5x128xf32>
    %42 = arith.truncf %41 : vector<5x128xf32> to vector<5x128xbf16>
    %c0_36 = arith.constant 0 : index
    %c4 = arith.constant 4 : index
    %c0_37 = arith.constant 0 : index
    %43 = tpu.strided_load %arg1[%c0_36, %c4, %c0_37] {strides = array<i32: 1, 2, 1>} : memref<1x14x128xf32, #tpu.memory_space<vmem>>, vector<1x5x128xf32>
    %44 = vector.shape_cast %43 : vector<1x5x128xf32> to vector<5x128xf32>
    %45 = arith.truncf %44 : vector<5x128xf32> to vector<5x128xbf16>
    %cst_38 = arith.constant dense<0.000000e+00> : vector<5x256xf32>
    %46 = tpu.matmul %42, %39, %cst_38 {dimension_numbers = #tpu.dot_dimension_numbers<[1], [0], [0], [1], [0, 0, 1, 1], [], []>} : vector<5x128xbf16>, vector<128x256xbf16>, vector<5x256xf32> -> vector<5x256xf32>
    %47 = arith.addf %35, %46 : vector<5x256xf32>
    %cst_39 = arith.constant dense<0.000000e+00> : vector<5x256xf32>
    %48 = tpu.matmul %45, %39, %cst_39 {dimension_numbers = #tpu.dot_dimension_numbers<[1], [0], [0], [1], [0, 0, 1, 1], [], []>} : vector<5x128xbf16>, vector<128x256xbf16>, vector<5x256xf32> -> vector<5x256xf32>
    %49 = arith.addf %37, %48 : vector<5x256xf32>
    %c4_40 = arith.constant 4 : index
    %c0_41 = arith.constant 0 : index
    %c0_42 = arith.constant 0 : index
    %50 = vector.load %arg2[%c4_40, %c0_41, %c0_42] : memref<5x128x256xbf16, #tpu.memory_space<vmem>>, vector<1x128x256xbf16>
    %51 = vector.shape_cast %50 : vector<1x128x256xbf16> to vector<128x256xbf16>
    %c0_43 = arith.constant 0 : index
    %c4_44 = arith.constant 4 : index
    %c0_45 = arith.constant 0 : index
    %52 = tpu.strided_load %arg1[%c0_43, %c4_44, %c0_45] {strides = array<i32: 1, 2, 1>} : memref<1x14x128xf32, #tpu.memory_space<vmem>>, vector<1x5x128xf32>
    %53 = vector.shape_cast %52 : vector<1x5x128xf32> to vector<5x128xf32>
    %54 = arith.truncf %53 : vector<5x128xf32> to vector<5x128xbf16>
    %c0_46 = arith.constant 0 : index
    %c5 = arith.constant 5 : index
    %c0_47 = arith.constant 0 : index
    %55 = tpu.strided_load %arg1[%c0_46, %c5, %c0_47] {strides = array<i32: 1, 2, 1>} : memref<1x14x128xf32, #tpu.memory_space<vmem>>, vector<1x5x128xf32>
    %56 = vector.shape_cast %55 : vector<1x5x128xf32> to vector<5x128xf32>
    %57 = arith.truncf %56 : vector<5x128xf32> to vector<5x128xbf16>
    %cst_48 = arith.constant dense<0.000000e+00> : vector<5x256xf32>
    %58 = tpu.matmul %54, %51, %cst_48 {dimension_numbers = #tpu.dot_dimension_numbers<[1], [0], [0], [1], [0, 0, 1, 1], [], []>} : vector<5x128xbf16>, vector<128x256xbf16>, vector<5x256xf32> -> vector<5x256xf32>
    %59 = arith.addf %47, %58 : vector<5x256xf32>
    %cst_49 = arith.constant dense<0.000000e+00> : vector<5x256xf32>
    %60 = tpu.matmul %57, %51, %cst_49 {dimension_numbers = #tpu.dot_dimension_numbers<[1], [0], [0], [1], [0, 0, 1, 1], [], []>} : vector<5x128xbf16>, vector<128x256xbf16>, vector<5x256xf32> -> vector<5x256xf32>
    %61 = arith.addf %49, %60 : vector<5x256xf32>
    %62 = arith.maximumf %59, %61 : vector<5x256xf32>
    %c0_50 = arith.constant 0 : index
    %c0_51 = arith.constant 0 : index
    %63 = vector.load %arg3[%c0_50, %c0_51] : memref<1x256xf32, #tpu.memory_space<vmem>>, vector<1x256xf32>
    %64 = vector.broadcast %63 : vector<1x256xf32> to vector<5x256xf32>
    %65 = arith.addf %62, %64 : vector<5x256xf32>
    %cst_52 = arith.constant 0.000000e+00 : f32
    %66 = vector.broadcast %cst_52 : f32 to vector<5x256xf32>
    %67 = arith.maximumf %65, %66 : vector<5x256xf32>
    %68 = vector.extract_strided_slice %67 {offsets = [0, 0], sizes = [5, 128], strides = [1, 1]} : vector<5x256xf32> to vector<5x128xf32>
    %69 = vector.extract_strided_slice %67 {offsets = [0, 128], sizes = [5, 128], strides = [1, 1]} : vector<5x256xf32> to vector<5x128xf32>
    %70 = arith.maximumf %68, %69 : vector<5x128xf32>
    %c0_53 = arith.constant 0 : index
    %c0_54 = arith.constant 0 : index
    %c0_55 = arith.constant 0 : index
    %71 = vector.load %arg4[%c0_53, %c0_54, %c0_55] : memref<1x5x128xf32, #tpu.memory_space<vmem>>, vector<1x5x128xf32>
    %72 = vector.shape_cast %71 : vector<1x5x128xf32> to vector<5x128xf32>
    %73 = vector.shape_cast %70 : vector<5x128xf32> to vector<1x5x128xf32>
    tpu.vector_store %arg4[%c0_53, %c0_54, %c0_55], %73 {strides = array<i32>} : memref<1x5x128xf32, #tpu.memory_space<vmem>>, vector<1x5x128xf32>,
    return
  }
  func.func @transform_0(%arg0: i32) -> (i32, i32, i32) {
    %c0_i32 = arith.constant 0 : i32
    %c0_i32_0 = arith.constant 0 : i32
    %c0_i32_1 = arith.constant 0 : i32
    return %arg0, %c0_i32, %c0_i32_0 : i32, i32, i32
  }
  func.func @transform_1(%arg0: i32) -> (i32, i32, i32) {
    %c0_i32 = arith.constant 0 : i32
    %c0_i32_0 = arith.constant 0 : i32
    %c0_i32_1 = arith.constant 0 : i32
    %c0_i32_2 = arith.constant 0 : i32
    return %c0_i32, %c0_i32_0, %c0_i32_1 : i32, i32, i32
  }
  func.func @transform_2(%arg0: i32) -> (i32, i32) {
    %c0_i32 = arith.constant 0 : i32
    %c0_i32_0 = arith.constant 0 : i32
    %c0_i32_1 = arith.constant 0 : i32
    return %c0_i32, %c0_i32_0 : i32, i32
  }
  func.func @transform_3(%arg0: i32) -> (i32, i32, i32) {
    %c0_i32 = arith.constant 0 : i32
    %c0_i32_0 = arith.constant 0 : i32
    %c0_i32_1 = arith.constant 0 : i32
    return %arg0, %c0_i32, %c0_i32_0 : i32, i32, i32
  }
}

module attributes {stable_mosaic.version = 11 : i64} {
  func.func @_fc_fused_kernel(%arg0: i32, %arg1: memref<2x640xf32, #tpu.memory_space<vmem>>, %arg2: memref<640x128xbf16, #tpu.memory_space<vmem>>, %arg3: memref<1x128xf32, #tpu.memory_space<vmem>>, %arg4: memref<128x128xbf16, #tpu.memory_space<vmem>>, %arg5: memref<1x128xf32, #tpu.memory_space<vmem>>, %arg6: memref<128x128xbf16, #tpu.memory_space<vmem>>, %arg7: memref<1x128xf32, #tpu.memory_space<vmem>>, %arg8: memref<2x128xf32, #tpu.memory_space<vmem>>) attributes {dimension_semantics = [#tpu.dimension_semantics<parallel>], iteration_bounds = array<i64: 1>, scalar_prefetch = 0 : i64, scratch_operands = 0 : i64, tpu.core_type = #tpu.core_type<tc>, window_params = [{transform_indices = @transform_0, window_bounds = array<i64: 2, 640>}, {pipeline_mode = #tpu.pipeline_mode<synchronous>, transform_indices = @transform_1, window_bounds = array<i64: 640, 128>}, {pipeline_mode = #tpu.pipeline_mode<synchronous>, transform_indices = @transform_2, window_bounds = array<i64: 1, 128>}, {pipeline_mode = #tpu.pipeline_mode<synchronous>, transform_indices = @transform_3, window_bounds = array<i64: 128, 128>}, {pipeline_mode = #tpu.pipeline_mode<synchronous>, transform_indices = @transform_4, window_bounds = array<i64: 1, 128>}, {pipeline_mode = #tpu.pipeline_mode<synchronous>, transform_indices = @transform_5, window_bounds = array<i64: 128, 128>}, {pipeline_mode = #tpu.pipeline_mode<synchronous>, transform_indices = @transform_6, window_bounds = array<i64: 1, 128>}, {transform_indices = @transform_7, window_bounds = array<i64: 2, 128>}]} {
    %c0 = arith.constant 0 : index
    %c0_0 = arith.constant 0 : index
    %0 = vector.load %arg1[%c0, %c0_0] : memref<2x640xf32, #tpu.memory_space<vmem>>, vector<2x640xf32>
    %1 = arith.truncf %0 : vector<2x640xf32> to vector<2x640xbf16>
    %c0_1 = arith.constant 0 : index
    %c0_2 = arith.constant 0 : index
    %2 = vector.load %arg2[%c0_1, %c0_2] : memref<640x128xbf16, #tpu.memory_space<vmem>>, vector<640x128xbf16>
    %cst = arith.constant dense<0.000000e+00> : vector<2x128xf32>
    %3 = tpu.matmul %1, %2, %cst {dimension_numbers = #tpu.dot_dimension_numbers<[1], [0], [0], [1], [0, 0, 1, 1], [], []>} : vector<2x640xbf16>, vector<640x128xbf16>, vector<2x128xf32> -> vector<2x128xf32>
    %c0_3 = arith.constant 0 : index
    %c0_4 = arith.constant 0 : index
    %4 = vector.load %arg3[%c0_3, %c0_4] : memref<1x128xf32, #tpu.memory_space<vmem>>, vector<1x128xf32>
    %5 = vector.broadcast %4 : vector<1x128xf32> to vector<2x128xf32>
    %6 = arith.addf %3, %5 : vector<2x128xf32>
    %cst_5 = arith.constant 0.000000e+00 : f32
    %7 = vector.broadcast %cst_5 : f32 to vector<2x128xf32>
    %8 = arith.maximumf %6, %7 : vector<2x128xf32>
    %9 = arith.truncf %8 : vector<2x128xf32> to vector<2x128xbf16>
    %c0_6 = arith.constant 0 : index
    %c0_7 = arith.constant 0 : index
    %10 = vector.load %arg4[%c0_6, %c0_7] : memref<128x128xbf16, #tpu.memory_space<vmem>>, vector<128x128xbf16>
    %cst_8 = arith.constant dense<0.000000e+00> : vector<2x128xf32>
    %11 = tpu.matmul %9, %10, %cst_8 {dimension_numbers = #tpu.dot_dimension_numbers<[1], [0], [0], [1], [0, 0, 1, 1], [], []>} : vector<2x128xbf16>, vector<128x128xbf16>, vector<2x128xf32> -> vector<2x128xf32>
    %c0_9 = arith.constant 0 : index
    %c0_10 = arith.constant 0 : index
    %12 = vector.load %arg5[%c0_9, %c0_10] : memref<1x128xf32, #tpu.memory_space<vmem>>, vector<1x128xf32>
    %13 = vector.broadcast %12 : vector<1x128xf32> to vector<2x128xf32>
    %14 = arith.addf %11, %13 : vector<2x128xf32>
    %cst_11 = arith.constant 0.000000e+00 : f32
    %15 = vector.broadcast %cst_11 : f32 to vector<2x128xf32>
    %16 = arith.maximumf %14, %15 : vector<2x128xf32>
    %17 = arith.truncf %16 : vector<2x128xf32> to vector<2x128xbf16>
    %c0_12 = arith.constant 0 : index
    %c0_13 = arith.constant 0 : index
    %18 = vector.load %arg6[%c0_12, %c0_13] : memref<128x128xbf16, #tpu.memory_space<vmem>>, vector<128x128xbf16>
    %cst_14 = arith.constant dense<0.000000e+00> : vector<2x128xf32>
    %19 = tpu.matmul %17, %18, %cst_14 {dimension_numbers = #tpu.dot_dimension_numbers<[1], [0], [0], [1], [0, 0, 1, 1], [], []>} : vector<2x128xbf16>, vector<128x128xbf16>, vector<2x128xf32> -> vector<2x128xf32>
    %c0_15 = arith.constant 0 : index
    %c0_16 = arith.constant 0 : index
    %20 = vector.load %arg7[%c0_15, %c0_16] : memref<1x128xf32, #tpu.memory_space<vmem>>, vector<1x128xf32>
    %21 = vector.broadcast %20 : vector<1x128xf32> to vector<2x128xf32>
    %22 = arith.addf %19, %21 : vector<2x128xf32>
    %c0_17 = arith.constant 0 : index
    %c0_18 = arith.constant 0 : index
    %23 = vector.load %arg8[%c0_17, %c0_18] : memref<2x128xf32, #tpu.memory_space<vmem>>, vector<2x128xf32>
    tpu.vector_store %arg8[%c0_17, %c0_18], %22 {strides = array<i32>} : memref<2x128xf32, #tpu.memory_space<vmem>>, vector<2x128xf32>,
    return
  }
  func.func @transform_0(%arg0: i32) -> (i32, i32) {
    %c0_i32 = arith.constant 0 : i32
    %c0_i32_0 = arith.constant 0 : i32
    return %arg0, %c0_i32 : i32, i32
  }
  func.func @transform_1(%arg0: i32) -> (i32, i32) {
    %c0_i32 = arith.constant 0 : i32
    %c0_i32_0 = arith.constant 0 : i32
    %c0_i32_1 = arith.constant 0 : i32
    return %c0_i32, %c0_i32_0 : i32, i32
  }
  func.func @transform_2(%arg0: i32) -> (i32, i32) {
    %c0_i32 = arith.constant 0 : i32
    %c0_i32_0 = arith.constant 0 : i32
    %c0_i32_1 = arith.constant 0 : i32
    return %c0_i32, %c0_i32_0 : i32, i32
  }
  func.func @transform_3(%arg0: i32) -> (i32, i32) {
    %c0_i32 = arith.constant 0 : i32
    %c0_i32_0 = arith.constant 0 : i32
    %c0_i32_1 = arith.constant 0 : i32
    return %c0_i32, %c0_i32_0 : i32, i32
  }
  func.func @transform_4(%arg0: i32) -> (i32, i32) {
    %c0_i32 = arith.constant 0 : i32
    %c0_i32_0 = arith.constant 0 : i32
    %c0_i32_1 = arith.constant 0 : i32
    return %c0_i32, %c0_i32_0 : i32, i32
  }
  func.func @transform_5(%arg0: i32) -> (i32, i32) {
    %c0_i32 = arith.constant 0 : i32
    %c0_i32_0 = arith.constant 0 : i32
    %c0_i32_1 = arith.constant 0 : i32
    return %c0_i32, %c0_i32_0 : i32, i32
  }
  func.func @transform_6(%arg0: i32) -> (i32, i32) {
    %c0_i32 = arith.constant 0 : i32
    %c0_i32_0 = arith.constant 0 : i32
    %c0_i32_1 = arith.constant 0 : i32
    return %c0_i32, %c0_i32_0 : i32, i32
  }
  func.func @transform_7(%arg0: i32) -> (i32, i32) {
    %c0_i32 = arith.constant 0 : i32
    %c0_i32_0 = arith.constant 0 : i32
    return %arg0, %c0_i32 : i32, i32
  }
}

</mosaic_0001>

<llo_original>
// kernel: dropnet_forward.4
$region0: #{dropnet_forward.4}
  #allocation0 [shape = 'u32[]', space=smem, size = 0x4, offset = 0x4, fixed_abs, tag = 'smem constant byte address 0x4 - core index']
  #allocation1 [shape = 'u32[144,128]{1,0:T(1,128)}', space=vmem, size = 0x12000, scoped, tag = 'internal scratch']
  %s0 = inlined_call_operand.vmem [shape: f32[2,14,128], index: 0, kind: input, shape index: {}]
  %s1 = inlined_call_operand.vmem [shape: bf16[5,128,256], index: 1, kind: input, shape index: {}]
  %s2 = inlined_call_operand.vmem [shape: f32[1,256], index: 2, kind: input, shape index: {}]
  %s3 = inlined_call_operand.vmem [shape: f32[2,5,128], index: 3, kind: output, shape index: {}]
  %s4 = sld [smem:[#allocation0]]
  $region45: #{dropnet_forward.4} parent=0
    _
  %s6 = ssub.s32 1, %s4
  %s7 = scalar_select 0, %s6, %s4
  loop: start=0, step=1, limit=4
  $region2: #{dropnet_forward.4} parent=0 // loop_pre_header
    _
  $region3: #{dropnet_forward.4} parent=0 // loop_header
    %s9 = sphi 0, %s13
    %p10 = scmp.ge.s32.totalorder %s9, 4
    %s19 = sphi 0, %s21
    %s22 = sphi 0, %s19
    %s23 = sphi 0, %s22
    %s39 = sphi 0, %s23
    %s43 = sphi 0, %s43
    %s45 = sphi 0, %s43
    %s46 = sphi 0, %s45
    %s60 = sphi 0, %s46
    %s64 = sphi 0, %s64
    %s66 = sphi 0, %s64
    %s67 = sphi 0, %s66
    %s81 = sphi 0, %s67
    %s87 = sphi 0, %s89
    %s90 = sphi 0, %s87
    %s91 = sphi 0, %s90
    %s107 = sphi 0, %s91
  $region4: #{dropnet_forward.4} parent=0 // loop_header_branch
    %12 = sbr.rel (%p10) target = $region8
  $region5: #{dropnet_forward.4} parent=0 // loop_body
    %s14 = ssub.s32 %s9, 1
    %s15 = ssub.s32 %s9, 2
    %s16 = sadd.s32 %s9, 1
    %s17 = ssub.s32 %s9, %s16
    %p18 = scmp.eq.s32.totalorder %s17, 0
    %s20 = sadd.s32 %s19, 1
    %s21 = scalar_select %p18, %s19, %s20
    %p24 = pneg %p18
    %p25 = scmp.eq.s32.totalorder %s9, 1
    %p26 = por %p24, %p25
    %p27 = scmp.ne.s32.totalorder %s19, %s22
    %p28 = scmp.eq.s32.totalorder %s9, 0
    %p29 = por %p27, %p28
    %p30 = scmp.ne.s32.totalorder %s19, %s22
    %p31 = scmp.eq.s32.totalorder %s14, 1
    %p32 = por %p30, %p31
    %p33 = scmp.ne.s32.totalorder %s22, %s23
    %p34 = scmp.eq.s32.totalorder %s14, 0
    %p35 = por %p33, %p34
    %p36 = scmp.ne.s32.totalorder %s22, %s23
    %p37 = scmp.eq.s32.totalorder %s15, 1
    %p38 = por %p36, %p37
    %p40 = scmp.ne.s32.totalorder %s23, %s39
    %p41 = scmp.eq.s32.totalorder %s15, 0
    %p42 = por %p40, %p41
    %s44 = sadd.s32 %s43, 1
    %p47 = scmp.eq.s32.totalorder %s9, 1
    %p48 = scmp.ne.s32.totalorder %s43, %s45
    %p49 = scmp.eq.s32.totalorder %s9, 0
    %p50 = por %p48, %p49
    %p51 = scmp.ne.s32.totalorder %s43, %s45
    %p52 = scmp.eq.s32.totalorder %s14, 1
    %p53 = por %p51, %p52
    %p54 = scmp.ne.s32.totalorder %s45, %s46
    %p55 = scmp.eq.s32.totalorder %s14, 0
    %p56 = por %p54, %p55
    %p57 = scmp.ne.s32.totalorder %s45, %s46
    %p58 = scmp.eq.s32.totalorder %s15, 1
    %p59 = por %p57, %p58
    %p61 = scmp.ne.s32.totalorder %s46, %s60
    %p62 = scmp.eq.s32.totalorder %s15, 0
    %p63 = por %p61, %p62
    %s65 = sadd.s32 %s64, 1
    %p68 = scmp.eq.s32.totalorder %s9, 1
    %p69 = scmp.ne.s32.totalorder %s64, %s66
    %p70 = scmp.eq.s32.totalorder %s9, 0
    %p71 = por %p69, %p70
    %p72 = scmp.ne.s32.totalorder %s64, %s66
    %p73 = scmp.eq.s32.totalorder %s14, 1
    %p74 = por %p72, %p73
    %p75 = scmp.ne.s32.totalorder %s66, %s67
    %p76 = scmp.eq.s32.totalorder %s14, 0
    %p77 = por %p75, %p76
    %p78 = scmp.ne.s32.totalorder %s66, %s67
    %p79 = scmp.eq.s32.totalorder %s15, 1
    %p80 = por %p78, %p79
    %p82 = scmp.ne.s32.totalorder %s67, %s81
    %p83 = scmp.eq.s32.totalorder %s15, 0
    %p84 = por %p82, %p83
    %s85 = ssub.s32 %s9, %s16
    %p86 = scmp.eq.s32.totalorder %s85, 0
    %s88 = sadd.s32 %s87, 1
    %s89 = scalar_select %p86, %s87, %s88
    %p92 = pneg %p86
    %p93 = scmp.eq.s32.totalorder %s9, 1
    %p94 = por %p92, %p93
    %p95 = scmp.ne.s32.totalorder %s87, %s90
    %p96 = scmp.eq.s32.totalorder %s9, 0
    %p97 = por %p95, %p96
    %p98 = scmp.ne.s32.totalorder %s87, %s90
    %p99 = scmp.eq.s32.totalorder %s14, 1
    %p100 = por %p98, %p99
    %p101 = scmp.ne.s32.totalorder %s90, %s91
    %p102 = scmp.eq.s32.totalorder %s14, 0
    %p103 = por %p101, %p102
    %p104 = scmp.ne.s32.totalorder %s90, %s91
    %p105 = scmp.eq.s32.totalorder %s15, 1
    %p106 = por %p104, %p105
    %p108 = scmp.ne.s32.totalorder %s91, %s107
    %p109 = scmp.eq.s32.totalorder %s15, 0
    %p110 = por %p108, %p109
    %p111 = scmp.le.s32.totalorder 1, %s9
    %p112 = scmp.lt.s32.totalorder %s9, 3
    %p113 = pnand %p111, %p112
    %p114 = pneg %p113
    // Predicated region
    $region9: #{dropnet_forward.4} parent=5 // pred_check
      _
    $region10: #{dropnet_forward.4} parent=5 // pred_check_branch
      %116 = sbr.rel (%p113) target = $region12
    $region11: #{dropnet_forward.4} parent=5 // pred_region
      %s117 = ssub.s32 %s9, 1
      // Predicated region
      $region13: #{dropnet_forward.4} parent=11 // pred_check
        %p118 = pneg %p56
      $region14: #{dropnet_forward.4} parent=11 // pred_check_branch
        %120 = sbr.rel (%p118) target = $region16
      $region15: #{dropnet_forward.4} parent=11 // pred_region
        _
      $region16: #{dropnet_forward.4} parent=11 // pred_fallthru
        _
      // Predicated region
      $region17: #{dropnet_forward.4} parent=11 // pred_check
        %p121 = pneg %p77
      $region18: #{dropnet_forward.4} parent=11 // pred_check_branch
        %123 = sbr.rel (%p121) target = $region20
      $region19: #{dropnet_forward.4} parent=11 // pred_region
        _
      $region20: #{dropnet_forward.4} parent=11 // pred_fallthru
        _
    $region12: #{dropnet_forward.4} parent=5 // pred_fallthru
      _
    %p124 = scmp.lt.s32.totalorder %s9, 2
    // Predicated region
    $region21: #{dropnet_forward.4} parent=5 // pred_check
      %p125 = pneg %p124
    $region22: #{dropnet_forward.4} parent=5 // pred_check_branch
      %127 = sbr.rel (%p125) target = $region24
    $region23: #{dropnet_forward.4} parent=5 // pred_region
      // Predicated region
      $region25: #{dropnet_forward.4} parent=23 // pred_check
        %p128 = pneg %p29
      $region26: #{dropnet_forward.4} parent=23 // pred_check_branch
        %130 = sbr.rel (%p128) target = $region28
      $region27: #{dropnet_forward.4} parent=23 // pred_region
        %p131 = scmp.lt.s32.totalorder %s9, 1
        %s132 = scalar_select %p131, %s9, 1
        %s133 = smul.addr %s132, 2
        %s134 = smul.addr %s133, 8
        %s135 = scalar_lea.vmem %s0, %s134
      $region28: #{dropnet_forward.4} parent=23 // pred_fallthru
        _
    $region24: #{dropnet_forward.4} parent=5 // pred_fallthru
      _
    %p136 = scmp.le.s32.totalorder 1, %s9
    %p137 = scmp.lt.s32.totalorder %s9, 3
    %p138 = pnand %p136, %p137
    %p139 = pneg %p138
    // Predicated region
    $region29: #{dropnet_forward.4} parent=5 // pred_check
      _
    $region30: #{dropnet_forward.4} parent=5 // pred_check_branch
      %141 = sbr.rel (%p138) target = $region32
    $region31: #{dropnet_forward.4} parent=5 // pred_region
      %s142 = ssub.s32 %s9, 1
      %p143 = scmp.lt.s32.totalorder %s14, 1
      %s144 = scalar_select %p143, %s14, 1
      %s145 = smul.addr %s144, 2
      %s146 = smul.addr %s145, 8
      %s147 = scalar_lea.vmem %s0, %s146
      %p148 = pneg %p35
      %p149 = pneg %p32
      %p150 = pneg %p56
      %p151 = pneg %p53
      %p152 = pneg %p77
      %p153 = pneg %p74
      %p154 = pneg %p103
      %p155 = pneg %p100
      %p156 = scmp.lt.s32.totalorder %s14, 1
      %s157 = scalar_select %p156, %s14, 1
      %s158 = smul.addr %s157, 8
      %s159 = scalar_lea.vmem %s3, %s158
      %p160 = scmp.lt.s32.totalorder %s14, 1
      %s161 = scalar_select %p160, %s14, 1
      %s162 = smul.addr %s161, 2
      %s163 = smul.addr %s162, 8
      %s164 = scalar_lea.vmem %s0, %s163
      %p165 = scmp.lt.s32.totalorder %s14, 1
      %s166 = scalar_select %p165, %s14, 1
      %s167 = smul.addr %s166, 8
      %s168 = scalar_lea.vmem %s3, %s167
      %v170 = vld [vmem:[%s1] sm:$0xff]
      %v171 = vld [vmem:[%s1 + $0x8] sm:$0xff]
      %v172 = vld [vmem:[%s1 + $0x10] sm:$0xff]
      %v173 = vld [vmem:[%s1 + $0x18] sm:$0xff]
      %v174 = vld [vmem:[%s1 + $0x20] sm:$0xff]
      %v175 = vld [vmem:[%s1 + $0x28] sm:$0xff]
      %v176 = vld [vmem:[%s1 + $0x30] sm:$0xff]
      %v177 = vld [vmem:[%s1 + $0x38] sm:$0xff]
      %v178 = vld [vmem:[%s1 + $0x40] sm:$0xff]
      %v179 = vld [vmem:[%s1 + $0x48] sm:$0xff]
      %v180 = vld [vmem:[%s1 + $0x50] sm:$0xff]
      %v181 = vld [vmem:[%s1 + $0x58] sm:$0xff]
      %v182 = vld [vmem:[%s1 + $0x60] sm:$0xff]
      %v183 = vld [vmem:[%s1 + $0x68] sm:$0xff]
      %v184 = vld [vmem:[%s1 + $0x70] sm:$0xff]
      %v185 = vld [vmem:[%s1 + $0x78] sm:$0xff]
      %v186 = vld [vmem:[%s164] ss:$2 sm:$0x1f]
      %v187 = vpack.c.bf16 %v186, %v186
      %s188 = scalar_lea.vmem %s164, 1
      %v189 = vld [vmem:[%s188] ss:$2 sm:$0x1f]
      %v190 = vpack.c.bf16 %v189, %v189
      %s191 = scalar_lea.vmem %s1, 128
      %v192 = vld [vmem:[%s191] sm:$0xff]
      %v193 = vld [vmem:[%s191 + $0x8] sm:$0xff]
      %v194 = vld [vmem:[%s191 + $0x10] sm:$0xff]
      %v195 = vld [vmem:[%s191 + $0x18] sm:$0xff]
      %v196 = vld [vmem:[%s191 + $0x20] sm:$0xff]
      %v197 = vld [vmem:[%s191 + $0x28] sm:$0xff]
      %v198 = vld [vmem:[%s191 + $0x30] sm:$0xff]
      %v199 = vld [vmem:[%s191 + $0x38] sm:$0xff]
      %v200 = vld [vmem:[%s191 + $0x40] sm:$0xff]
      %v201 = vld [vmem:[%s191 + $0x48] sm:$0xff]
      %v202 = vld [vmem:[%s191 + $0x50] sm:$0xff]
      %v203 = vld [vmem:[%s191 + $0x58] sm:$0xff]
      %v204 = vld [vmem:[%s191 + $0x60] sm:$0xff]
      %v205 = vld [vmem:[%s191 + $0x68] sm:$0xff]
      %v206 = vld [vmem:[%s191 + $0x70] sm:$0xff]
      %v207 = vld [vmem:[%s191 + $0x78] sm:$0xff]
      %s208 = scalar_lea.vmem %s164, 2
      %v209 = vld [vmem:[%s208] ss:$2 sm:$0x1f]
      %v210 = vpack.c.bf16 %v209, %v209
      %v227 = vunpack.c.l.b16 %v192
      %v228 = vunpack.c.h.b16 %v192
      %v229 = vunpack.c.l.b16 %v193
      %v230 = vunpack.c.h.b16 %v193
      %v231 = vunpack.c.l.b16 %v194
      %v232 = vunpack.c.h.b16 %v194
      %v233 = vunpack.c.l.b16 %v195
      %v234 = vunpack.c.h.b16 %v195
      %v235 = vunpack.c.l.b16 %v196
      %v236 = vunpack.c.h.b16 %v196
      %v237 = vunpack.c.l.b16 %v197
      %v238 = vunpack.c.h.b16 %v197
      %v239 = vunpack.c.l.b16 %v198
      %v240 = vunpack.c.h.b16 %v198
      %v241 = vunpack.c.l.b16 %v199
      %v242 = vunpack.c.h.b16 %v199
      %v243 = vunpack.c.l.b16 %v200
      %v244 = vunpack.c.h.b16 %v200
      %v245 = vunpack.c.l.b16 %v201
      %v246 = vunpack.c.h.b16 %v201
      %v247 = vunpack.c.l.b16 %v202
      %v248 = vunpack.c.h.b16 %v202
      %v249 = vunpack.c.l.b16 %v203
      %v250 = vunpack.c.h.b16 %v203
      %v251 = vunpack.c.l.b16 %v204
      %v252 = vunpack.c.h.b16 %v204
      %v253 = vunpack.c.l.b16 %v205
      %v254 = vunpack.c.h.b16 %v205
      %v255 = vunpack.c.l.b16 %v206
      %v256 = vunpack.c.h.b16 %v206
      %v257 = vunpack.c.l.b16 %v207
      %v258 = vunpack.c.h.b16 %v207
      %v259 = vpack.c.b16 %v229, %v227
      %v260 = vpack.c.b16 %v230, %v228
      %v261 = vpack.c.b16 %v233, %v231
      %v262 = vpack.c.b16 %v234, %v232
      %v263 = vpack.c.b16 %v237, %v235
      %v264 = vpack.c.b16 %v238, %v236
      %v265 = vpack.c.b16 %v241, %v239
      %v266 = vpack.c.b16 %v242, %v240
      %v267 = vpack.c.b16 %v245, %v243
      %v268 = vpack.c.b16 %v246, %v244
      %v269 = vpack.c.b16 %v249, %v247
      %v270 = vpack.c.b16 %v250, %v248
      %v271 = vpack.c.b16 %v253, %v251
      %v272 = vpack.c.b16 %v254, %v252
      %v273 = vpack.c.b16 %v257, %v255
      %v274 = vpack.c.b16 %v258, %v256
      %291 = vmatprep.subr.bf16.mxu0 %v260
      %292 = vmatpush1.bf16.msra.mxu0 %v259
      %293 = vmatprep.subr.bf16.mxu0 %v262
      %294 = vmatpush1.bf16.msra.mxu0 %v261
      %295 = vmatprep.subr.bf16.mxu0 %v264
      %296 = vmatpush1.bf16.msra.mxu0 %v263
      %297 = vmatprep.subr.bf16.mxu0 %v266
      %298 = vmatpush1.bf16.msra.mxu0 %v265
      %299 = vmatprep.subr.bf16.mxu0 %v268
      %300 = vmatpush1.bf16.msra.mxu0 %v267
      %301 = vmatprep.subr.bf16.mxu0 %v270
      %302 = vmatpush1.bf16.msra.mxu0 %v269
      %303 = vmatprep.subr.bf16.mxu0 %v272
      %304 = vmatpush1.bf16.msra.mxu0 %v271
      %305 = vmatprep.subr.bf16.mxu0 %v274
      %306 = vmatpush1.bf16.msra.mxu0 %v273
      %307 = vmatprep.subr.bf16.mxu0 0
      %308 = vmatpush1.bf16.msra.mxu0 0
      %309 = vmatprep.subr.bf16.mxu0 0
      %310 = vmatpush1.bf16.msra.mxu0 0
      %311 = vmatprep.subr.bf16.mxu0 0
      %312 = vmatpush1.bf16.msra.mxu0 0
      %313 = vmatprep.subr.bf16.mxu0 0
      %314 = vmatpush1.bf16.msra.mxu0 0
      %315 = vmatprep.subr.bf16.mxu0 0
      %316 = vmatpush1.bf16.msra.mxu0 0
      %317 = vmatprep.subr.bf16.mxu0 0
      %318 = vmatpush1.bf16.msra.mxu0 0
      %319 = vmatprep.subr.bf16.mxu0 0
      %320 = vmatpush1.bf16.msra.mxu0 0
      %321 = vmatprep.subr.bf16.mxu0 0
      %322 = vmatpush1.bf16.msra.mxu0 0
      %323 = vmatprep.mubr.bf16.mxu0 0
      %324 = vmatmul.mubr.bf16.gmra.mrb[0].mxu0 %v190
      %v325 = vpop.f32.mrb[0].mxu0
      %v326 = vadd.f32 0.0, %v325
      %v327 = vpop.f32.mrb[0].mxu0
      %v328 = vadd.f32 0.0, %v327
      %v329 = vpop.f32.mrb[0].mxu0
      %v330 = vpop.f32.mrb[0].mxu0
      %331 = vdwg.mxu0
      %v348 = vunpack.c.l.b16 %v170
      %v349 = vunpack.c.h.b16 %v170
      %v350 = vunpack.c.l.b16 %v171
      %v351 = vunpack.c.h.b16 %v171
      %v352 = vunpack.c.l.b16 %v172
      %v353 = vunpack.c.h.b16 %v172
      %v354 = vunpack.c.l.b16 %v173
      %v355 = vunpack.c.h.b16 %v173
      %v356 = vunpack.c.l.b16 %v174
      %v357 = vunpack.c.h.b16 %v174
      %v358 = vunpack.c.l.b16 %v175
      %v359 = vunpack.c.h.b16 %v175
      %v360 = vunpack.c.l.b16 %v176
      %v361 = vunpack.c.h.b16 %v176
      %v362 = vunpack.c.l.b16 %v177
      %v363 = vunpack.c.h.b16 %v177
      %v364 = vunpack.c.l.b16 %v178
      %v365 = vunpack.c.h.b16 %v178
      %v366 = vunpack.c.l.b16 %v179
      %v367 = vunpack.c.h.b16 %v179
      %v368 = vunpack.c.l.b16 %v180
      %v369 = vunpack.c.h.b16 %v180
      %v370 = vunpack.c.l.b16 %v181
      %v371 = vunpack.c.h.b16 %v181
      %v372 = vunpack.c.l.b16 %v182
      %v373 = vunpack.c.h.b16 %v182
      %v374 = vunpack.c.l.b16 %v183
      %v375 = vunpack.c.h.b16 %v183
      %v376 = vunpack.c.l.b16 %v184
      %v377 = vunpack.c.h.b16 %v184
      %v378 = vunpack.c.l.b16 %v185
      %v379 = vunpack.c.h.b16 %v185
      %v380 = vpack.c.b16 %v350, %v348
      %v381 = vpack.c.b16 %v351, %v349
      %v382 = vpack.c.b16 %v354, %v352
      %v383 = vpack.c.b16 %v355, %v353
      %v384 = vpack.c.b16 %v358, %v356
      %v385 = vpack.c.b16 %v359, %v357
      %v386 = vpack.c.b16 %v362, %v360
      %v387 = vpack.c.b16 %v363, %v361
      %v388 = vpack.c.b16 %v366, %v364
      %v389 = vpack.c.b16 %v367, %v365
      %v390 = vpack.c.b16 %v370, %v368
      %v391 = vpack.c.b16 %v371, %v369
      %v392 = vpack.c.b16 %v374, %v372
      %v393 = vpack.c.b16 %v375, %v373
      %v394 = vpack.c.b16 %v378, %v376
      %v395 = vpack.c.b16 %v379, %v377
      %412 = vmatprep.subr.bf16.mxu0 %v381
      %413 = vmatpush1.bf16.msra.mxu0 %v380
      %414 = vmatprep.subr.bf16.mxu0 %v383
      %415 = vmatpush1.bf16.msra.mxu0 %v382
      %416 = vmatprep.subr.bf16.mxu0 %v385
      %417 = vmatpush1.bf16.msra.mxu0 %v384
      %418 = vmatprep.subr.bf16.mxu0 %v387
      %419 = vmatpush1.bf16.msra.mxu0 %v386
      %420 = vmatprep.subr.bf16.mxu0 %v389
      %421 = vmatpush1.bf16.msra.mxu0 %v388
      %422 = vmatprep.subr.bf16.mxu0 %v391
      %423 = vmatpush1.bf16.msra.mxu0 %v390
      %424 = vmatprep.subr.bf16.mxu0 %v393
      %425 = vmatpush1.bf16.msra.mxu0 %v392
      %426 = vmatprep.subr.bf16.mxu0 %v395
      %427 = vmatpush1.bf16.msra.mxu0 %v394
      %428 = vmatprep.subr.bf16.mxu0 0
      %429 = vmatpush1.bf16.msra.mxu0 0
      %430 = vmatprep.subr.bf16.mxu0 0
      %431 = vmatpush1.bf16.msra.mxu0 0
      %432 = vmatprep.subr.bf16.mxu0 0
      %433 = vmatpush1.bf16.msra.mxu0 0
      %434 = vmatprep.subr.bf16.mxu0 0
      %435 = vmatpush1.bf16.msra.mxu0 0
      %436 = vmatprep.subr.bf16.mxu0 0
      %437 = vmatpush1.bf16.msra.mxu0 0
      %438 = vmatprep.subr.bf16.mxu0 0
      %439 = vmatpush1.bf16.msra.mxu0 0
      %440 = vmatprep.subr.bf16.mxu0 0
      %441 = vmatpush1.bf16.msra.mxu0 0
      %442 = vmatprep.subr.bf16.mxu0 0
      %443 = vmatpush1.bf16.msra.mxu0 0
      %444 = vmatprep.mubr.bf16.mxu0 0
      %445 = vmatmul.mubr.bf16.gmra.mrb[0].mxu0 %v187
      %v446 = vpop.f32.mrb[0].mxu0
      %v447 = vadd.f32 %v326, %v446
      %v448 = vpop.f32.mrb[0].mxu0
      %v449 = vadd.f32 %v328, %v448
      %v450 = vpop.f32.mrb[0].mxu0
      %v451 = vpop.f32.mrb[0].mxu0
      %452 = vdwg.mxu0
      %453 = vmatprep.subr.bf16.mxu0 %v260
      %454 = vmatpush1.bf16.msra.mxu0 %v259
      %455 = vmatprep.subr.bf16.mxu0 %v262
      %456 = vmatpush1.bf16.msra.mxu0 %v261
      %457 = vmatprep.subr.bf16.mxu0 %v264
      %458 = vmatpush1.bf16.msra.mxu0 %v263
      %459 = vmatprep.subr.bf16.mxu0 %v266
      %460 = vmatpush1.bf16.msra.mxu0 %v265
      %461 = vmatprep.subr.bf16.mxu0 %v268
      %462 = vmatpush1.bf16.msra.mxu0 %v267
      %463 = vmatprep.subr.bf16.mxu0 %v270
      %464 = vmatpush1.bf16.msra.mxu0 %v269
      %465 = vmatprep.subr.bf16.mxu0 %v272
      %466 = vmatpush1.bf16.msra.mxu0 %v271
      %467 = vmatprep.subr.bf16.mxu0 %v274
      %468 = vmatpush1.bf16.msra.mxu0 %v273
      %469 = vmatprep.subr.bf16.mxu0 0
      %470 = vmatpush1.bf16.msra.mxu0 0
      %471 = vmatprep.subr.bf16.mxu0 0
      %472 = vmatpush1.bf16.msra.mxu0 0
      %473 = vmatprep.subr.bf16.mxu0 0
      %474 = vmatpush1.bf16.msra.mxu0 0
      %475 = vmatprep.subr.bf16.mxu0 0
      %476 = vmatpush1.bf16.msra.mxu0 0
      %477 = vmatprep.subr.bf16.mxu0 0
      %478 = vmatpush1.bf16.msra.mxu0 0
      %479 = vmatprep.subr.bf16.mxu0 0
      %480 = vmatpush1.bf16.msra.mxu0 0
      %481 = vmatprep.subr.bf16.mxu0 0
      %482 = vmatpush1.bf16.msra.mxu0 0
      %483 = vmatprep.subr.bf16.mxu0 0
      %484 = vmatpush1.bf16.msra.mxu0 0
      %485 = vmatprep.mubr.bf16.mxu0 0
      %486 = vmatmul.mubr.bf16.gmra.mrb[0].mxu0 %v210
      %v487 = vpop.f32.mrb[0].mxu0
      %v488 = vadd.f32 0.0, %v487
      %v489 = vpop.f32.mrb[0].mxu0
      %v490 = vadd.f32 0.0, %v489
      %v491 = vpop.f32.mrb[0].mxu0
      %v492 = vpop.f32.mrb[0].mxu0
      %493 = vdwg.mxu0
      %494 = vmatprep.subr.bf16.mxu0 %v381
      %495 = vmatpush1.bf16.msra.mxu0 %v380
      %496 = vmatprep.subr.bf16.mxu0 %v383
      %497 = vmatpush1.bf16.msra.mxu0 %v382
      %498 = vmatprep.subr.bf16.mxu0 %v385
      %499 = vmatpush1.bf16.msra.mxu0 %v384
      %500 = vmatprep.subr.bf16.mxu0 %v387
      %501 = vmatpush1.bf16.msra.mxu0 %v386
      %502 = vmatprep.subr.bf16.mxu0 %v389
      %503 = vmatpush1.bf16.msra.mxu0 %v388
      %504 = vmatprep.subr.bf16.mxu0 %v391
      %505 = vmatpush1.bf16.msra.mxu0 %v390
      %506 = vmatprep.subr.bf16.mxu0 %v393
      %507 = vmatpush1.bf16.msra.mxu0 %v392
      %508 = vmatprep.subr.bf16.mxu0 %v395
      %509 = vmatpush1.bf16.msra.mxu0 %v394
      %510 = vmatprep.subr.bf16.mxu0 0
      %511 = vmatpush1.bf16.msra.mxu0 0
      %512 = vmatprep.subr.bf16.mxu0 0
      %513 = vmatpush1.bf16.msra.mxu0 0
      %514 = vmatprep.subr.bf16.mxu0 0
      %515 = vmatpush1.bf16.msra.mxu0 0
      %516 = vmatprep.subr.bf16.mxu0 0
      %517 = vmatpush1.bf16.msra.mxu0 0
      %518 = vmatprep.subr.bf16.mxu0 0
      %519 = vmatpush1.bf16.msra.mxu0 0
      %520 = vmatprep.subr.bf16.mxu0 0
      %521 = vmatpush1.bf16.msra.mxu0 0
      %522 = vmatprep.subr.bf16.mxu0 0
      %523 = vmatpush1.bf16.msra.mxu0 0
      %524 = vmatprep.subr.bf16.mxu0 0
      %525 = vmatpush1.bf16.msra.mxu0 0
      %526 = vmatprep.mubr.bf16.mxu0 0
      %527 = vmatmul.mubr.bf16.gmra.mrb[0].mxu0 %v190
      %v528 = vpop.f32.mrb[0].mxu0
      %v529 = vadd.f32 %v488, %v528
      %v530 = vpop.f32.mrb[0].mxu0
      %v531 = vadd.f32 %v490, %v530
      %v532 = vpop.f32.mrb[0].mxu0
      %v533 = vpop.f32.mrb[0].mxu0
      %534 = vdwg.mxu0
      %s535 = scalar_lea.vmem %s1, 256
      %v536 = vld [vmem:[%s535] sm:$0xff]
      %v537 = vld [vmem:[%s535 + $0x8] sm:$0xff]
      %v538 = vld [vmem:[%s535 + $0x10] sm:$0xff]
      %v539 = vld [vmem:[%s535 + $0x18] sm:$0xff]
      %v540 = vld [vmem:[%s535 + $0x20] sm:$0xff]
      %v541 = vld [vmem:[%s535 + $0x28] sm:$0xff]
      %v542 = vld [vmem:[%s535 + $0x30] sm:$0xff]
      %v543 = vld [vmem:[%s535 + $0x38] sm:$0xff]
      %v544 = vld [vmem:[%s535 + $0x40] sm:$0xff]
      %v545 = vld [vmem:[%s535 + $0x48] sm:$0xff]
      %v546 = vld [vmem:[%s535 + $0x50] sm:$0xff]
      %v547 = vld [vmem:[%s535 + $0x58] sm:$0xff]
      %v548 = vld [vmem:[%s535 + $0x60] sm:$0xff]
      %v549 = vld [vmem:[%s535 + $0x68] sm:$0xff]
      %v550 = vld [vmem:[%s535 + $0x70] sm:$0xff]
      %v551 = vld [vmem:[%s535 + $0x78] sm:$0xff]
      %s552 = scalar_lea.vmem %s164, 3
      %v553 = vld [vmem:[%s552] ss:$2 sm:$0x1f]
      %v554 = vpack.c.bf16 %v553, %v553
      %v571 = vunpack.c.l.b16 %v536
      %v572 = vunpack.c.h.b16 %v536
      %v573 = vunpack.c.l.b16 %v537
      %v574 = vunpack.c.h.b16 %v537
      %v575 = vunpack.c.l.b16 %v538
      %v576 = vunpack.c.h.b16 %v538
      %v577 = vunpack.c.l.b16 %v539
      %v578 = vunpack.c.h.b16 %v539
      %v579 = vunpack.c.l.b16 %v540
      %v580 = vunpack.c.h.b16 %v540
      %v581 = vunpack.c.l.b16 %v541
      %v582 = vunpack.c.h.b16 %v541
      %v583 = vunpack.c.l.b16 %v542
      %v584 = vunpack.c.h.b16 %v542
      %v585 = vunpack.c.l.b16 %v543
      %v586 = vunpack.c.h.b16 %v543
      %v587 = vunpack.c.l.b16 %v544
      %v588 = vunpack.c.h.b16 %v544
      %v589 = vunpack.c.l.b16 %v545
      %v590 = vunpack.c.h.b16 %v545
      %v591 = vunpack.c.l.b16 %v546
      %v592 = vunpack.c.h.b16 %v546
      %v593 = vunpack.c.l.b16 %v547
      %v594 = vunpack.c.h.b16 %v547
      %v595 = vunpack.c.l.b16 %v548
      %v596 = vunpack.c.h.b16 %v548
      %v597 = vunpack.c.l.b16 %v549
      %v598 = vunpack.c.h.b16 %v549
      %v599 = vunpack.c.l.b16 %v550
      %v600 = vunpack.c.h.b16 %v550
      %v601 = vunpack.c.l.b16 %v551
      %v602 = vunpack.c.h.b16 %v551
      %v603 = vpack.c.b16 %v573, %v571
      %v604 = vpack.c.b16 %v574, %v572
      %v605 = vpack.c.b16 %v577, %v575
      %v606 = vpack.c.b16 %v578, %v576
      %v607 = vpack.c.b16 %v581, %v579
      %v608 = vpack.c.b16 %v582, %v580
      %v609 = vpack.c.b16 %v585, %v583
      %v610 = vpack.c.b16 %v586, %v584
      %v611 = vpack.c.b16 %v589, %v587
      %v612 = vpack.c.b16 %v590, %v588
      %v613 = vpack.c.b16 %v593, %v591
      %v614 = vpack.c.b16 %v594, %v592
      %v615 = vpack.c.b16 %v597, %v595
      %v616 = vpack.c.b16 %v598, %v596
      %v617 = vpack.c.b16 %v601, %v599
      %v618 = vpack.c.b16 %v602, %v600
      %635 = vmatprep.subr.bf16.mxu0 %v604
      %636 = vmatpush1.bf16.msra.mxu0 %v603
      %637 = vmatprep.subr.bf16.mxu0 %v606
      %638 = vmatpush1.bf16.msra.mxu0 %v605
      %639 = vmatprep.subr.bf16.mxu0 %v608
      %640 = vmatpush1.bf16.msra.mxu0 %v607
      %641 = vmatprep.subr.bf16.mxu0 %v610
      %642 = vmatpush1.bf16.msra.mxu0 %v609
      %643 = vmatprep.subr.bf16.mxu0 %v612
      %644 = vmatpush1.bf16.msra.mxu0 %v611
      %645 = vmatprep.subr.bf16.mxu0 %v614
      %646 = vmatpush1.bf16.msra.mxu0 %v613
      %647 = vmatprep.subr.bf16.mxu0 %v616
      %648 = vmatpush1.bf16.msra.mxu0 %v615
      %649 = vmatprep.subr.bf16.mxu0 %v618
      %650 = vmatpush1.bf16.msra.mxu0 %v617
      %651 = vmatprep.subr.bf16.mxu0 0
      %652 = vmatpush1.bf16.msra.mxu0 0
      %653 = vmatprep.subr.bf16.mxu0 0
      %654 = vmatpush1.bf16.msra.mxu0 0
      %655 = vmatprep.subr.bf16.mxu0 0
      %656 = vmatpush1.bf16.msra.mxu0 0
      %657 = vmatprep.subr.bf16.mxu0 0
      %658 = vmatpush1.bf16.msra.mxu0 0
      %659 = vmatprep.subr.bf16.mxu0 0
      %660 = vmatpush1.bf16.msra.mxu0 0
      %661 = vmatprep.subr.bf16.mxu0 0
      %662 = vmatpush1.bf16.msra.mxu0 0
      %663 = vmatprep.subr.bf16.mxu0 0
      %664 = vmatpush1.bf16.msra.mxu0 0
      %665 = vmatprep.subr.bf16.mxu0 0
      %666 = vmatpush1.bf16.msra.mxu0 0
      %667 = vmatprep.mubr.bf16.mxu0 0
      %668 = vmatmul.mubr.bf16.gmra.mrb[0].mxu0 %v210
      %v669 = vpop.f32.mrb[0].mxu0
      %v670 = vadd.f32 0.0, %v669
      %v671 = vpop.f32.mrb[0].mxu0
      %v672 = vadd.f32 0.0, %v671
      %v673 = vpop.f32.mrb[0].mxu0
      %v674 = vpop.f32.mrb[0].mxu0
      %675 = vdwg.mxu0
      %v676 = vadd.f32 %v447, %v670
      %v677 = vadd.f32 %v449, %v672
      %678 = vmatprep.subr.bf16.mxu0 %v604
      %679 = vmatpush1.bf16.msra.mxu0 %v603
      %680 = vmatprep.subr.bf16.mxu0 %v606
      %681 = vmatpush1.bf16.msra.mxu0 %v605
      %682 = vmatprep.subr.bf16.mxu0 %v608
      %683 = vmatpush1.bf16.msra.mxu0 %v607
      %684 = vmatprep.subr.bf16.mxu0 %v610
      %685 = vmatpush1.bf16.msra.mxu0 %v609
      %686 = vmatprep.subr.bf16.mxu0 %v612
      %687 = vmatpush1.bf16.msra.mxu0 %v611
      %688 = vmatprep.subr.bf16.mxu0 %v614
      %689 = vmatpush1.bf16.msra.mxu0 %v613
      %690 = vmatprep.subr.bf16.mxu0 %v616
      %691 = vmatpush1.bf16.msra.mxu0 %v615
      %692 = vmatprep.subr.bf16.mxu0 %v618
      %693 = vmatpush1.bf16.msra.mxu0 %v617
      %694 = vmatprep.subr.bf16.mxu0 0
      %695 = vmatpush1.bf16.msra.mxu0 0
      %696 = vmatprep.subr.bf16.mxu0 0
      %697 = vmatpush1.bf16.msra.mxu0 0
      %698 = vmatprep.subr.bf16.mxu0 0
      %699 = vmatpush1.bf16.msra.mxu0 0
      %700 = vmatprep.subr.bf16.mxu0 0
      %701 = vmatpush1.bf16.msra.mxu0 0
      %702 = vmatprep.subr.bf16.mxu0 0
      %703 = vmatpush1.bf16.msra.mxu0 0
      %704 = vmatprep.subr.bf16.mxu0 0
      %705 = vmatpush1.bf16.msra.mxu0 0
      %706 = vmatprep.subr.bf16.mxu0 0
      %707 = vmatpush1.bf16.msra.mxu0 0
      %708 = vmatprep.subr.bf16.mxu0 0
      %709 = vmatpush1.bf16.msra.mxu0 0
      %710 = vmatprep.mubr.bf16.mxu0 0
      %711 = vmatmul.mubr.bf16.gmra.mrb[0].mxu0 %v554
      %v712 = vpop.f32.mrb[0].mxu0
      %v713 = vadd.f32 0.0, %v712
      %v714 = vpop.f32.mrb[0].mxu0
      %v715 = vadd.f32 0.0, %v714
      %v716 = vpop.f32.mrb[0].mxu0
      %v717 = vpop.f32.mrb[0].mxu0
      %718 = vdwg.mxu0
      %v719 = vadd.f32 %v529, %v713
      %v720 = vadd.f32 %v531, %v715
      %s721 = scalar_lea.vmem %s1, 384
      %v722 = vld [vmem:[%s721] sm:$0xff]
      %v723 = vld [vmem:[%s721 + $0x8] sm:$0xff]
      %v724 = vld [vmem:[%s721 + $0x10] sm:$0xff]
      %v725 = vld [vmem:[%s721 + $0x18] sm:$0xff]
      %v726 = vld [vmem:[%s721 + $0x20] sm:$0xff]
      %v727 = vld [vmem:[%s721 + $0x28] sm:$0xff]
      %v728 = vld [vmem:[%s721 + $0x30] sm:$0xff]
      %v729 = vld [vmem:[%s721 + $0x38] sm:$0xff]
      %v730 = vld [vmem:[%s721 + $0x40] sm:$0xff]
      %v731 = vld [vmem:[%s721 + $0x48] sm:$0xff]
      %v732 = vld [vmem:[%s721 + $0x50] sm:$0xff]
      %v733 = vld [vmem:[%s721 + $0x58] sm:$0xff]
      %v734 = vld [vmem:[%s721 + $0x60] sm:$0xff]
      %v735 = vld [vmem:[%s721 + $0x68] sm:$0xff]
      %v736 = vld [vmem:[%s721 + $0x70] sm:$0xff]
      %v737 = vld [vmem:[%s721 + $0x78] sm:$0xff]
      %s738 = scalar_lea.vmem %s164, 4
      %v739 = vld [vmem:[%s738] ss:$2 sm:$0x1f]
      %v740 = vpack.c.bf16 %v739, %v739
      %v757 = vunpack.c.l.b16 %v722
      %v758 = vunpack.c.h.b16 %v722
      %v759 = vunpack.c.l.b16 %v723
      %v760 = vunpack.c.h.b16 %v723
      %v761 = vunpack.c.l.b16 %v724
      %v762 = vunpack.c.h.b16 %v724
      %v763 = vunpack.c.l.b16 %v725
      %v764 = vunpack.c.h.b16 %v725
      %v765 = vunpack.c.l.b16 %v726
      %v766 = vunpack.c.h.b16 %v726
      %v767 = vunpack.c.l.b16 %v727
      %v768 = vunpack.c.h.b16 %v727
      %v769 = vunpack.c.l.b16 %v728
      %v770 = vunpack.c.h.b16 %v728
      %v771 = vunpack.c.l.b16 %v729
      %v772 = vunpack.c.h.b16 %v729
      %v773 = vunpack.c.l.b16 %v730
      %v774 = vunpack.c.h.b16 %v730
      %v775 = vunpack.c.l.b16 %v731
      %v776 = vunpack.c.h.b16 %v731
      %v777 = vunpack.c.l.b16 %v732
      %v778 = vunpack.c.h.b16 %v732
      %v779 = vunpack.c.l.b16 %v733
      %v780 = vunpack.c.h.b16 %v733
      %v781 = vunpack.c.l.b16 %v734
      %v782 = vunpack.c.h.b16 %v734
      %v783 = vunpack.c.l.b16 %v735
      %v784 = vunpack.c.h.b16 %v735
      %v785 = vunpack.c.l.b16 %v736
      %v786 = vunpack.c.h.b16 %v736
      %v787 = vunpack.c.l.b16 %v737
      %v788 = vunpack.c.h.b16 %v737
      %v789 = vpack.c.b16 %v759, %v757
      %v790 = vpack.c.b16 %v760, %v758
      %v791 = vpack.c.b16 %v763, %v761
      %v792 = vpack.c.b16 %v764, %v762
      %v793 = vpack.c.b16 %v767, %v765
      %v794 = vpack.c.b16 %v768, %v766
      %v795 = vpack.c.b16 %v771, %v769
      %v796 = vpack.c.b16 %v772, %v770
      %v797 = vpack.c.b16 %v775, %v773
      %v798 = vpack.c.b16 %v776, %v774
      %v799 = vpack.c.b16 %v779, %v777
      %v800 = vpack.c.b16 %v780, %v778
      %v801 = vpack.c.b16 %v783, %v781
      %v802 = vpack.c.b16 %v784, %v782
      %v803 = vpack.c.b16 %v787, %v785
      %v804 = vpack.c.b16 %v788, %v786
      %821 = vmatprep.subr.bf16.mxu0 %v790
      %822 = vmatpush1.bf16.msra.mxu0 %v789
      %823 = vmatprep.subr.bf16.mxu0 %v792
      %824 = vmatpush1.bf16.msra.mxu0 %v791
      %825 = vmatprep.subr.bf16.mxu0 %v794
      %826 = vmatpush1.bf16.msra.mxu0 %v793
      %827 = vmatprep.subr.bf16.mxu0 %v796
      %828 = vmatpush1.bf16.msra.mxu0 %v795
      %829 = vmatprep.subr.bf16.mxu0 %v798
      %830 = vmatpush1.bf16.msra.mxu0 %v797
      %831 = vmatprep.subr.bf16.mxu0 %v800
      %832 = vmatpush1.bf16.msra.mxu0 %v799
      %833 = vmatprep.subr.bf16.mxu0 %v802
      %834 = vmatpush1.bf16.msra.mxu0 %v801
      %835 = vmatprep.subr.bf16.mxu0 %v804
      %836 = vmatpush1.bf16.msra.mxu0 %v803
      %837 = vmatprep.subr.bf16.mxu0 0
      %838 = vmatpush1.bf16.msra.mxu0 0
      %839 = vmatprep.subr.bf16.mxu0 0
      %840 = vmatpush1.bf16.msra.mxu0 0
      %841 = vmatprep.subr.bf16.mxu0 0
      %842 = vmatpush1.bf16.msra.mxu0 0
      %843 = vmatprep.subr.bf16.mxu0 0
      %844 = vmatpush1.bf16.msra.mxu0 0
      %845 = vmatprep.subr.bf16.mxu0 0
      %846 = vmatpush1.bf16.msra.mxu0 0
      %847 = vmatprep.subr.bf16.mxu0 0
      %848 = vmatpush1.bf16.msra.mxu0 0
      %849 = vmatprep.subr.bf16.mxu0 0
      %850 = vmatpush1.bf16.msra.mxu0 0
      %851 = vmatprep.subr.bf16.mxu0 0
      %852 = vmatpush1.bf16.msra.mxu0 0
      %853 = vmatprep.mubr.bf16.mxu0 0
      %854 = vmatmul.mubr.bf16.gmra.mrb[0].mxu0 %v554
      %v855 = vpop.f32.mrb[0].mxu0
      %v856 = vadd.f32 0.0, %v855
      %v857 = vpop.f32.mrb[0].mxu0
      %v858 = vadd.f32 0.0, %v857
      %v859 = vpop.f32.mrb[0].mxu0
      %v860 = vpop.f32.mrb[0].mxu0
      %861 = vdwg.mxu0
      %v862 = vadd.f32 %v676, %v856
      %v863 = vadd.f32 %v677, %v858
      %864 = vmatprep.subr.bf16.mxu0 %v790
      %865 = vmatpush1.bf16.msra.mxu0 %v789
      %866 = vmatprep.subr.bf16.mxu0 %v792
      %867 = vmatpush1.bf16.msra.mxu0 %v791
      %868 = vmatprep.subr.bf16.mxu0 %v794
      %869 = vmatpush1.bf16.msra.mxu0 %v793
      %870 = vmatprep.subr.bf16.mxu0 %v796
      %871 = vmatpush1.bf16.msra.mxu0 %v795
      %872 = vmatprep.subr.bf16.mxu0 %v798
      %873 = vmatpush1.bf16.msra.mxu0 %v797
      %874 = vmatprep.subr.bf16.mxu0 %v800
      %875 = vmatpush1.bf16.msra.mxu0 %v799
      %876 = vmatprep.subr.bf16.mxu0 %v802
      %877 = vmatpush1.bf16.msra.mxu0 %v801
      %878 = vmatprep.subr.bf16.mxu0 %v804
      %879 = vmatpush1.bf16.msra.mxu0 %v803
      %880 = vmatprep.subr.bf16.mxu0 0
      %881 = vmatpush1.bf16.msra.mxu0 0
      %882 = vmatprep.subr.bf16.mxu0 0
      %883 = vmatpush1.bf16.msra.mxu0 0
      %884 = vmatprep.subr.bf16.mxu0 0
      %885 = vmatpush1.bf16.msra.mxu0 0
      %886 = vmatprep.subr.bf16.mxu0 0
      %887 = vmatpush1.bf16.msra.mxu0 0
      %888 = vmatprep.subr.bf16.mxu0 0
      %889 = vmatpush1.bf16.msra.mxu0 0
      %890 = vmatprep.subr.bf16.mxu0 0
      %891 = vmatpush1.bf16.msra.mxu0 0
      %892 = vmatprep.subr.bf16.mxu0 0
      %893 = vmatpush1.bf16.msra.mxu0 0
      %894 = vmatprep.subr.bf16.mxu0 0
      %895 = vmatpush1.bf16.msra.mxu0 0
      %896 = vmatprep.mubr.bf16.mxu0 0
      %897 = vmatmul.mubr.bf16.gmra.mrb[0].mxu0 %v740
      %v898 = vpop.f32.mrb[0].mxu0
      %v899 = vadd.f32 0.0, %v898
      %v900 = vpop.f32.mrb[0].mxu0
      %v901 = vadd.f32 0.0, %v900
      %v902 = vpop.f32.mrb[0].mxu0
      %v903 = vpop.f32.mrb[0].mxu0
      %904 = vdwg.mxu0
      %v905 = vadd.f32 %v719, %v899
      %v906 = vadd.f32 %v720, %v901
      %s907 = scalar_lea.vmem %s1, 512
      %v908 = vld [vmem:[%s907] sm:$0xff]
      %v909 = vld [vmem:[%s907 + $0x8] sm:$0xff]
      %v910 = vld [vmem:[%s907 + $0x10] sm:$0xff]
      %v911 = vld [vmem:[%s907 + $0x18] sm:$0xff]
      %v912 = vld [vmem:[%s907 + $0x20] sm:$0xff]
      %v913 = vld [vmem:[%s907 + $0x28] sm:$0xff]
      %v914 = vld [vmem:[%s907 + $0x30] sm:$0xff]
      %v915 = vld [vmem:[%s907 + $0x38] sm:$0xff]
      %v916 = vld [vmem:[%s907 + $0x40] sm:$0xff]
      %v917 = vld [vmem:[%s907 + $0x48] sm:$0xff]
      %v918 = vld [vmem:[%s907 + $0x50] sm:$0xff]
      %v919 = vld [vmem:[%s907 + $0x58] sm:$0xff]
      %v920 = vld [vmem:[%s907 + $0x60] sm:$0xff]
      %v921 = vld [vmem:[%s907 + $0x68] sm:$0xff]
      %v922 = vld [vmem:[%s907 + $0x70] sm:$0xff]
      %v923 = vld [vmem:[%s907 + $0x78] sm:$0xff]
      %s924 = scalar_lea.vmem %s164, 5
      %v925 = vld [vmem:[%s924] ss:$2 sm:$0x1f]
      %v926 = vpack.c.bf16 %v925, %v925
      %v943 = vunpack.c.l.b16 %v908
      %v944 = vunpack.c.h.b16 %v908
      %v945 = vunpack.c.l.b16 %v909
      %v946 = vunpack.c.h.b16 %v909
      %v947 = vunpack.c.l.b16 %v910
      %v948 = vunpack.c.h.b16 %v910
      %v949 = vunpack.c.l.b16 %v911
      %v950 = vunpack.c.h.b16 %v911
      %v951 = vunpack.c.l.b16 %v912
      %v952 = vunpack.c.h.b16 %v912
      %v953 = vunpack.c.l.b16 %v913
      %v954 = vunpack.c.h.b16 %v913
      %v955 = vunpack.c.l.b16 %v914
      %v956 = vunpack.c.h.b16 %v914
      %v957 = vunpack.c.l.b16 %v915
      %v958 = vunpack.c.h.b16 %v915
      %v959 = vunpack.c.l.b16 %v916
      %v960 = vunpack.c.h.b16 %v916
      %v961 = vunpack.c.l.b16 %v917
      %v962 = vunpack.c.h.b16 %v917
      %v963 = vunpack.c.l.b16 %v918
      %v964 = vunpack.c.h.b16 %v918
      %v965 = vunpack.c.l.b16 %v919
      %v966 = vunpack.c.h.b16 %v919
      %v967 = vunpack.c.l.b16 %v920
      %v968 = vunpack.c.h.b16 %v920
      %v969 = vunpack.c.l.b16 %v921
      %v970 = vunpack.c.h.b16 %v921
      %v971 = vunpack.c.l.b16 %v922
      %v972 = vunpack.c.h.b16 %v922
      %v973 = vunpack.c.l.b16 %v923
      %v974 = vunpack.c.h.b16 %v923
      %v975 = vpack.c.b16 %v945, %v943
      %v976 = vpack.c.b16 %v946, %v944
      %v977 = vpack.c.b16 %v949, %v947
      %v978 = vpack.c.b16 %v950, %v948
      %v979 = vpack.c.b16 %v953, %v951
      %v980 = vpack.c.b16 %v954, %v952
      %v981 = vpack.c.b16 %v957, %v955
      %v982 = vpack.c.b16 %v958, %v956
      %v983 = vpack.c.b16 %v961, %v959
      %v984 = vpack.c.b16 %v962, %v960
      %v985 = vpack.c.b16 %v965, %v963
      %v986 = vpack.c.b16 %v966, %v964
      %v987 = vpack.c.b16 %v969, %v967
      %v988 = vpack.c.b16 %v970, %v968
      %v989 = vpack.c.b16 %v973, %v971
      %v990 = vpack.c.b16 %v974, %v972
      %1007 = vmatprep.subr.bf16.mxu0 %v976
      %1008 = vmatpush1.bf16.msra.mxu0 %v975
      %1009 = vmatprep.subr.bf16.mxu0 %v978
      %1010 = vmatpush1.bf16.msra.mxu0 %v977
      %1011 = vmatprep.subr.bf16.mxu0 %v980
      %1012 = vmatpush1.bf16.msra.mxu0 %v979
      %1013 = vmatprep.subr.bf16.mxu0 %v982
      %1014 = vmatpush1.bf16.msra.mxu0 %v981
      %1015 = vmatprep.subr.bf16.mxu0 %v984
      %1016 = vmatpush1.bf16.msra.mxu0 %v983
      %1017 = vmatprep.subr.bf16.mxu0 %v986
      %1018 = vmatpush1.bf16.msra.mxu0 %v985
      %1019 = vmatprep.subr.bf16.mxu0 %v988
      %1020 = vmatpush1.bf16.msra.mxu0 %v987
      %1021 = vmatprep.subr.bf16.mxu0 %v990
      %1022 = vmatpush1.bf16.msra.mxu0 %v989
      %1023 = vmatprep.subr.bf16.mxu0 0
      %1024 = vmatpush1.bf16.msra.mxu0 0
      %1025 = vmatprep.subr.bf16.mxu0 0
      %1026 = vmatpush1.bf16.msra.mxu0 0
      %1027 = vmatprep.subr.bf16.mxu0 0
      %1028 = vmatpush1.bf16.msra.mxu0 0
      %1029 = vmatprep.subr.bf16.mxu0 0
      %1030 = vmatpush1.bf16.msra.mxu0 0
      %1031 = vmatprep.subr.bf16.mxu0 0
      %1032 = vmatpush1.bf16.msra.mxu0 0
      %1033 = vmatprep.subr.bf16.mxu0 0
      %1034 = vmatpush1.bf16.msra.mxu0 0
      %1035 = vmatprep.subr.bf16.mxu0 0
      %1036 = vmatpush1.bf16.msra.mxu0 0
      %1037 = vmatprep.subr.bf16.mxu0 0
      %1038 = vmatpush1.bf16.msra.mxu0 0
      %1039 = vmatprep.mubr.bf16.mxu0 0
      %1040 = vmatmul.mubr.bf16.gmra.mrb[0].mxu0 %v740
      %v1041 = vpop.f32.mrb[0].mxu0
      %v1042 = vadd.f32 0.0, %v1041
      %v1043 = vpop.f32.mrb[0].mxu0
      %v1044 = vadd.f32 0.0, %v1043
      %v1045 = vpop.f32.mrb[0].mxu0
      %v1046 = vpop.f32.mrb[0].mxu0
      %1047 = vdwg.mxu0
      %v1048 = vadd.f32 %v862, %v1042
      %v1049 = vadd.f32 %v863, %v1044
      %1050 = vmatprep.subr.bf16.mxu0 %v976
      %1051 = vmatpush1.bf16.msra.mxu0 %v975
      %1052 = vmatprep.subr.bf16.mxu0 %v978
      %1053 = vmatpush1.bf16.msra.mxu0 %v977
      %1054 = vmatprep.subr.bf16.mxu0 %v980
      %1055 = vmatpush1.bf16.msra.mxu0 %v979
      %1056 = vmatprep.subr.bf16.mxu0 %v982
      %1057 = vmatpush1.bf16.msra.mxu0 %v981
      %1058 = vmatprep.subr.bf16.mxu0 %v984
      %1059 = vmatpush1.bf16.msra.mxu0 %v983
      %1060 = vmatprep.subr.bf16.mxu0 %v986
      %1061 = vmatpush1.bf16.msra.mxu0 %v985
      %1062 = vmatprep.subr.bf16.mxu0 %v988
      %1063 = vmatpush1.bf16.msra.mxu0 %v987
      %1064 = vmatprep.subr.bf16.mxu0 %v990
      %1065 = vmatpush1.bf16.msra.mxu0 %v989
      %1066 = vmatprep.subr.bf16.mxu0 0
      %1067 = vmatpush1.bf16.msra.mxu0 0
      %1068 = vmatprep.subr.bf16.mxu0 0
      %1069 = vmatpush1.bf16.msra.mxu0 0
      %1070 = vmatprep.subr.bf16.mxu0 0
      %1071 = vmatpush1.bf16.msra.mxu0 0
      %1072 = vmatprep.subr.bf16.mxu0 0
      %1073 = vmatpush1.bf16.msra.mxu0 0
      %1074 = vmatprep.subr.bf16.mxu0 0
      %1075 = vmatpush1.bf16.msra.mxu0 0
      %1076 = vmatprep.subr.bf16.mxu0 0
      %1077 = vmatpush1.bf16.msra.mxu0 0
      %1078 = vmatprep.subr.bf16.mxu0 0
      %1079 = vmatpush1.bf16.msra.mxu0 0
      %1080 = vmatprep.subr.bf16.mxu0 0
      %1081 = vmatpush1.bf16.msra.mxu0 0
      %1082 = vmatprep.mubr.bf16.mxu0 0
      %1083 = vmatmul.mubr.bf16.gmra.mrb[0].mxu0 %v926
      %v1084 = vpop.f32.mrb[0].mxu0
      %v1085 = vadd.f32 0.0, %v1084
      %v1086 = vpop.f32.mrb[0].mxu0
      %v1087 = vadd.f32 0.0, %v1086
      %v1088 = vpop.f32.mrb[0].mxu0
      %v1089 = vpop.f32.mrb[0].mxu0
      %1090 = vdwg.mxu0
      %v1091 = vadd.f32 %v905, %v1085
      %v1092 = vadd.f32 %v906, %v1087
      %v1093 = vmax.f32 %v1048, %v1091
      %v1094 = vmax.f32 %v1049, %v1092
      %v1095 = vld [vmem:[%s2] sm:$0x3]
      %v1097 = vlaneseq
      %v1098 = vshrl.u32 %v1097, 7
      %v1099 = vsub.s32 0, %v1098
      %v1100 = vrot.slane %v1095, %v1099
      %v1101 = vlaneseq
      %v1102 = vshrl.u32 %v1101, 7
      %v1103 = vsub.s32 1, %v1102
      %v1104 = vrot.slane %v1095, %v1103
      %v1107 = vadd.f32 %v1093, %v1100
      %v1108 = vadd.f32 %v1094, %v1104
      %v1109 = vmax.f32 %v1107, 0.0
      %v1110 = vmax.f32 %v1108, 0.0
      %v1111 = vmax.f32 %v1109, %v1110
      %1112 = vst [vmem:[%s168] sm:$0x1f] %v1111
      %p1113 = scmp.lt.s32.totalorder %s14, 1
      %s1114 = scalar_select %p1113, %s14, 1
      %s1115 = smul.addr %s1114, 8
      %s1116 = scalar_lea.vmem %s3, %s1115
      // Predicated region
      $region33: #{dropnet_forward.4} parent=31 // pred_check
        %p1117 = pneg %p100
      $region34: #{dropnet_forward.4} parent=31 // pred_check_branch
        %1119 = sbr.rel (%p1117) target = $region36
      $region35: #{dropnet_forward.4} parent=31 // pred_region
        _
      $region36: #{dropnet_forward.4} parent=31 // pred_fallthru
        _
    $region32: #{dropnet_forward.4} parent=5 // pred_fallthru
      _
    %p1120 = scmp.le.s32.totalorder 2, %s9
    // Predicated region
    $region37: #{dropnet_forward.4} parent=5 // pred_check
      %p1121 = pneg %p1120
    $region38: #{dropnet_forward.4} parent=5 // pred_check_branch
      %1123 = sbr.rel (%p1121) target = $region40
    $region39: #{dropnet_forward.4} parent=5 // pred_region
      %s1124 = ssub.s32 %s9, 2
      // Predicated region
      $region41: #{dropnet_forward.4} parent=39 // pred_check
        %p1125 = pneg %p106
      $region42: #{dropnet_forward.4} parent=39 // pred_check_branch
        %1127 = sbr.rel (%p1125) target = $region44
      $region43: #{dropnet_forward.4} parent=39 // pred_region
        %p1128 = scmp.lt.s32.totalorder %s15, 1
        %s1129 = scalar_select %p1128, %s15, 1
        %s1130 = smul.addr %s1129, 8
        %s1131 = scalar_lea.vmem %s3, %s1130
      $region44: #{dropnet_forward.4} parent=39 // pred_fallthru
        _
    $region40: #{dropnet_forward.4} parent=5 // pred_fallthru
      _
  $region6: #{dropnet_forward.4} parent=0 // loop_footer
    %s13 = sadd.s32 1, %s9
  $region7: #{dropnet_forward.4} parent=0 // loop_footer_branch
    %8 = sbr.rel target = $region3
  $region8: #{dropnet_forward.4} parent=0 // loop_exit
    _

// kernel: dropnet_forward.3
$region0: #{dropnet_forward.3}
  #allocation0 [shape = 'u32[]', space=smem, size = 0x4, offset = 0x4, fixed_abs, tag = 'smem constant byte address 0x4 - core index']
  #allocation1 [shape = 'u32[144,128]{1,0:T(1,128)}', space=vmem, size = 0x12000, scoped, tag = 'internal scratch']
  %s0 = inlined_call_operand.vmem [shape: f32[2,32,96], index: 0, kind: input, shape index: {}]
  %s1 = inlined_call_operand.hbm [shape: bf16[5,96,256], index: 1, kind: input, shape index: {}]
  %s2 = inlined_call_operand.vmem [shape: f32[1,256], index: 2, kind: input, shape index: {}]
  %s3 = inlined_call_operand.vmem [shape: f32[2,14,128], index: 3, kind: output, shape index: {}]
  %s4 = sld [smem:[#allocation0]]
  $region49: #{dropnet_forward.3} parent=0
    _
  %s6 = ssub.s32 1, %s4
  %s7 = scalar_select 0, %s6, %s4
  $region1: #{dropnet_forward.3} parent=0
    #allocation2 [shape = 'u8[245760]{0}', space=vmem, size = 0x3c000, scoped, tag = 'input window, operand 1, single buffered']
    #allocation3 [shape = 's32[2]{0}', space=sflag, size = 0x8, scoped, tag = 'scoped memory for dropnet_forward.3']
    %8 = vsyncpa [#allocation3], 0
    loop: start=0, step=1, limit=4
    $region2: #{dropnet_forward.3} parent=1 // loop_pre_header
      _
    $region3: #{dropnet_forward.3} parent=1 // loop_header
      %s10 = sphi 0, %s14
      %p11 = scmp.ge.s32.totalorder %s10, 4
      %s20 = sphi 0, %s22
      %s23 = sphi 0, %s20
      %s24 = sphi 0, %s23
      %s40 = sphi 0, %s24
      %s44 = sphi 0, %s44
      %s46 = sphi 0, %s44
      %s47 = sphi 0, %s46
      %s61 = sphi 0, %s47
      %s65 = sphi 0, %s65
      %s67 = sphi 0, %s65
      %s68 = sphi 0, %s67
      %s82 = sphi 0, %s68
      %s88 = sphi 0, %s90
      %s91 = sphi 0, %s88
      %s92 = sphi 0, %s91
      %s108 = sphi 0, %s92
    $region4: #{dropnet_forward.3} parent=1 // loop_header_branch
      %13 = sbr.rel (%p11) target = $region8
    $region5: #{dropnet_forward.3} parent=1 // loop_body
      %s15 = ssub.s32 %s10, 1
      %s16 = ssub.s32 %s10, 2
      %s17 = sadd.s32 %s10, 1
      %s18 = ssub.s32 %s10, %s17
      %p19 = scmp.eq.s32.totalorder %s18, 0
      %s21 = sadd.s32 %s20, 1
      %s22 = scalar_select %p19, %s20, %s21
      %p25 = pneg %p19
      %p26 = scmp.eq.s32.totalorder %s10, 1
      %p27 = por %p25, %p26
      %p28 = scmp.ne.s32.totalorder %s20, %s23
      %p29 = scmp.eq.s32.totalorder %s10, 0
      %p30 = por %p28, %p29
      %p31 = scmp.ne.s32.totalorder %s20, %s23
      %p32 = scmp.eq.s32.totalorder %s15, 1
      %p33 = por %p31, %p32
      %p34 = scmp.ne.s32.totalorder %s23, %s24
      %p35 = scmp.eq.s32.totalorder %s15, 0
      %p36 = por %p34, %p35
      %p37 = scmp.ne.s32.totalorder %s23, %s24
      %p38 = scmp.eq.s32.totalorder %s16, 1
      %p39 = por %p37, %p38
      %p41 = scmp.ne.s32.totalorder %s24, %s40
      %p42 = scmp.eq.s32.totalorder %s16, 0
      %p43 = por %p41, %p42
      %s45 = sadd.s32 %s44, 1
      %p48 = scmp.eq.s32.totalorder %s10, 1
      %p49 = scmp.ne.s32.totalorder %s44, %s46
      %p50 = scmp.eq.s32.totalorder %s10, 0
      %p51 = por %p49, %p50
      %p52 = scmp.ne.s32.totalorder %s44, %s46
      %p53 = scmp.eq.s32.totalorder %s15, 1
      %p54 = por %p52, %p53
      %p55 = scmp.ne.s32.totalorder %s46, %s47
      %p56 = scmp.eq.s32.totalorder %s15, 0
      %p57 = por %p55, %p56
      %p58 = scmp.ne.s32.totalorder %s46, %s47
      %p59 = scmp.eq.s32.totalorder %s16, 1
      %p60 = por %p58, %p59
      %p62 = scmp.ne.s32.totalorder %s47, %s61
      %p63 = scmp.eq.s32.totalorder %s16, 0
      %p64 = por %p62, %p63
      %s66 = sadd.s32 %s65, 1
      %p69 = scmp.eq.s32.totalorder %s10, 1
      %p70 = scmp.ne.s32.totalorder %s65, %s67
      %p71 = scmp.eq.s32.totalorder %s10, 0
      %p72 = por %p70, %p71
      %p73 = scmp.ne.s32.totalorder %s65, %s67
      %p74 = scmp.eq.s32.totalorder %s15, 1
      %p75 = por %p73, %p74
      %p76 = scmp.ne.s32.totalorder %s67, %s68
      %p77 = scmp.eq.s32.totalorder %s15, 0
      %p78 = por %p76, %p77
      %p79 = scmp.ne.s32.totalorder %s67, %s68
      %p80 = scmp.eq.s32.totalorder %s16, 1
      %p81 = por %p79, %p80
      %p83 = scmp.ne.s32.totalorder %s68, %s82
      %p84 = scmp.eq.s32.totalorder %s16, 0
      %p85 = por %p83, %p84
      %s86 = ssub.s32 %s10, %s17
      %p87 = scmp.eq.s32.totalorder %s86, 0
      %s89 = sadd.s32 %s88, 1
      %s90 = scalar_select %p87, %s88, %s89
      %p93 = pneg %p87
      %p94 = scmp.eq.s32.totalorder %s10, 1
      %p95 = por %p93, %p94
      %p96 = scmp.ne.s32.totalorder %s88, %s91
      %p97 = scmp.eq.s32.totalorder %s10, 0
      %p98 = por %p96, %p97
      %p99 = scmp.ne.s32.totalorder %s88, %s91
      %p100 = scmp.eq.s32.totalorder %s15, 1
      %p101 = por %p99, %p100
      %p102 = scmp.ne.s32.totalorder %s91, %s92
      %p103 = scmp.eq.s32.totalorder %s15, 0
      %p104 = por %p102, %p103
      %p105 = scmp.ne.s32.totalorder %s91, %s92
      %p106 = scmp.eq.s32.totalorder %s16, 1
      %p107 = por %p105, %p106
      %p109 = scmp.ne.s32.totalorder %s92, %s108
      %p110 = scmp.eq.s32.totalorder %s16, 0
      %p111 = por %p109, %p110
      %p112 = scmp.le.s32.totalorder 1, %s10
      %p113 = scmp.lt.s32.totalorder %s10, 3
      %p114 = pnand %p112, %p113
      %p115 = pneg %p114
      // Predicated region
      $region9: #{dropnet_forward.3} parent=5 // pred_check
        _
      $region10: #{dropnet_forward.3} parent=5 // pred_check_branch
        %117 = sbr.rel (%p114) target = $region12
      $region11: #{dropnet_forward.3} parent=5 // pred_region
        %s118 = ssub.s32 %s10, 1
        // Predicated region
        $region13: #{dropnet_forward.3} parent=11 // pred_check
          %p119 = pneg %p57
        $region14: #{dropnet_forward.3} parent=11 // pred_check_branch
          %121 = sbr.rel (%p119) target = $region16
        $region15: #{dropnet_forward.3} parent=11 // pred_region
          %s123 = ssub.s32 7680, 7680
          %124 = vsyncadd [#allocation3], %s123
          %s125 = sshll.u32 [#allocation2], 4
          %s126 = int_to_ptr.vmem [resolvable:$true] %s125
          %131 = dma.hbm_to_vmem [thread:$0]  %s1, 7680, %s126, [#allocation3], 128, 128, 8
        $region16: #{dropnet_forward.3} parent=11 // pred_fallthru
          _
        // Predicated region
        $region17: #{dropnet_forward.3} parent=11 // pred_check
          %p132 = pneg %p78
        $region18: #{dropnet_forward.3} parent=11 // pred_check_branch
          %134 = sbr.rel (%p132) target = $region20
        $region19: #{dropnet_forward.3} parent=11 // pred_region
          _
        $region20: #{dropnet_forward.3} parent=11 // pred_fallthru
          _
      $region12: #{dropnet_forward.3} parent=5 // pred_fallthru
        _
      %p135 = scmp.lt.s32.totalorder %s10, 2
      // Predicated region
      $region21: #{dropnet_forward.3} parent=5 // pred_check
        %p136 = pneg %p135
      $region22: #{dropnet_forward.3} parent=5 // pred_check_branch
        %138 = sbr.rel (%p136) target = $region24
      $region23: #{dropnet_forward.3} parent=5 // pred_region
        // Predicated region
        $region25: #{dropnet_forward.3} parent=23 // pred_check
          %p139 = pneg %p30
        $region26: #{dropnet_forward.3} parent=23 // pred_check_branch
          %141 = sbr.rel (%p139) target = $region28
        $region27: #{dropnet_forward.3} parent=23 // pred_region
          %p142 = scmp.lt.s32.totalorder %s10, 1
          %s143 = scalar_select %p142, %s10, 1
          %s144 = smul.addr %s143, 4
          %s145 = smul.addr %s144, 8
          %s146 = scalar_lea.vmem %s0, %s145
        $region28: #{dropnet_forward.3} parent=23 // pred_fallthru
          _
      $region24: #{dropnet_forward.3} parent=5 // pred_fallthru
        _
      %p147 = scmp.le.s32.totalorder 1, %s10
      %p148 = scmp.lt.s32.totalorder %s10, 3
      %p149 = pnand %p147, %p148
      %p150 = pneg %p149
      // Predicated region
      $region29: #{dropnet_forward.3} parent=5 // pred_check
        _
      $region30: #{dropnet_forward.3} parent=5 // pred_check_branch
        %152 = sbr.rel (%p149) target = $region32
      $region31: #{dropnet_forward.3} parent=5 // pred_region
        %s153 = ssub.s32 %s10, 1
        // Predicated region
        $region33: #{dropnet_forward.3} parent=31 // pred_check
          %p154 = pneg %p57
        $region34: #{dropnet_forward.3} parent=31 // pred_check_branch
          %156 = sbr.rel (%p154) target = $region36
        $region35: #{dropnet_forward.3} parent=31 // pred_region
          %157 = dma.done [#allocation3], 7680
        $region36: #{dropnet_forward.3} parent=31 // pred_fallthru
          _
        %p158 = scmp.lt.s32.totalorder %s15, 1
        %s159 = scalar_select %p158, %s15, 1
        %s160 = smul.addr %s159, 4
        %s161 = smul.addr %s160, 8
        %s162 = scalar_lea.vmem %s0, %s161
        %p163 = pneg %p36
        %p164 = pneg %p33
        %p165 = pneg %p57
        %p166 = pneg %p54
        %p167 = pneg %p78
        %p168 = pneg %p75
        %p169 = pneg %p104
        %p170 = pneg %p101
        %p171 = scmp.lt.s32.totalorder %s15, 1
        %s172 = scalar_select %p171, %s15, 1
        %s173 = smul.addr %s172, 2
        %s174 = smul.addr %s173, 8
        %s175 = scalar_lea.vmem %s3, %s174
        %p176 = scmp.lt.s32.totalorder %s15, 1
        %s177 = scalar_select %p176, %s15, 1
        %s178 = smul.addr %s177, 4
        %s179 = smul.addr %s178, 8
        %s180 = scalar_lea.vmem %s0, %s179
        %p181 = scmp.lt.s32.totalorder %s15, 1
        %s182 = scalar_select %p181, %s15, 1
        %s183 = smul.addr %s182, 2
        %s184 = smul.addr %s183, 8
        %s185 = scalar_lea.vmem %s3, %s184
        %v187 = vld [vmem:[#allocation2] sm:$0xff]
        %v188 = vld [vmem:[#allocation2 + $0x8] sm:$0xff]
        %v189 = vld [vmem:[#allocation2 + $0x10] sm:$0xff]
        %v190 = vld [vmem:[#allocation2 + $0x18] sm:$0xff]
        %v191 = vld [vmem:[#allocation2 + $0x20] sm:$0xff]
        %v192 = vld [vmem:[#allocation2 + $0x28] sm:$0xff]
        %v193 = vld [vmem:[#allocation2 + $0x30] sm:$0xff]
        %v194 = vld [vmem:[#allocation2 + $0x38] sm:$0xff]
        %v195 = vld [vmem:[#allocation2 + $0x40] sm:$0xff]
        %v196 = vld [vmem:[#allocation2 + $0x48] sm:$0xff]
        %v197 = vld [vmem:[#allocation2 + $0x50] sm:$0xff]
        %v198 = vld [vmem:[#allocation2 + $0x58] sm:$0xff]
        %v199 = vld [vmem:[%s180] ss:$2 sm:$0xff]
        %s200 = scalar_lea.vmem %s180, 16
        %v201 = vld [vmem:[%s200] ss:$2 sm:$0x3f]
        %v202 = vpack.c.bf16 %v201, %v199
        %s203 = scalar_lea.vmem %s180, 1
        %v204 = vld [vmem:[%s203] ss:$2 sm:$0xff]
        %s205 = scalar_lea.vmem %s180, 17
        %v206 = vld [vmem:[%s205] ss:$2 sm:$0x3f]
        %v207 = vpack.c.bf16 %v206, %v204
        %s208 = scalar_lea.vmem [#allocation2], 96
        %v209 = vld [vmem:[%s208] sm:$0xff]
        %v210 = vld [vmem:[%s208 + $0x8] sm:$0xff]
        %v211 = vld [vmem:[%s208 + $0x10] sm:$0xff]
        %v212 = vld [vmem:[%s208 + $0x18] sm:$0xff]
        %v213 = vld [vmem:[%s208 + $0x20] sm:$0xff]
        %v214 = vld [vmem:[%s208 + $0x28] sm:$0xff]
        %v215 = vld [vmem:[%s208 + $0x30] sm:$0xff]
        %v216 = vld [vmem:[%s208 + $0x38] sm:$0xff]
        %v217 = vld [vmem:[%s208 + $0x40] sm:$0xff]
        %v218 = vld [vmem:[%s208 + $0x48] sm:$0xff]
        %v219 = vld [vmem:[%s208 + $0x50] sm:$0xff]
        %v220 = vld [vmem:[%s208 + $0x58] sm:$0xff]
        %s221 = scalar_lea.vmem %s180, 2
        %v222 = vld [vmem:[%s221] ss:$2 sm:$0xff]
        %s223 = scalar_lea.vmem %s180, 18
        %v224 = vld [vmem:[%s223] ss:$2 sm:$0x3f]
        %v225 = vpack.c.bf16 %v224, %v222
        %v238 = vunpack.c.l.b16 %v209
        %v239 = vunpack.c.h.b16 %v209
        %v240 = vunpack.c.l.b16 %v210
        %v241 = vunpack.c.h.b16 %v210
        %v242 = vunpack.c.l.b16 %v211
        %v243 = vunpack.c.h.b16 %v211
        %v244 = vunpack.c.l.b16 %v212
        %v245 = vunpack.c.h.b16 %v212
        %v246 = vunpack.c.l.b16 %v213
        %v247 = vunpack.c.h.b16 %v213
        %v248 = vunpack.c.l.b16 %v214
        %v249 = vunpack.c.h.b16 %v214
        %v250 = vunpack.c.l.b16 %v215
        %v251 = vunpack.c.h.b16 %v215
        %v252 = vunpack.c.l.b16 %v216
        %v253 = vunpack.c.h.b16 %v216
        %v254 = vunpack.c.l.b16 %v217
        %v255 = vunpack.c.h.b16 %v217
        %v256 = vunpack.c.l.b16 %v218
        %v257 = vunpack.c.h.b16 %v218
        %v258 = vunpack.c.l.b16 %v219
        %v259 = vunpack.c.h.b16 %v219
        %v260 = vunpack.c.l.b16 %v220
        %v261 = vunpack.c.h.b16 %v220
        %v262 = vpack.c.b16 %v240, %v238
        %v263 = vpack.c.b16 %v241, %v239
        %v264 = vpack.c.b16 %v244, %v242
        %v265 = vpack.c.b16 %v245, %v243
        %v266 = vpack.c.b16 %v248, %v246
        %v267 = vpack.c.b16 %v249, %v247
        %v268 = vpack.c.b16 %v252, %v250
        %v269 = vpack.c.b16 %v253, %v251
        %v270 = vpack.c.b16 %v256, %v254
        %v271 = vpack.c.b16 %v257, %v255
        %v272 = vpack.c.b16 %v260, %v258
        %v273 = vpack.c.b16 %v261, %v259
        %vm286 = vcmask 785408
        %v288 = vsel %vm286, %v207, 0
        %290 = vmatprep.subr.bf16.mxu0 %v263
        %291 = vmatpush1.bf16.msra.mxu0 %v262
        %292 = vmatprep.subr.bf16.mxu0 %v265
        %293 = vmatpush1.bf16.msra.mxu0 %v264
        %294 = vmatprep.subr.bf16.mxu0 %v267
        %295 = vmatpush1.bf16.msra.mxu0 %v266
        %296 = vmatprep.subr.bf16.mxu0 %v269
        %297 = vmatpush1.bf16.msra.mxu0 %v268
        %298 = vmatprep.subr.bf16.mxu0 %v271
        %299 = vmatpush1.bf16.msra.mxu0 %v270
        %300 = vmatprep.subr.bf16.mxu0 %v273
        %301 = vmatpush1.bf16.msra.mxu0 %v272
        %302 = vmatprep.subr.bf16.mxu0 0
        %303 = vmatpush1.bf16.msra.mxu0 0
        %304 = vmatprep.subr.bf16.mxu0 0
        %305 = vmatpush1.bf16.msra.mxu0 0
        %306 = vmatprep.subr.bf16.mxu0 0
        %307 = vmatpush1.bf16.msra.mxu0 0
        %308 = vmatprep.subr.bf16.mxu0 0
        %309 = vmatpush1.bf16.msra.mxu0 0
        %310 = vmatprep.subr.bf16.mxu0 0
        %311 = vmatpush1.bf16.msra.mxu0 0
        %312 = vmatprep.subr.bf16.mxu0 0
        %313 = vmatpush1.bf16.msra.mxu0 0
        %314 = vmatprep.subr.bf16.mxu0 0
        %315 = vmatpush1.bf16.msra.mxu0 0
        %316 = vmatprep.subr.bf16.mxu0 0
        %317 = vmatpush1.bf16.msra.mxu0 0
        %318 = vmatprep.subr.bf16.mxu0 0
        %319 = vmatpush1.bf16.msra.mxu0 0
        %320 = vmatprep.subr.bf16.mxu0 0
        %321 = vmatpush1.bf16.msra.mxu0 0
        %322 = vmatprep.mubr.bf16.mxu0 0
        %323 = vmatmul.mubr.bf16.gmra.mrb[0].mxu0 %v288
        %v324 = vpop.f32.mrb[0].mxu0
        %v325 = vadd.f32 0.0, %v324
        %v326 = vpop.f32.mrb[0].mxu0
        %v327 = vadd.f32 0.0, %v326
        %v328 = vpop.f32.mrb[0].mxu0
        %v329 = vadd.f32 0.0, %v328
        %v330 = vpop.f32.mrb[0].mxu0
        %v331 = vadd.f32 0.0, %v330
        %332 = vdwg.mxu0
        %v345 = vunpack.c.l.b16 %v187
        %v346 = vunpack.c.h.b16 %v187
        %v347 = vunpack.c.l.b16 %v188
        %v348 = vunpack.c.h.b16 %v188
        %v349 = vunpack.c.l.b16 %v189
        %v350 = vunpack.c.h.b16 %v189
        %v351 = vunpack.c.l.b16 %v190
        %v352 = vunpack.c.h.b16 %v190
        %v353 = vunpack.c.l.b16 %v191
        %v354 = vunpack.c.h.b16 %v191
        %v355 = vunpack.c.l.b16 %v192
        %v356 = vunpack.c.h.b16 %v192
        %v357 = vunpack.c.l.b16 %v193
        %v358 = vunpack.c.h.b16 %v193
        %v359 = vunpack.c.l.b16 %v194
        %v360 = vunpack.c.h.b16 %v194
        %v361 = vunpack.c.l.b16 %v195
        %v362 = vunpack.c.h.b16 %v195
        %v363 = vunpack.c.l.b16 %v196
        %v364 = vunpack.c.h.b16 %v196
        %v365 = vunpack.c.l.b16 %v197
        %v366 = vunpack.c.h.b16 %v197
        %v367 = vunpack.c.l.b16 %v198
        %v368 = vunpack.c.h.b16 %v198
        %v369 = vpack.c.b16 %v347, %v345
        %v370 = vpack.c.b16 %v348, %v346
        %v371 = vpack.c.b16 %v351, %v349
        %v372 = vpack.c.b16 %v352, %v350
        %v373 = vpack.c.b16 %v355, %v353
        %v374 = vpack.c.b16 %v356, %v354
        %v375 = vpack.c.b16 %v359, %v357
        %v376 = vpack.c.b16 %v360, %v358
        %v377 = vpack.c.b16 %v363, %v361
        %v378 = vpack.c.b16 %v364, %v362
        %v379 = vpack.c.b16 %v367, %v365
        %v380 = vpack.c.b16 %v368, %v366
        %v394 = vsel %vm286, %v202, 0
        %396 = vmatprep.subr.bf16.mxu0 %v370
        %397 = vmatpush1.bf16.msra.mxu0 %v369
        %398 = vmatprep.subr.bf16.mxu0 %v372
        %399 = vmatpush1.bf16.msra.mxu0 %v371
        %400 = vmatprep.subr.bf16.mxu0 %v374
        %401 = vmatpush1.bf16.msra.mxu0 %v373
        %402 = vmatprep.subr.bf16.mxu0 %v376
        %403 = vmatpush1.bf16.msra.mxu0 %v375
        %404 = vmatprep.subr.bf16.mxu0 %v378
        %405 = vmatpush1.bf16.msra.mxu0 %v377
        %406 = vmatprep.subr.bf16.mxu0 %v380
        %407 = vmatpush1.bf16.msra.mxu0 %v379
        %408 = vmatprep.subr.bf16.mxu0 0
        %409 = vmatpush1.bf16.msra.mxu0 0
        %410 = vmatprep.subr.bf16.mxu0 0
        %411 = vmatpush1.bf16.msra.mxu0 0
        %412 = vmatprep.subr.bf16.mxu0 0
        %413 = vmatpush1.bf16.msra.mxu0 0
        %414 = vmatprep.subr.bf16.mxu0 0
        %415 = vmatpush1.bf16.msra.mxu0 0
        %416 = vmatprep.subr.bf16.mxu0 0
        %417 = vmatpush1.bf16.msra.mxu0 0
        %418 = vmatprep.subr.bf16.mxu0 0
        %419 = vmatpush1.bf16.msra.mxu0 0
        %420 = vmatprep.subr.bf16.mxu0 0
        %421 = vmatpush1.bf16.msra.mxu0 0
        %422 = vmatprep.subr.bf16.mxu0 0
        %423 = vmatpush1.bf16.msra.mxu0 0
        %424 = vmatprep.subr.bf16.mxu0 0
        %425 = vmatpush1.bf16.msra.mxu0 0
        %426 = vmatprep.subr.bf16.mxu0 0
        %427 = vmatpush1.bf16.msra.mxu0 0
        %428 = vmatprep.mubr.bf16.mxu0 0
        %429 = vmatmul.mubr.bf16.gmra.mrb[0].mxu0 %v394
        %v430 = vpop.f32.mrb[0].mxu0
        %v431 = vadd.f32 %v325, %v430
        %v432 = vpop.f32.mrb[0].mxu0
        %v433 = vadd.f32 %v327, %v432
        %v434 = vpop.f32.mrb[0].mxu0
        %v435 = vadd.f32 %v329, %v434
        %v436 = vpop.f32.mrb[0].mxu0
        %v437 = vadd.f32 %v331, %v436
        %438 = vdwg.mxu0
        %v440 = vsel %vm286, %v225, 0
        %442 = vmatprep.subr.bf16.mxu0 %v263
        %443 = vmatpush1.bf16.msra.mxu0 %v262
        %444 = vmatprep.subr.bf16.mxu0 %v265
        %445 = vmatpush1.bf16.msra.mxu0 %v264
        %446 = vmatprep.subr.bf16.mxu0 %v267
        %447 = vmatpush1.bf16.msra.mxu0 %v266
        %448 = vmatprep.subr.bf16.mxu0 %v269
        %449 = vmatpush1.bf16.msra.mxu0 %v268
        %450 = vmatprep.subr.bf16.mxu0 %v271
        %451 = vmatpush1.bf16.msra.mxu0 %v270
        %452 = vmatprep.subr.bf16.mxu0 %v273
        %453 = vmatpush1.bf16.msra.mxu0 %v272
        %454 = vmatprep.subr.bf16.mxu0 0
        %455 = vmatpush1.bf16.msra.mxu0 0
        %456 = vmatprep.subr.bf16.mxu0 0
        %457 = vmatpush1.bf16.msra.mxu0 0
        %458 = vmatprep.subr.bf16.mxu0 0
        %459 = vmatpush1.bf16.msra.mxu0 0
        %460 = vmatprep.subr.bf16.mxu0 0
        %461 = vmatpush1.bf16.msra.mxu0 0
        %462 = vmatprep.subr.bf16.mxu0 0
        %463 = vmatpush1.bf16.msra.mxu0 0
        %464 = vmatprep.subr.bf16.mxu0 0
        %465 = vmatpush1.bf16.msra.mxu0 0
        %466 = vmatprep.subr.bf16.mxu0 0
        %467 = vmatpush1.bf16.msra.mxu0 0
        %468 = vmatprep.subr.bf16.mxu0 0
        %469 = vmatpush1.bf16.msra.mxu0 0
        %470 = vmatprep.subr.bf16.mxu0 0
        %471 = vmatpush1.bf16.msra.mxu0 0
        %472 = vmatprep.subr.bf16.mxu0 0
        %473 = vmatpush1.bf16.msra.mxu0 0
        %474 = vmatprep.mubr.bf16.mxu0 0
        %475 = vmatmul.mubr.bf16.gmra.mrb[0].mxu0 %v440
        %v476 = vpop.f32.mrb[0].mxu0
        %v477 = vadd.f32 0.0, %v476
        %v478 = vpop.f32.mrb[0].mxu0
        %v479 = vadd.f32 0.0, %v478
        %v480 = vpop.f32.mrb[0].mxu0
        %v481 = vadd.f32 0.0, %v480
        %v482 = vpop.f32.mrb[0].mxu0
        %v483 = vadd.f32 0.0, %v482
        %484 = vdwg.mxu0
        %485 = vmatprep.subr.bf16.mxu0 %v370
        %486 = vmatpush1.bf16.msra.mxu0 %v369
        %487 = vmatprep.subr.bf16.mxu0 %v372
        %488 = vmatpush1.bf16.msra.mxu0 %v371
        %489 = vmatprep.subr.bf16.mxu0 %v374
        %490 = vmatpush1.bf16.msra.mxu0 %v373
        %491 = vmatprep.subr.bf16.mxu0 %v376
        %492 = vmatpush1.bf16.msra.mxu0 %v375
        %493 = vmatprep.subr.bf16.mxu0 %v378
        %494 = vmatpush1.bf16.msra.mxu0 %v377
        %495 = vmatprep.subr.bf16.mxu0 %v380
        %496 = vmatpush1.bf16.msra.mxu0 %v379
        %497 = vmatprep.subr.bf16.mxu0 0
        %498 = vmatpush1.bf16.msra.mxu0 0
        %499 = vmatprep.subr.bf16.mxu0 0
        %500 = vmatpush1.bf16.msra.mxu0 0
        %501 = vmatprep.subr.bf16.mxu0 0
        %502 = vmatpush1.bf16.msra.mxu0 0
        %503 = vmatprep.subr.bf16.mxu0 0
        %504 = vmatpush1.bf16.msra.mxu0 0
        %505 = vmatprep.subr.bf16.mxu0 0
        %506 = vmatpush1.bf16.msra.mxu0 0
        %507 = vmatprep.subr.bf16.mxu0 0
        %508 = vmatpush1.bf16.msra.mxu0 0
        %509 = vmatprep.subr.bf16.mxu0 0
        %510 = vmatpush1.bf16.msra.mxu0 0
        %511 = vmatprep.subr.bf16.mxu0 0
        %512 = vmatpush1.bf16.msra.mxu0 0
        %513 = vmatprep.subr.bf16.mxu0 0
        %514 = vmatpush1.bf16.msra.mxu0 0
        %515 = vmatprep.subr.bf16.mxu0 0
        %516 = vmatpush1.bf16.msra.mxu0 0
        %517 = vmatprep.mubr.bf16.mxu0 0
        %518 = vmatmul.mubr.bf16.gmra.mrb[0].mxu0 %v288
        %v519 = vpop.f32.mrb[0].mxu0
        %v520 = vadd.f32 %v477, %v519
        %v521 = vpop.f32.mrb[0].mxu0
        %v522 = vadd.f32 %v479, %v521
        %v523 = vpop.f32.mrb[0].mxu0
        %v524 = vadd.f32 %v481, %v523
        %v525 = vpop.f32.mrb[0].mxu0
        %v526 = vadd.f32 %v483, %v525
        %527 = vdwg.mxu0
        %s528 = scalar_lea.vmem [#allocation2], 192
        %v529 = vld [vmem:[%s528] sm:$0xff]
        %v530 = vld [vmem:[%s528 + $0x8] sm:$0xff]
        %v531 = vld [vmem:[%s528 + $0x10] sm:$0xff]
        %v532 = vld [vmem:[%s528 + $0x18] sm:$0xff]
        %v533 = vld [vmem:[%s528 + $0x20] sm:$0xff]
        %v534 = vld [vmem:[%s528 + $0x28] sm:$0xff]
        %v535 = vld [vmem:[%s528 + $0x30] sm:$0xff]
        %v536 = vld [vmem:[%s528 + $0x38] sm:$0xff]
        %v537 = vld [vmem:[%s528 + $0x40] sm:$0xff]
        %v538 = vld [vmem:[%s528 + $0x48] sm:$0xff]
        %v539 = vld [vmem:[%s528 + $0x50] sm:$0xff]
        %v540 = vld [vmem:[%s528 + $0x58] sm:$0xff]
        %s541 = scalar_lea.vmem %s180, 3
        %v542 = vld [vmem:[%s541] ss:$2 sm:$0xff]
        %s543 = scalar_lea.vmem %s180, 19
        %v544 = vld [vmem:[%s543] ss:$2 sm:$0x3f]
        %v545 = vpack.c.bf16 %v544, %v542
        %v558 = vunpack.c.l.b16 %v529
        %v559 = vunpack.c.h.b16 %v529
        %v560 = vunpack.c.l.b16 %v530
        %v561 = vunpack.c.h.b16 %v530
        %v562 = vunpack.c.l.b16 %v531
        %v563 = vunpack.c.h.b16 %v531
        %v564 = vunpack.c.l.b16 %v532
        %v565 = vunpack.c.h.b16 %v532
        %v566 = vunpack.c.l.b16 %v533
        %v567 = vunpack.c.h.b16 %v533
        %v568 = vunpack.c.l.b16 %v534
        %v569 = vunpack.c.h.b16 %v534
        %v570 = vunpack.c.l.b16 %v535
        %v571 = vunpack.c.h.b16 %v535
        %v572 = vunpack.c.l.b16 %v536
        %v573 = vunpack.c.h.b16 %v536
        %v574 = vunpack.c.l.b16 %v537
        %v575 = vunpack.c.h.b16 %v537
        %v576 = vunpack.c.l.b16 %v538
        %v577 = vunpack.c.h.b16 %v538
        %v578 = vunpack.c.l.b16 %v539
        %v579 = vunpack.c.h.b16 %v539
        %v580 = vunpack.c.l.b16 %v540
        %v581 = vunpack.c.h.b16 %v540
        %v582 = vpack.c.b16 %v560, %v558
        %v583 = vpack.c.b16 %v561, %v559
        %v584 = vpack.c.b16 %v564, %v562
        %v585 = vpack.c.b16 %v565, %v563
        %v586 = vpack.c.b16 %v568, %v566
        %v587 = vpack.c.b16 %v569, %v567
        %v588 = vpack.c.b16 %v572, %v570
        %v589 = vpack.c.b16 %v573, %v571
        %v590 = vpack.c.b16 %v576, %v574
        %v591 = vpack.c.b16 %v577, %v575
        %v592 = vpack.c.b16 %v580, %v578
        %v593 = vpack.c.b16 %v581, %v579
        %606 = vmatprep.subr.bf16.mxu0 %v583
        %607 = vmatpush1.bf16.msra.mxu0 %v582
        %608 = vmatprep.subr.bf16.mxu0 %v585
        %609 = vmatpush1.bf16.msra.mxu0 %v584
        %610 = vmatprep.subr.bf16.mxu0 %v587
        %611 = vmatpush1.bf16.msra.mxu0 %v586
        %612 = vmatprep.subr.bf16.mxu0 %v589
        %613 = vmatpush1.bf16.msra.mxu0 %v588
        %614 = vmatprep.subr.bf16.mxu0 %v591
        %615 = vmatpush1.bf16.msra.mxu0 %v590
        %616 = vmatprep.subr.bf16.mxu0 %v593
        %617 = vmatpush1.bf16.msra.mxu0 %v592
        %618 = vmatprep.subr.bf16.mxu0 0
        %619 = vmatpush1.bf16.msra.mxu0 0
        %620 = vmatprep.subr.bf16.mxu0 0
        %621 = vmatpush1.bf16.msra.mxu0 0
        %622 = vmatprep.subr.bf16.mxu0 0
        %623 = vmatpush1.bf16.msra.mxu0 0
        %624 = vmatprep.subr.bf16.mxu0 0
        %625 = vmatpush1.bf16.msra.mxu0 0
        %626 = vmatprep.subr.bf16.mxu0 0
        %627 = vmatpush1.bf16.msra.mxu0 0
        %628 = vmatprep.subr.bf16.mxu0 0
        %629 = vmatpush1.bf16.msra.mxu0 0
        %630 = vmatprep.subr.bf16.mxu0 0
        %631 = vmatpush1.bf16.msra.mxu0 0
        %632 = vmatprep.subr.bf16.mxu0 0
        %633 = vmatpush1.bf16.msra.mxu0 0
        %634 = vmatprep.subr.bf16.mxu0 0
        %635 = vmatpush1.bf16.msra.mxu0 0
        %636 = vmatprep.subr.bf16.mxu0 0
        %637 = vmatpush1.bf16.msra.mxu0 0
        %638 = vmatprep.mubr.bf16.mxu0 0
        %639 = vmatmul.mubr.bf16.gmra.mrb[0].mxu0 %v440
        %v640 = vpop.f32.mrb[0].mxu0
        %v641 = vadd.f32 0.0, %v640
        %v642 = vpop.f32.mrb[0].mxu0
        %v643 = vadd.f32 0.0, %v642
        %v644 = vpop.f32.mrb[0].mxu0
        %v645 = vadd.f32 0.0, %v644
        %v646 = vpop.f32.mrb[0].mxu0
        %v647 = vadd.f32 0.0, %v646
        %648 = vdwg.mxu0
        %v649 = vadd.f32 %v431, %v641
        %v650 = vadd.f32 %v433, %v643
        %v651 = vadd.f32 %v435, %v645
        %v652 = vadd.f32 %v437, %v647
        %v654 = vsel %vm286, %v545, 0
        %656 = vmatprep.subr.bf16.mxu0 %v583
        %657 = vmatpush1.bf16.msra.mxu0 %v582
        %658 = vmatprep.subr.bf16.mxu0 %v585
        %659 = vmatpush1.bf16.msra.mxu0 %v584
        %660 = vmatprep.subr.bf16.mxu0 %v587
        %661 = vmatpush1.bf16.msra.mxu0 %v586
        %662 = vmatprep.subr.bf16.mxu0 %v589
        %663 = vmatpush1.bf16.msra.mxu0 %v588
        %664 = vmatprep.subr.bf16.mxu0 %v591
        %665 = vmatpush1.bf16.msra.mxu0 %v590
        %666 = vmatprep.subr.bf16.mxu0 %v593
        %667 = vmatpush1.bf16.msra.mxu0 %v592
        %668 = vmatprep.subr.bf16.mxu0 0
        %669 = vmatpush1.bf16.msra.mxu0 0
        %670 = vmatprep.subr.bf16.mxu0 0
        %671 = vmatpush1.bf16.msra.mxu0 0
        %672 = vmatprep.subr.bf16.mxu0 0
        %673 = vmatpush1.bf16.msra.mxu0 0
        %674 = vmatprep.subr.bf16.mxu0 0
        %675 = vmatpush1.bf16.msra.mxu0 0
        %676 = vmatprep.subr.bf16.mxu0 0
        %677 = vmatpush1.bf16.msra.mxu0 0
        %678 = vmatprep.subr.bf16.mxu0 0
        %679 = vmatpush1.bf16.msra.mxu0 0
        %680 = vmatprep.subr.bf16.mxu0 0
        %681 = vmatpush1.bf16.msra.mxu0 0
        %682 = vmatprep.subr.bf16.mxu0 0
        %683 = vmatpush1.bf16.msra.mxu0 0
        %684 = vmatprep.subr.bf16.mxu0 0
        %685 = vmatpush1.bf16.msra.mxu0 0
        %686 = vmatprep.subr.bf16.mxu0 0
        %687 = vmatpush1.bf16.msra.mxu0 0
        %688 = vmatprep.mubr.bf16.mxu0 0
        %689 = vmatmul.mubr.bf16.gmra.mrb[0].mxu0 %v654
        %v690 = vpop.f32.mrb[0].mxu0
        %v691 = vadd.f32 0.0, %v690
        %v692 = vpop.f32.mrb[0].mxu0
        %v693 = vadd.f32 0.0, %v692
        %v694 = vpop.f32.mrb[0].mxu0
        %v695 = vadd.f32 0.0, %v694
        %v696 = vpop.f32.mrb[0].mxu0
        %v697 = vadd.f32 0.0, %v696
        %698 = vdwg.mxu0
        %v699 = vadd.f32 %v520, %v691
        %v700 = vadd.f32 %v522, %v693
        %v701 = vadd.f32 %v524, %v695
        %v702 = vadd.f32 %v526, %v697
        %s703 = scalar_lea.vmem [#allocation2], 288
        %v704 = vld [vmem:[%s703] sm:$0xff]
        %v705 = vld [vmem:[%s703 + $0x8] sm:$0xff]
        %v706 = vld [vmem:[%s703 + $0x10] sm:$0xff]
        %v707 = vld [vmem:[%s703 + $0x18] sm:$0xff]
        %v708 = vld [vmem:[%s703 + $0x20] sm:$0xff]
        %v709 = vld [vmem:[%s703 + $0x28] sm:$0xff]
        %v710 = vld [vmem:[%s703 + $0x30] sm:$0xff]
        %v711 = vld [vmem:[%s703 + $0x38] sm:$0xff]
        %v712 = vld [vmem:[%s703 + $0x40] sm:$0xff]
        %v713 = vld [vmem:[%s703 + $0x48] sm:$0xff]
        %v714 = vld [vmem:[%s703 + $0x50] sm:$0xff]
        %v715 = vld [vmem:[%s703 + $0x58] sm:$0xff]
        %s716 = scalar_lea.vmem %s180, 4
        %v717 = vld [vmem:[%s716] ss:$2 sm:$0xff]
        %s718 = scalar_lea.vmem %s180, 20
        %v719 = vld [vmem:[%s718] ss:$2 sm:$0x3f]
        %v720 = vpack.c.bf16 %v719, %v717
        %v733 = vunpack.c.l.b16 %v704
        %v734 = vunpack.c.h.b16 %v704
        %v735 = vunpack.c.l.b16 %v705
        %v736 = vunpack.c.h.b16 %v705
        %v737 = vunpack.c.l.b16 %v706
        %v738 = vunpack.c.h.b16 %v706
        %v739 = vunpack.c.l.b16 %v707
        %v740 = vunpack.c.h.b16 %v707
        %v741 = vunpack.c.l.b16 %v708
        %v742 = vunpack.c.h.b16 %v708
        %v743 = vunpack.c.l.b16 %v709
        %v744 = vunpack.c.h.b16 %v709
        %v745 = vunpack.c.l.b16 %v710
        %v746 = vunpack.c.h.b16 %v710
        %v747 = vunpack.c.l.b16 %v711
        %v748 = vunpack.c.h.b16 %v711
        %v749 = vunpack.c.l.b16 %v712
        %v750 = vunpack.c.h.b16 %v712
        %v751 = vunpack.c.l.b16 %v713
        %v752 = vunpack.c.h.b16 %v713
        %v753 = vunpack.c.l.b16 %v714
        %v754 = vunpack.c.h.b16 %v714
        %v755 = vunpack.c.l.b16 %v715
        %v756 = vunpack.c.h.b16 %v715
        %v757 = vpack.c.b16 %v735, %v733
        %v758 = vpack.c.b16 %v736, %v734
        %v759 = vpack.c.b16 %v739, %v737
        %v760 = vpack.c.b16 %v740, %v738
        %v761 = vpack.c.b16 %v743, %v741
        %v762 = vpack.c.b16 %v744, %v742
        %v763 = vpack.c.b16 %v747, %v745
        %v764 = vpack.c.b16 %v748, %v746
        %v765 = vpack.c.b16 %v751, %v749
        %v766 = vpack.c.b16 %v752, %v750
        %v767 = vpack.c.b16 %v755, %v753
        %v768 = vpack.c.b16 %v756, %v754
        %781 = vmatprep.subr.bf16.mxu0 %v758
        %782 = vmatpush1.bf16.msra.mxu0 %v757
        %783 = vmatprep.subr.bf16.mxu0 %v760
        %784 = vmatpush1.bf16.msra.mxu0 %v759
        %785 = vmatprep.subr.bf16.mxu0 %v762
        %786 = vmatpush1.bf16.msra.mxu0 %v761
        %787 = vmatprep.subr.bf16.mxu0 %v764
        %788 = vmatpush1.bf16.msra.mxu0 %v763
        %789 = vmatprep.subr.bf16.mxu0 %v766
        %790 = vmatpush1.bf16.msra.mxu0 %v765
        %791 = vmatprep.subr.bf16.mxu0 %v768
        %792 = vmatpush1.bf16.msra.mxu0 %v767
        %793 = vmatprep.subr.bf16.mxu0 0
        %794 = vmatpush1.bf16.msra.mxu0 0
        %795 = vmatprep.subr.bf16.mxu0 0
        %796 = vmatpush1.bf16.msra.mxu0 0
        %797 = vmatprep.subr.bf16.mxu0 0
        %798 = vmatpush1.bf16.msra.mxu0 0
        %799 = vmatprep.subr.bf16.mxu0 0
        %800 = vmatpush1.bf16.msra.mxu0 0
        %801 = vmatprep.subr.bf16.mxu0 0
        %802 = vmatpush1.bf16.msra.mxu0 0
        %803 = vmatprep.subr.bf16.mxu0 0
        %804 = vmatpush1.bf16.msra.mxu0 0
        %805 = vmatprep.subr.bf16.mxu0 0
        %806 = vmatpush1.bf16.msra.mxu0 0
        %807 = vmatprep.subr.bf16.mxu0 0
        %808 = vmatpush1.bf16.msra.mxu0 0
        %809 = vmatprep.subr.bf16.mxu0 0
        %810 = vmatpush1.bf16.msra.mxu0 0
        %811 = vmatprep.subr.bf16.mxu0 0
        %812 = vmatpush1.bf16.msra.mxu0 0
        %813 = vmatprep.mubr.bf16.mxu0 0
        %814 = vmatmul.mubr.bf16.gmra.mrb[0].mxu0 %v654
        %v815 = vpop.f32.mrb[0].mxu0
        %v816 = vadd.f32 0.0, %v815
        %v817 = vpop.f32.mrb[0].mxu0
        %v818 = vadd.f32 0.0, %v817
        %v819 = vpop.f32.mrb[0].mxu0
        %v820 = vadd.f32 0.0, %v819
        %v821 = vpop.f32.mrb[0].mxu0
        %v822 = vadd.f32 0.0, %v821
        %823 = vdwg.mxu0
        %v824 = vadd.f32 %v649, %v816
        %v825 = vadd.f32 %v650, %v818
        %v826 = vadd.f32 %v651, %v820
        %v827 = vadd.f32 %v652, %v822
        %v829 = vsel %vm286, %v720, 0
        %831 = vmatprep.subr.bf16.mxu0 %v758
        %832 = vmatpush1.bf16.msra.mxu0 %v757
        %833 = vmatprep.subr.bf16.mxu0 %v760
        %834 = vmatpush1.bf16.msra.mxu0 %v759
        %835 = vmatprep.subr.bf16.mxu0 %v762
        %836 = vmatpush1.bf16.msra.mxu0 %v761
        %837 = vmatprep.subr.bf16.mxu0 %v764
        %838 = vmatpush1.bf16.msra.mxu0 %v763
        %839 = vmatprep.subr.bf16.mxu0 %v766
        %840 = vmatpush1.bf16.msra.mxu0 %v765
        %841 = vmatprep.subr.bf16.mxu0 %v768
        %842 = vmatpush1.bf16.msra.mxu0 %v767
        %843 = vmatprep.subr.bf16.mxu0 0
        %844 = vmatpush1.bf16.msra.mxu0 0
        %845 = vmatprep.subr.bf16.mxu0 0
        %846 = vmatpush1.bf16.msra.mxu0 0
        %847 = vmatprep.subr.bf16.mxu0 0
        %848 = vmatpush1.bf16.msra.mxu0 0
        %849 = vmatprep.subr.bf16.mxu0 0
        %850 = vmatpush1.bf16.msra.mxu0 0
        %851 = vmatprep.subr.bf16.mxu0 0
        %852 = vmatpush1.bf16.msra.mxu0 0
        %853 = vmatprep.subr.bf16.mxu0 0
        %854 = vmatpush1.bf16.msra.mxu0 0
        %855 = vmatprep.subr.bf16.mxu0 0
        %856 = vmatpush1.bf16.msra.mxu0 0
        %857 = vmatprep.subr.bf16.mxu0 0
        %858 = vmatpush1.bf16.msra.mxu0 0
        %859 = vmatprep.subr.bf16.mxu0 0
        %860 = vmatpush1.bf16.msra.mxu0 0
        %861 = vmatprep.subr.bf16.mxu0 0
        %862 = vmatpush1.bf16.msra.mxu0 0
        %863 = vmatprep.mubr.bf16.mxu0 0
        %864 = vmatmul.mubr.bf16.gmra.mrb[0].mxu0 %v829
        %v865 = vpop.f32.mrb[0].mxu0
        %v866 = vadd.f32 0.0, %v865
        %v867 = vpop.f32.mrb[0].mxu0
        %v868 = vadd.f32 0.0, %v867
        %v869 = vpop.f32.mrb[0].mxu0
        %v870 = vadd.f32 0.0, %v869
        %v871 = vpop.f32.mrb[0].mxu0
        %v872 = vadd.f32 0.0, %v871
        %873 = vdwg.mxu0
        %v874 = vadd.f32 %v699, %v866
        %v875 = vadd.f32 %v700, %v868
        %v876 = vadd.f32 %v701, %v870
        %v877 = vadd.f32 %v702, %v872
        %s878 = scalar_lea.vmem [#allocation2], 384
        %v879 = vld [vmem:[%s878] sm:$0xff]
        %v880 = vld [vmem:[%s878 + $0x8] sm:$0xff]
        %v881 = vld [vmem:[%s878 + $0x10] sm:$0xff]
        %v882 = vld [vmem:[%s878 + $0x18] sm:$0xff]
        %v883 = vld [vmem:[%s878 + $0x20] sm:$0xff]
        %v884 = vld [vmem:[%s878 + $0x28] sm:$0xff]
        %v885 = vld [vmem:[%s878 + $0x30] sm:$0xff]
        %v886 = vld [vmem:[%s878 + $0x38] sm:$0xff]
        %v887 = vld [vmem:[%s878 + $0x40] sm:$0xff]
        %v888 = vld [vmem:[%s878 + $0x48] sm:$0xff]
        %v889 = vld [vmem:[%s878 + $0x50] sm:$0xff]
        %v890 = vld [vmem:[%s878 + $0x58] sm:$0xff]
        %s891 = scalar_lea.vmem %s180, 5
        %v892 = vld [vmem:[%s891] ss:$2 sm:$0xff]
        %s893 = scalar_lea.vmem %s180, 21
        %v894 = vld [vmem:[%s893] ss:$2 sm:$0x3f]
        %v895 = vpack.c.bf16 %v894, %v892
        %v908 = vunpack.c.l.b16 %v879
        %v909 = vunpack.c.h.b16 %v879
        %v910 = vunpack.c.l.b16 %v880
        %v911 = vunpack.c.h.b16 %v880
        %v912 = vunpack.c.l.b16 %v881
        %v913 = vunpack.c.h.b16 %v881
        %v914 = vunpack.c.l.b16 %v882
        %v915 = vunpack.c.h.b16 %v882
        %v916 = vunpack.c.l.b16 %v883
        %v917 = vunpack.c.h.b16 %v883
        %v918 = vunpack.c.l.b16 %v884
        %v919 = vunpack.c.h.b16 %v884
        %v920 = vunpack.c.l.b16 %v885
        %v921 = vunpack.c.h.b16 %v885
        %v922 = vunpack.c.l.b16 %v886
        %v923 = vunpack.c.h.b16 %v886
        %v924 = vunpack.c.l.b16 %v887
        %v925 = vunpack.c.h.b16 %v887
        %v926 = vunpack.c.l.b16 %v888
        %v927 = vunpack.c.h.b16 %v888
        %v928 = vunpack.c.l.b16 %v889
        %v929 = vunpack.c.h.b16 %v889
        %v930 = vunpack.c.l.b16 %v890
        %v931 = vunpack.c.h.b16 %v890
        %v932 = vpack.c.b16 %v910, %v908
        %v933 = vpack.c.b16 %v911, %v909
        %v934 = vpack.c.b16 %v914, %v912
        %v935 = vpack.c.b16 %v915, %v913
        %v936 = vpack.c.b16 %v918, %v916
        %v937 = vpack.c.b16 %v919, %v917
        %v938 = vpack.c.b16 %v922, %v920
        %v939 = vpack.c.b16 %v923, %v921
        %v940 = vpack.c.b16 %v926, %v924
        %v941 = vpack.c.b16 %v927, %v925
        %v942 = vpack.c.b16 %v930, %v928
        %v943 = vpack.c.b16 %v931, %v929
        %956 = vmatprep.subr.bf16.mxu0 %v933
        %957 = vmatpush1.bf16.msra.mxu0 %v932
        %958 = vmatprep.subr.bf16.mxu0 %v935
        %959 = vmatpush1.bf16.msra.mxu0 %v934
        %960 = vmatprep.subr.bf16.mxu0 %v937
        %961 = vmatpush1.bf16.msra.mxu0 %v936
        %962 = vmatprep.subr.bf16.mxu0 %v939
        %963 = vmatpush1.bf16.msra.mxu0 %v938
        %964 = vmatprep.subr.bf16.mxu0 %v941
        %965 = vmatpush1.bf16.msra.mxu0 %v940
        %966 = vmatprep.subr.bf16.mxu0 %v943
        %967 = vmatpush1.bf16.msra.mxu0 %v942
        %968 = vmatprep.subr.bf16.mxu0 0
        %969 = vmatpush1.bf16.msra.mxu0 0
        %970 = vmatprep.subr.bf16.mxu0 0
        %971 = vmatpush1.bf16.msra.mxu0 0
        %972 = vmatprep.subr.bf16.mxu0 0
        %973 = vmatpush1.bf16.msra.mxu0 0
        %974 = vmatprep.subr.bf16.mxu0 0
        %975 = vmatpush1.bf16.msra.mxu0 0
        %976 = vmatprep.subr.bf16.mxu0 0
        %977 = vmatpush1.bf16.msra.mxu0 0
        %978 = vmatprep.subr.bf16.mxu0 0
        %979 = vmatpush1.bf16.msra.mxu0 0
        %980 = vmatprep.subr.bf16.mxu0 0
        %981 = vmatpush1.bf16.msra.mxu0 0
        %982 = vmatprep.subr.bf16.mxu0 0
        %983 = vmatpush1.bf16.msra.mxu0 0
        %984 = vmatprep.subr.bf16.mxu0 0
        %985 = vmatpush1.bf16.msra.mxu0 0
        %986 = vmatprep.subr.bf16.mxu0 0
        %987 = vmatpush1.bf16.msra.mxu0 0
        %988 = vmatprep.mubr.bf16.mxu0 0
        %989 = vmatmul.mubr.bf16.gmra.mrb[0].mxu0 %v829
        %v990 = vpop.f32.mrb[0].mxu0
        %v991 = vadd.f32 0.0, %v990
        %v992 = vpop.f32.mrb[0].mxu0
        %v993 = vadd.f32 0.0, %v992
        %v994 = vpop.f32.mrb[0].mxu0
        %v995 = vadd.f32 0.0, %v994
        %v996 = vpop.f32.mrb[0].mxu0
        %v997 = vadd.f32 0.0, %v996
        %998 = vdwg.mxu0
        %v999 = vadd.f32 %v824, %v991
        %v1000 = vadd.f32 %v825, %v993
        %v1001 = vadd.f32 %v826, %v995
        %v1002 = vadd.f32 %v827, %v997
        %v1004 = vsel %vm286, %v895, 0
        %1006 = vmatprep.subr.bf16.mxu0 %v933
        %1007 = vmatpush1.bf16.msra.mxu0 %v932
        %1008 = vmatprep.subr.bf16.mxu0 %v935
        %1009 = vmatpush1.bf16.msra.mxu0 %v934
        %1010 = vmatprep.subr.bf16.mxu0 %v937
        %1011 = vmatpush1.bf16.msra.mxu0 %v936
        %1012 = vmatprep.subr.bf16.mxu0 %v939
        %1013 = vmatpush1.bf16.msra.mxu0 %v938
        %1014 = vmatprep.subr.bf16.mxu0 %v941
        %1015 = vmatpush1.bf16.msra.mxu0 %v940
        %1016 = vmatprep.subr.bf16.mxu0 %v943
        %1017 = vmatpush1.bf16.msra.mxu0 %v942
        %1018 = vmatprep.subr.bf16.mxu0 0
        %1019 = vmatpush1.bf16.msra.mxu0 0
        %1020 = vmatprep.subr.bf16.mxu0 0
        %1021 = vmatpush1.bf16.msra.mxu0 0
        %1022 = vmatprep.subr.bf16.mxu0 0
        %1023 = vmatpush1.bf16.msra.mxu0 0
        %1024 = vmatprep.subr.bf16.mxu0 0
        %1025 = vmatpush1.bf16.msra.mxu0 0
        %1026 = vmatprep.subr.bf16.mxu0 0
        %1027 = vmatpush1.bf16.msra.mxu0 0
        %1028 = vmatprep.subr.bf16.mxu0 0
        %1029 = vmatpush1.bf16.msra.mxu0 0
        %1030 = vmatprep.subr.bf16.mxu0 0
        %1031 = vmatpush1.bf16.msra.mxu0 0
        %1032 = vmatprep.subr.bf16.mxu0 0
        %1033 = vmatpush1.bf16.msra.mxu0 0
        %1034 = vmatprep.subr.bf16.mxu0 0
        %1035 = vmatpush1.bf16.msra.mxu0 0
        %1036 = vmatprep.subr.bf16.mxu0 0
        %1037 = vmatpush1.bf16.msra.mxu0 0
        %1038 = vmatprep.mubr.bf16.mxu0 0
        %1039 = vmatmul.mubr.bf16.gmra.mrb[0].mxu0 %v1004
        %v1040 = vpop.f32.mrb[0].mxu0
        %v1041 = vadd.f32 0.0, %v1040
        %v1042 = vpop.f32.mrb[0].mxu0
        %v1043 = vadd.f32 0.0, %v1042
        %v1044 = vpop.f32.mrb[0].mxu0
        %v1045 = vadd.f32 0.0, %v1044
        %v1046 = vpop.f32.mrb[0].mxu0
        %v1047 = vadd.f32 0.0, %v1046
        %1048 = vdwg.mxu0
        %v1049 = vadd.f32 %v874, %v1041
        %v1050 = vadd.f32 %v875, %v1043
        %v1051 = vadd.f32 %v876, %v1045
        %v1052 = vadd.f32 %v877, %v1047
        %v1053 = vmax.f32 %v999, %v1049
        %v1054 = vmax.f32 %v1000, %v1050
        %v1055 = vmax.f32 %v1001, %v1051
        %v1056 = vmax.f32 %v1002, %v1052
        %v1057 = vld [vmem:[%s2] sm:$0x3]
        %v1059 = vlaneseq
        %v1060 = vshrl.u32 %v1059, 7
        %v1061 = vsub.s32 0, %v1060
        %v1062 = vrot.slane %v1057, %v1061
        %v1063 = vlaneseq
        %v1064 = vshrl.u32 %v1063, 7
        %v1065 = vsub.s32 1, %v1064
        %v1066 = vrot.slane %v1057, %v1065
        %v1069 = vadd.f32 %v1053, %v1062
        %v1070 = vadd.f32 %v1054, %v1066
        %v1071 = vadd.f32 %v1055, %v1062
        %v1072 = vadd.f32 %v1056, %v1066
        %v1073 = vmax.f32 %v1069, 0.0
        %v1074 = vmax.f32 %v1070, 0.0
        %v1075 = vmax.f32 %v1071, 0.0
        %v1076 = vmax.f32 %v1072, 0.0
        %v1077 = vmax.f32 %v1073, %v1074
        %v1078 = vmax.f32 %v1075, %v1076
        %1079 = vst [vmem:[%s185] sm:$0xff] %v1077
        %1080 = vst [vmem:[%s185 + $0x8] sm:$0x3f] %v1078
        %p1081 = scmp.lt.s32.totalorder %s15, 1
        %s1082 = scalar_select %p1081, %s15, 1
        %s1083 = smul.addr %s1082, 2
        %s1084 = smul.addr %s1083, 8
        %s1085 = scalar_lea.vmem %s3, %s1084
        // Predicated region
        $region37: #{dropnet_forward.3} parent=31 // pred_check
          %p1086 = pneg %p101
        $region38: #{dropnet_forward.3} parent=31 // pred_check_branch
          %1088 = sbr.rel (%p1086) target = $region40
        $region39: #{dropnet_forward.3} parent=31 // pred_region
          _
        $region40: #{dropnet_forward.3} parent=31 // pred_fallthru
          _
      $region32: #{dropnet_forward.3} parent=5 // pred_fallthru
        _
      %p1089 = scmp.le.s32.totalorder 2, %s10
      // Predicated region
      $region41: #{dropnet_forward.3} parent=5 // pred_check
        %p1090 = pneg %p1089
      $region42: #{dropnet_forward.3} parent=5 // pred_check_branch
        %1092 = sbr.rel (%p1090) target = $region44
      $region43: #{dropnet_forward.3} parent=5 // pred_region
        %s1093 = ssub.s32 %s10, 2
        // Predicated region
        $region45: #{dropnet_forward.3} parent=43 // pred_check
          %p1094 = pneg %p107
        $region46: #{dropnet_forward.3} parent=43 // pred_check_branch
          %1096 = sbr.rel (%p1094) target = $region48
        $region47: #{dropnet_forward.3} parent=43 // pred_region
          %p1097 = scmp.lt.s32.totalorder %s16, 1
          %s1098 = scalar_select %p1097, %s16, 1
          %s1099 = smul.addr %s1098, 2
          %s1100 = smul.addr %s1099, 8
          %s1101 = scalar_lea.vmem %s3, %s1100
        $region48: #{dropnet_forward.3} parent=43 // pred_fallthru
          _
      $region44: #{dropnet_forward.3} parent=5 // pred_fallthru
        _
    $region6: #{dropnet_forward.3} parent=1 // loop_footer
      %s14 = sadd.s32 1, %s10
    $region7: #{dropnet_forward.3} parent=1 // loop_footer_branch
      %9 = sbr.rel target = $region3
    $region8: #{dropnet_forward.3} parent=1 // loop_exit
      _
    %1102 = vsyncpa [#allocation3], 1
    %s1103 = scalar_lea.sflag [#allocation3], 1
    %1104 = vsyncpa %s1103, 1

// kernel: dropnet_forward.5
$region0: #{dropnet_forward.5}
  #allocation0 [shape = 'u32[]', space=smem, size = 0x4, offset = 0x4, fixed_abs, tag = 'smem constant byte address 0x4 - core index']
  #allocation1 [shape = 'u32[144,128]{1,0:T(1,128)}', space=vmem, size = 0x12000, scoped, tag = 'internal scratch']
  %s0 = inlined_call_operand.vmem [shape: f32[2,640], index: 0, kind: input, shape index: {}]
  %s1 = inlined_call_operand.vmem [shape: bf16[640,128], index: 1, kind: input, shape index: {}]
  %s2 = inlined_call_operand.vmem [shape: f32[1,128], index: 2, kind: input, shape index: {}]
  %s3 = inlined_call_operand.vmem [shape: bf16[128,128], index: 3, kind: input, shape index: {}]
  %s4 = inlined_call_operand.vmem [shape: f32[1,128], index: 4, kind: input, shape index: {}]
  %s5 = inlined_call_operand.vmem [shape: bf16[128,128], index: 5, kind: input, shape index: {}]
  %s6 = inlined_call_operand.vmem [shape: f32[1,128], index: 6, kind: input, shape index: {}]
  %s7 = inlined_call_operand.hbm [shape: f32[2,128], index: 7, kind: output, shape index: {}]
  %s8 = sld [smem:[#allocation0]]
  $region38: #{dropnet_forward.5} parent=0
    _
  %s10 = ssub.s32 1, %s8
  %s11 = scalar_select 0, %s10, %s8
  $region1: #{dropnet_forward.5} parent=0
    #allocation2 [shape = 'u8[1024]{0}', space=vmem, size = 0x400, scoped, tag = 'output window, operand 0, single buffered']
    #allocation3 [shape = 's32[1]{0}', space=sflag, size = 0x4, scoped, tag = 'scoped memory for dropnet_forward.5']
    %12 = vsyncpa [#allocation3], 0
    // Predicated region
    $region2: #{dropnet_forward.5} parent=1 // pred_check
      _
    $region3: #{dropnet_forward.5} parent=1 // pred_check_branch
      %14 = sbr.rel (0) target = $region5
    $region4: #{dropnet_forward.5} parent=1 // pred_region
      _
    $region5: #{dropnet_forward.5} parent=1 // pred_fallthru
      _
    // Predicated region
    $region6: #{dropnet_forward.5} parent=1 // pred_check
      _
    $region7: #{dropnet_forward.5} parent=1 // pred_check_branch
      %16 = sbr.rel (0) target = $region9
    $region8: #{dropnet_forward.5} parent=1 // pred_region
      _
    $region9: #{dropnet_forward.5} parent=1 // pred_fallthru
      _
    // Predicated region
    $region10: #{dropnet_forward.5} parent=1 // pred_check
      _
    $region11: #{dropnet_forward.5} parent=1 // pred_check_branch
      %18 = sbr.rel (0) target = $region13
    $region12: #{dropnet_forward.5} parent=1 // pred_region
      _
    $region13: #{dropnet_forward.5} parent=1 // pred_fallthru
      _
    // Predicated region
    $region14: #{dropnet_forward.5} parent=1 // pred_check
      _
    $region15: #{dropnet_forward.5} parent=1 // pred_check_branch
      %20 = sbr.rel (0) target = $region17
    $region16: #{dropnet_forward.5} parent=1 // pred_region
      _
    $region17: #{dropnet_forward.5} parent=1 // pred_fallthru
      _
    // Predicated region
    $region18: #{dropnet_forward.5} parent=1 // pred_check
      _
    $region19: #{dropnet_forward.5} parent=1 // pred_check_branch
      %22 = sbr.rel (0) target = $region21
    $region20: #{dropnet_forward.5} parent=1 // pred_region
      _
    $region21: #{dropnet_forward.5} parent=1 // pred_fallthru
      _
    // Predicated region
    $region22: #{dropnet_forward.5} parent=1 // pred_check
      _
    $region23: #{dropnet_forward.5} parent=1 // pred_check_branch
      %24 = sbr.rel (0) target = $region25
    $region24: #{dropnet_forward.5} parent=1 // pred_region
      _
    $region25: #{dropnet_forward.5} parent=1 // pred_fallthru
      _
    // Predicated region
    $region26: #{dropnet_forward.5} parent=1 // pred_check
      _
    $region27: #{dropnet_forward.5} parent=1 // pred_check_branch
      %26 = sbr.rel (0) target = $region29
    $region28: #{dropnet_forward.5} parent=1 // pred_region
      _
    $region29: #{dropnet_forward.5} parent=1 // pred_fallthru
      _
    %v28 = vld [vmem:[%s0] sm:$0xff]
    %v29 = vld [vmem:[%s0 + $0x8] sm:$0x3]
    %v32 = vcombine.high %v28, %v28
    %v34 = vunpack.c.l.s4 1983009808
    %v35 = vunpack.c.0.s8 %v34
    %v36 = vlaneseq
    %v37 = vshrl.u32 %v36, 7
    %v38 = vsub.s32 %v35, %v37
    %v39 = vrot.slane %v28, %v38
    %v41 = vunpack.c.l.s4 1983009808
    %v42 = vunpack.c.0.s8 %v41
    %v43 = vlaneseq
    %v44 = vshrl.u32 %v43, 7
    %v45 = vsub.s32 %v42, %v44
    %v46 = vrot.slane %v32, %v45
    %v47 = vcombine.high %v39, %v39
    %v48 = vcombine.high %v46, %v46
    %v50 = vunpack.c.l.s4 1983009808
    %v51 = vunpack.c.0.s8 %v50
    %v52 = vlaneseq
    %v53 = vshrl.u32 %v52, 7
    %v54 = vsub.s32 %v51, %v53
    %v55 = vrot.slane %v29, %v54
    %v61 = vpack.c.bf16 %v39, %v39
    %v62 = vpack.c.bf16 %v47, %v47
    %v63 = vpack.c.bf16 %v46, %v46
    %v64 = vpack.c.bf16 %v48, %v48
    %v65 = vpack.c.bf16 %v55, %v55
    %v66 = vld [vmem:[%s1] sm:$0xf]
    %v67 = vld [vmem:[%s1 + $0x4] sm:$0xf]
    %v68 = vld [vmem:[%s1 + $0x8] sm:$0xf]
    %v69 = vld [vmem:[%s1 + $0xc] sm:$0xf]
    %v70 = vld [vmem:[%s1 + $0x10] sm:$0xf]
    %v71 = vld [vmem:[%s1 + $0x14] sm:$0xf]
    %v72 = vld [vmem:[%s1 + $0x18] sm:$0xf]
    %v73 = vld [vmem:[%s1 + $0x1c] sm:$0xf]
    %v74 = vld [vmem:[%s1 + $0x20] sm:$0xf]
    %v75 = vld [vmem:[%s1 + $0x24] sm:$0xf]
    %v76 = vld [vmem:[%s1 + $0x28] sm:$0xf]
    %v77 = vld [vmem:[%s1 + $0x2c] sm:$0xf]
    %v78 = vld [vmem:[%s1 + $0x30] sm:$0xf]
    %v79 = vld [vmem:[%s1 + $0x34] sm:$0xf]
    %v80 = vld [vmem:[%s1 + $0x38] sm:$0xf]
    %v81 = vld [vmem:[%s1 + $0x3c] sm:$0xf]
    %v82 = vld [vmem:[%s1 + $0x40] sm:$0xf]
    %v83 = vld [vmem:[%s1 + $0x44] sm:$0xf]
    %v84 = vld [vmem:[%s1 + $0x48] sm:$0xf]
    %v85 = vld [vmem:[%s1 + $0x4c] sm:$0xf]
    %v86 = vld [vmem:[%s1 + $0x50] sm:$0xf]
    %v87 = vld [vmem:[%s1 + $0x54] sm:$0xf]
    %v88 = vld [vmem:[%s1 + $0x58] sm:$0xf]
    %v89 = vld [vmem:[%s1 + $0x5c] sm:$0xf]
    %v90 = vld [vmem:[%s1 + $0x60] sm:$0xf]
    %v91 = vld [vmem:[%s1 + $0x64] sm:$0xf]
    %v92 = vld [vmem:[%s1 + $0x68] sm:$0xf]
    %v93 = vld [vmem:[%s1 + $0x6c] sm:$0xf]
    %v94 = vld [vmem:[%s1 + $0x70] sm:$0xf]
    %v95 = vld [vmem:[%s1 + $0x74] sm:$0xf]
    %v96 = vld [vmem:[%s1 + $0x78] sm:$0xf]
    %v97 = vld [vmem:[%s1 + $0x7c] sm:$0xf]
    %v98 = vld [vmem:[%s1 + $0x80] sm:$0xf]
    %v99 = vld [vmem:[%s1 + $0x84] sm:$0xf]
    %v100 = vld [vmem:[%s1 + $0x88] sm:$0xf]
    %v101 = vld [vmem:[%s1 + $0x8c] sm:$0xf]
    %v102 = vld [vmem:[%s1 + $0x90] sm:$0xf]
    %v103 = vld [vmem:[%s1 + $0x94] sm:$0xf]
    %v104 = vld [vmem:[%s1 + $0x98] sm:$0xf]
    %v105 = vld [vmem:[%s1 + $0x9c] sm:$0xf]
    %v106 = vld [vmem:[%s1 + $0xa0] sm:$0xf]
    %v107 = vld [vmem:[%s1 + $0xa4] sm:$0xf]
    %v108 = vld [vmem:[%s1 + $0xa8] sm:$0xf]
    %v109 = vld [vmem:[%s1 + $0xac] sm:$0xf]
    %v110 = vld [vmem:[%s1 + $0xb0] sm:$0xf]
    %v111 = vld [vmem:[%s1 + $0xb4] sm:$0xf]
    %v112 = vld [vmem:[%s1 + $0xb8] sm:$0xf]
    %v113 = vld [vmem:[%s1 + $0xbc] sm:$0xf]
    %v114 = vld [vmem:[%s1 + $0xc0] sm:$0xf]
    %v115 = vld [vmem:[%s1 + $0xc4] sm:$0xf]
    %v116 = vld [vmem:[%s1 + $0xc8] sm:$0xf]
    %v117 = vld [vmem:[%s1 + $0xcc] sm:$0xf]
    %v118 = vld [vmem:[%s1 + $0xd0] sm:$0xf]
    %v119 = vld [vmem:[%s1 + $0xd4] sm:$0xf]
    %v120 = vld [vmem:[%s1 + $0xd8] sm:$0xf]
    %v121 = vld [vmem:[%s1 + $0xdc] sm:$0xf]
    %v122 = vld [vmem:[%s1 + $0xe0] sm:$0xf]
    %v123 = vld [vmem:[%s1 + $0xe4] sm:$0xf]
    %v124 = vld [vmem:[%s1 + $0xe8] sm:$0xf]
    %v125 = vld [vmem:[%s1 + $0xec] sm:$0xf]
    %v126 = vld [vmem:[%s1 + $0xf0] sm:$0xf]
    %v127 = vld [vmem:[%s1 + $0xf4] sm:$0xf]
    %v128 = vld [vmem:[%s1 + $0xf8] sm:$0xf]
    %v129 = vld [vmem:[%s1 + $0xfc] sm:$0xf]
    %v130 = vld [vmem:[%s1 + $0x100] sm:$0xf]
    %v131 = vld [vmem:[%s1 + $0x104] sm:$0xf]
    %v132 = vld [vmem:[%s1 + $0x108] sm:$0xf]
    %v133 = vld [vmem:[%s1 + $0x10c] sm:$0xf]
    %v134 = vld [vmem:[%s1 + $0x110] sm:$0xf]
    %v135 = vld [vmem:[%s1 + $0x114] sm:$0xf]
    %v136 = vld [vmem:[%s1 + $0x118] sm:$0xf]
    %v137 = vld [vmem:[%s1 + $0x11c] sm:$0xf]
    %v138 = vld [vmem:[%s1 + $0x120] sm:$0xf]
    %v139 = vld [vmem:[%s1 + $0x124] sm:$0xf]
    %v140 = vld [vmem:[%s1 + $0x128] sm:$0xf]
    %v141 = vld [vmem:[%s1 + $0x12c] sm:$0xf]
    %v142 = vld [vmem:[%s1 + $0x130] sm:$0xf]
    %v143 = vld [vmem:[%s1 + $0x134] sm:$0xf]
    %v144 = vld [vmem:[%s1 + $0x138] sm:$0xf]
    %v145 = vld [vmem:[%s1 + $0x13c] sm:$0xf]
    %v146 = vld [vmem:[%s2] sm:$0x1]
    %v148 = vlaneseq
    %v149 = vshrl.u32 %v148, 7
    %v150 = vsub.s32 0, %v149
    %v151 = vrot.slane %v146, %v150
    %v233 = vunpack.c.l.b16 %v66
    %v234 = vunpack.c.l.b16 %v67
    %v235 = vunpack.c.l.b16 %v68
    %v236 = vunpack.c.l.b16 %v69
    %v237 = vunpack.c.l.b16 %v70
    %v238 = vunpack.c.l.b16 %v71
    %v239 = vunpack.c.l.b16 %v72
    %v240 = vunpack.c.l.b16 %v73
    %v241 = vunpack.c.l.b16 %v74
    %v242 = vunpack.c.l.b16 %v75
    %v243 = vunpack.c.l.b16 %v76
    %v244 = vunpack.c.l.b16 %v77
    %v245 = vunpack.c.l.b16 %v78
    %v246 = vunpack.c.l.b16 %v79
    %v247 = vunpack.c.l.b16 %v80
    %v248 = vunpack.c.l.b16 %v81
    %v249 = vunpack.c.l.b16 %v82
    %v250 = vunpack.c.l.b16 %v83
    %v251 = vunpack.c.l.b16 %v84
    %v252 = vunpack.c.l.b16 %v85
    %v253 = vunpack.c.l.b16 %v86
    %v254 = vunpack.c.l.b16 %v87
    %v255 = vunpack.c.l.b16 %v88
    %v256 = vunpack.c.l.b16 %v89
    %v257 = vunpack.c.l.b16 %v90
    %v258 = vunpack.c.l.b16 %v91
    %v259 = vunpack.c.l.b16 %v92
    %v260 = vunpack.c.l.b16 %v93
    %v261 = vunpack.c.l.b16 %v94
    %v262 = vunpack.c.l.b16 %v95
    %v263 = vunpack.c.l.b16 %v96
    %v264 = vunpack.c.l.b16 %v97
    %v265 = vunpack.c.l.b16 %v98
    %v266 = vunpack.c.l.b16 %v99
    %v267 = vunpack.c.l.b16 %v100
    %v268 = vunpack.c.l.b16 %v101
    %v269 = vunpack.c.l.b16 %v102
    %v270 = vunpack.c.l.b16 %v103
    %v271 = vunpack.c.l.b16 %v104
    %v272 = vunpack.c.l.b16 %v105
    %v273 = vunpack.c.l.b16 %v106
    %v274 = vunpack.c.l.b16 %v107
    %v275 = vunpack.c.l.b16 %v108
    %v276 = vunpack.c.l.b16 %v109
    %v277 = vunpack.c.l.b16 %v110
    %v278 = vunpack.c.l.b16 %v111
    %v279 = vunpack.c.l.b16 %v112
    %v280 = vunpack.c.l.b16 %v113
    %v281 = vunpack.c.l.b16 %v114
    %v282 = vunpack.c.l.b16 %v115
    %v283 = vunpack.c.l.b16 %v116
    %v284 = vunpack.c.l.b16 %v117
    %v285 = vunpack.c.l.b16 %v118
    %v286 = vunpack.c.l.b16 %v119
    %v287 = vunpack.c.l.b16 %v120
    %v288 = vunpack.c.l.b16 %v121
    %v289 = vunpack.c.l.b16 %v122
    %v290 = vunpack.c.l.b16 %v123
    %v291 = vunpack.c.l.b16 %v124
    %v292 = vunpack.c.l.b16 %v125
    %v293 = vunpack.c.l.b16 %v126
    %v294 = vunpack.c.l.b16 %v127
    %v295 = vunpack.c.l.b16 %v128
    %v296 = vunpack.c.l.b16 %v129
    %v297 = vunpack.c.l.b16 %v130
    %v298 = vunpack.c.l.b16 %v131
    %v299 = vunpack.c.l.b16 %v132
    %v300 = vunpack.c.l.b16 %v133
    %v301 = vunpack.c.l.b16 %v134
    %v302 = vunpack.c.l.b16 %v135
    %v303 = vunpack.c.l.b16 %v136
    %v304 = vunpack.c.l.b16 %v137
    %v305 = vunpack.c.l.b16 %v138
    %v306 = vunpack.c.l.b16 %v139
    %v307 = vunpack.c.l.b16 %v140
    %v308 = vunpack.c.l.b16 %v141
    %v309 = vunpack.c.l.b16 %v142
    %v310 = vunpack.c.l.b16 %v143
    %v311 = vunpack.c.l.b16 %v144
    %v312 = vunpack.c.l.b16 %v145
    %v313 = vpack.c.b16 %v234, %v233
    %v314 = vpack.c.b16 %v236, %v235
    %v315 = vpack.c.b16 %v238, %v237
    %v316 = vpack.c.b16 %v240, %v239
    %v317 = vpack.c.b16 %v242, %v241
    %v318 = vpack.c.b16 %v244, %v243
    %v319 = vpack.c.b16 %v246, %v245
    %v320 = vpack.c.b16 %v248, %v247
    %v321 = vpack.c.b16 %v250, %v249
    %v322 = vpack.c.b16 %v252, %v251
    %v323 = vpack.c.b16 %v254, %v253
    %v324 = vpack.c.b16 %v256, %v255
    %v325 = vpack.c.b16 %v258, %v257
    %v326 = vpack.c.b16 %v260, %v259
    %v327 = vpack.c.b16 %v262, %v261
    %v328 = vpack.c.b16 %v264, %v263
    %v329 = vpack.c.b16 %v266, %v265
    %v330 = vpack.c.b16 %v268, %v267
    %v331 = vpack.c.b16 %v270, %v269
    %v332 = vpack.c.b16 %v272, %v271
    %v333 = vpack.c.b16 %v274, %v273
    %v334 = vpack.c.b16 %v276, %v275
    %v335 = vpack.c.b16 %v278, %v277
    %v336 = vpack.c.b16 %v280, %v279
    %v337 = vpack.c.b16 %v282, %v281
    %v338 = vpack.c.b16 %v284, %v283
    %v339 = vpack.c.b16 %v286, %v285
    %v340 = vpack.c.b16 %v288, %v287
    %v341 = vpack.c.b16 %v290, %v289
    %v342 = vpack.c.b16 %v292, %v291
    %v343 = vpack.c.b16 %v294, %v293
    %v344 = vpack.c.b16 %v296, %v295
    %v345 = vpack.c.b16 %v298, %v297
    %v346 = vpack.c.b16 %v300, %v299
    %v347 = vpack.c.b16 %v302, %v301
    %v348 = vpack.c.b16 %v304, %v303
    %v349 = vpack.c.b16 %v306, %v305
    %v350 = vpack.c.b16 %v308, %v307
    %v351 = vpack.c.b16 %v310, %v309
    %v352 = vpack.c.b16 %v312, %v311
    %393 = vmatprep.subr.bf16.mxu0 0
    %394 = vmatpush1.bf16.msra.mxu0 %v313
    %395 = vmatprep.subr.bf16.mxu0 0
    %396 = vmatpush1.bf16.msra.mxu0 %v314
    %397 = vmatprep.subr.bf16.mxu0 0
    %398 = vmatpush1.bf16.msra.mxu0 %v315
    %399 = vmatprep.subr.bf16.mxu0 0
    %400 = vmatpush1.bf16.msra.mxu0 %v316
    %401 = vmatprep.subr.bf16.mxu0 0
    %402 = vmatpush1.bf16.msra.mxu0 %v317
    %403 = vmatprep.subr.bf16.mxu0 0
    %404 = vmatpush1.bf16.msra.mxu0 %v318
    %405 = vmatprep.subr.bf16.mxu0 0
    %406 = vmatpush1.bf16.msra.mxu0 %v319
    %407 = vmatprep.subr.bf16.mxu0 0
    %408 = vmatpush1.bf16.msra.mxu0 %v320
    %409 = vmatprep.subr.bf16.mxu0 0
    %410 = vmatpush1.bf16.msra.mxu0 %v321
    %411 = vmatprep.subr.bf16.mxu0 0
    %412 = vmatpush1.bf16.msra.mxu0 %v322
    %413 = vmatprep.subr.bf16.mxu0 0
    %414 = vmatpush1.bf16.msra.mxu0 %v323
    %415 = vmatprep.subr.bf16.mxu0 0
    %416 = vmatpush1.bf16.msra.mxu0 %v324
    %417 = vmatprep.subr.bf16.mxu0 0
    %418 = vmatpush1.bf16.msra.mxu0 %v325
    %419 = vmatprep.subr.bf16.mxu0 0
    %420 = vmatpush1.bf16.msra.mxu0 %v326
    %421 = vmatprep.subr.bf16.mxu0 0
    %422 = vmatpush1.bf16.msra.mxu0 %v327
    %423 = vmatprep.subr.bf16.mxu0 0
    %424 = vmatpush1.bf16.msra.mxu0 %v328
    %425 = vmatprep.mubr.bf16.mxu0 %v62
    %426 = vmatmul.mubr.bf16.gmra.mrb[0].mxu0 %v61
    %v427 = vpop.f32.mrb[0].mxu0
    %v428 = vadd.f32 %v151, %v427
    %v429 = vpop.f32.mrb[0].mxu0
    %v430 = vpop.f32.mrb[0].mxu0
    %v431 = vpop.f32.mrb[0].mxu0
    %432 = vdwg.mxu0
    %433 = vmatprep.subr.bf16.mxu0 0
    %434 = vmatpush1.bf16.msra.mxu0 %v329
    %435 = vmatprep.subr.bf16.mxu0 0
    %436 = vmatpush1.bf16.msra.mxu0 %v330
    %437 = vmatprep.subr.bf16.mxu0 0
    %438 = vmatpush1.bf16.msra.mxu0 %v331
    %439 = vmatprep.subr.bf16.mxu0 0
    %440 = vmatpush1.bf16.msra.mxu0 %v332
    %441 = vmatprep.subr.bf16.mxu0 0
    %442 = vmatpush1.bf16.msra.mxu0 %v333
    %443 = vmatprep.subr.bf16.mxu0 0
    %444 = vmatpush1.bf16.msra.mxu0 %v334
    %445 = vmatprep.subr.bf16.mxu0 0
    %446 = vmatpush1.bf16.msra.mxu0 %v335
    %447 = vmatprep.subr.bf16.mxu0 0
    %448 = vmatpush1.bf16.msra.mxu0 %v336
    %449 = vmatprep.subr.bf16.mxu0 0
    %450 = vmatpush1.bf16.msra.mxu0 %v337
    %451 = vmatprep.subr.bf16.mxu0 0
    %452 = vmatpush1.bf16.msra.mxu0 %v338
    %453 = vmatprep.subr.bf16.mxu0 0
    %454 = vmatpush1.bf16.msra.mxu0 %v339
    %455 = vmatprep.subr.bf16.mxu0 0
    %456 = vmatpush1.bf16.msra.mxu0 %v340
    %457 = vmatprep.subr.bf16.mxu0 0
    %458 = vmatpush1.bf16.msra.mxu0 %v341
    %459 = vmatprep.subr.bf16.mxu0 0
    %460 = vmatpush1.bf16.msra.mxu0 %v342
    %461 = vmatprep.subr.bf16.mxu0 0
    %462 = vmatpush1.bf16.msra.mxu0 %v343
    %463 = vmatprep.subr.bf16.mxu0 0
    %464 = vmatpush1.bf16.msra.mxu0 %v344
    %465 = vmatprep.mubr.bf16.mxu0 %v64
    %466 = vmatmul.mubr.bf16.gmra.mrb[0].mxu0 %v63
    %v467 = vpop.f32.mrb[0].mxu0
    %v468 = vadd.f32 %v428, %v467
    %v469 = vpop.f32.mrb[0].mxu0
    %v470 = vpop.f32.mrb[0].mxu0
    %v471 = vpop.f32.mrb[0].mxu0
    %472 = vdwg.mxu0
    %473 = vmatprep.subr.bf16.mxu0 0
    %474 = vmatpush1.bf16.msra.mxu0 %v345
    %475 = vmatprep.subr.bf16.mxu0 0
    %476 = vmatpush1.bf16.msra.mxu0 %v346
    %477 = vmatprep.subr.bf16.mxu0 0
    %478 = vmatpush1.bf16.msra.mxu0 %v347
    %479 = vmatprep.subr.bf16.mxu0 0
    %480 = vmatpush1.bf16.msra.mxu0 %v348
    %481 = vmatprep.subr.bf16.mxu0 0
    %482 = vmatpush1.bf16.msra.mxu0 %v349
    %483 = vmatprep.subr.bf16.mxu0 0
    %484 = vmatpush1.bf16.msra.mxu0 %v350
    %485 = vmatprep.subr.bf16.mxu0 0
    %486 = vmatpush1.bf16.msra.mxu0 %v351
    %487 = vmatprep.subr.bf16.mxu0 0
    %488 = vmatpush1.bf16.msra.mxu0 %v352
    %489 = vmatprep.subr.bf16.mxu0 0
    %490 = vmatpush1.bf16.msra.mxu0 0
    %491 = vmatprep.subr.bf16.mxu0 0
    %492 = vmatpush1.bf16.msra.mxu0 0
    %493 = vmatprep.subr.bf16.mxu0 0
    %494 = vmatpush1.bf16.msra.mxu0 0
    %495 = vmatprep.subr.bf16.mxu0 0
    %496 = vmatpush1.bf16.msra.mxu0 0
    %497 = vmatprep.subr.bf16.mxu0 0
    %498 = vmatpush1.bf16.msra.mxu0 0
    %499 = vmatprep.subr.bf16.mxu0 0
    %500 = vmatpush1.bf16.msra.mxu0 0
    %501 = vmatprep.subr.bf16.mxu0 0
    %502 = vmatpush1.bf16.msra.mxu0 0
    %503 = vmatprep.subr.bf16.mxu0 0
    %504 = vmatpush1.bf16.msra.mxu0 0
    %505 = vmatprep.mubr.bf16.mxu0 0
    %506 = vmatmul.mubr.bf16.gmra.mrb[0].mxu0 %v65
    %v507 = vpop.f32.mrb[0].mxu0
    %v508 = vadd.f32 %v468, %v507
    %v509 = vpop.f32.mrb[0].mxu0
    %v510 = vpop.f32.mrb[0].mxu0
    %v511 = vpop.f32.mrb[0].mxu0
    %512 = vdwg.mxu0
    %v513 = vmax.f32 %v508, 0.0
    %v514 = vpack.c.bf16 %v513, %v513
    %v515 = vld [vmem:[%s3] sm:$0xf]
    %v516 = vld [vmem:[%s3 + $0x4] sm:$0xf]
    %v517 = vld [vmem:[%s3 + $0x8] sm:$0xf]
    %v518 = vld [vmem:[%s3 + $0xc] sm:$0xf]
    %v519 = vld [vmem:[%s3 + $0x10] sm:$0xf]
    %v520 = vld [vmem:[%s3 + $0x14] sm:$0xf]
    %v521 = vld [vmem:[%s3 + $0x18] sm:$0xf]
    %v522 = vld [vmem:[%s3 + $0x1c] sm:$0xf]
    %v523 = vld [vmem:[%s3 + $0x20] sm:$0xf]
    %v524 = vld [vmem:[%s3 + $0x24] sm:$0xf]
    %v525 = vld [vmem:[%s3 + $0x28] sm:$0xf]
    %v526 = vld [vmem:[%s3 + $0x2c] sm:$0xf]
    %v527 = vld [vmem:[%s3 + $0x30] sm:$0xf]
    %v528 = vld [vmem:[%s3 + $0x34] sm:$0xf]
    %v529 = vld [vmem:[%s3 + $0x38] sm:$0xf]
    %v530 = vld [vmem:[%s3 + $0x3c] sm:$0xf]
    %v531 = vld [vmem:[%s4] sm:$0x1]
    %v533 = vlaneseq
    %v534 = vshrl.u32 %v533, 7
    %v535 = vsub.s32 0, %v534
    %v536 = vrot.slane %v531, %v535
    %v554 = vunpack.c.l.b16 %v515
    %v555 = vunpack.c.l.b16 %v516
    %v556 = vunpack.c.l.b16 %v517
    %v557 = vunpack.c.l.b16 %v518
    %v558 = vunpack.c.l.b16 %v519
    %v559 = vunpack.c.l.b16 %v520
    %v560 = vunpack.c.l.b16 %v521
    %v561 = vunpack.c.l.b16 %v522
    %v562 = vunpack.c.l.b16 %v523
    %v563 = vunpack.c.l.b16 %v524
    %v564 = vunpack.c.l.b16 %v525
    %v565 = vunpack.c.l.b16 %v526
    %v566 = vunpack.c.l.b16 %v527
    %v567 = vunpack.c.l.b16 %v528
    %v568 = vunpack.c.l.b16 %v529
    %v569 = vunpack.c.l.b16 %v530
    %v570 = vpack.c.b16 %v555, %v554
    %v571 = vpack.c.b16 %v557, %v556
    %v572 = vpack.c.b16 %v559, %v558
    %v573 = vpack.c.b16 %v561, %v560
    %v574 = vpack.c.b16 %v563, %v562
    %v575 = vpack.c.b16 %v565, %v564
    %v576 = vpack.c.b16 %v567, %v566
    %v577 = vpack.c.b16 %v569, %v568
    %586 = vmatprep.subr.bf16.mxu0 0
    %587 = vmatpush1.bf16.msra.mxu0 %v570
    %588 = vmatprep.subr.bf16.mxu0 0
    %589 = vmatpush1.bf16.msra.mxu0 %v571
    %590 = vmatprep.subr.bf16.mxu0 0
    %591 = vmatpush1.bf16.msra.mxu0 %v572
    %592 = vmatprep.subr.bf16.mxu0 0
    %593 = vmatpush1.bf16.msra.mxu0 %v573
    %594 = vmatprep.subr.bf16.mxu0 0
    %595 = vmatpush1.bf16.msra.mxu0 %v574
    %596 = vmatprep.subr.bf16.mxu0 0
    %597 = vmatpush1.bf16.msra.mxu0 %v575
    %598 = vmatprep.subr.bf16.mxu0 0
    %599 = vmatpush1.bf16.msra.mxu0 %v576
    %600 = vmatprep.subr.bf16.mxu0 0
    %601 = vmatpush1.bf16.msra.mxu0 %v577
    %602 = vmatprep.subr.bf16.mxu0 0
    %603 = vmatpush1.bf16.msra.mxu0 0
    %604 = vmatprep.subr.bf16.mxu0 0
    %605 = vmatpush1.bf16.msra.mxu0 0
    %606 = vmatprep.subr.bf16.mxu0 0
    %607 = vmatpush1.bf16.msra.mxu0 0
    %608 = vmatprep.subr.bf16.mxu0 0
    %609 = vmatpush1.bf16.msra.mxu0 0
    %610 = vmatprep.subr.bf16.mxu0 0
    %611 = vmatpush1.bf16.msra.mxu0 0
    %612 = vmatprep.subr.bf16.mxu0 0
    %613 = vmatpush1.bf16.msra.mxu0 0
    %614 = vmatprep.subr.bf16.mxu0 0
    %615 = vmatpush1.bf16.msra.mxu0 0
    %616 = vmatprep.subr.bf16.mxu0 0
    %617 = vmatpush1.bf16.msra.mxu0 0
    %618 = vmatprep.mubr.bf16.mxu0 0
    %619 = vmatmul.mubr.bf16.gmra.mrb[0].mxu0 %v514
    %v620 = vpop.f32.mrb[0].mxu0
    %v621 = vadd.f32 %v536, %v620
    %v622 = vpop.f32.mrb[0].mxu0
    %v623 = vpop.f32.mrb[0].mxu0
    %v624 = vpop.f32.mrb[0].mxu0
    %625 = vdwg.mxu0
    %v626 = vmax.f32 %v621, 0.0
    %v627 = vpack.c.bf16 %v626, %v626
    %v628 = vld [vmem:[%s5] sm:$0xf]
    %v629 = vld [vmem:[%s5 + $0x4] sm:$0xf]
    %v630 = vld [vmem:[%s5 + $0x8] sm:$0xf]
    %v631 = vld [vmem:[%s5 + $0xc] sm:$0xf]
    %v632 = vld [vmem:[%s5 + $0x10] sm:$0xf]
    %v633 = vld [vmem:[%s5 + $0x14] sm:$0xf]
    %v634 = vld [vmem:[%s5 + $0x18] sm:$0xf]
    %v635 = vld [vmem:[%s5 + $0x1c] sm:$0xf]
    %v636 = vld [vmem:[%s5 + $0x20] sm:$0xf]
    %v637 = vld [vmem:[%s5 + $0x24] sm:$0xf]
    %v638 = vld [vmem:[%s5 + $0x28] sm:$0xf]
    %v639 = vld [vmem:[%s5 + $0x2c] sm:$0xf]
    %v640 = vld [vmem:[%s5 + $0x30] sm:$0xf]
    %v641 = vld [vmem:[%s5 + $0x34] sm:$0xf]
    %v642 = vld [vmem:[%s5 + $0x38] sm:$0xf]
    %v643 = vld [vmem:[%s5 + $0x3c] sm:$0xf]
    %v644 = vld [vmem:[%s6] sm:$0x1]
    %v646 = vlaneseq
    %v647 = vshrl.u32 %v646, 7
    %v648 = vsub.s32 0, %v647
    %v649 = vrot.slane %v644, %v648
    %v667 = vunpack.c.l.b16 %v628
    %v668 = vunpack.c.l.b16 %v629
    %v669 = vunpack.c.l.b16 %v630
    %v670 = vunpack.c.l.b16 %v631
    %v671 = vunpack.c.l.b16 %v632
    %v672 = vunpack.c.l.b16 %v633
    %v673 = vunpack.c.l.b16 %v634
    %v674 = vunpack.c.l.b16 %v635
    %v675 = vunpack.c.l.b16 %v636
    %v676 = vunpack.c.l.b16 %v637
    %v677 = vunpack.c.l.b16 %v638
    %v678 = vunpack.c.l.b16 %v639
    %v679 = vunpack.c.l.b16 %v640
    %v680 = vunpack.c.l.b16 %v641
    %v681 = vunpack.c.l.b16 %v642
    %v682 = vunpack.c.l.b16 %v643
    %v683 = vpack.c.b16 %v668, %v667
    %v684 = vpack.c.b16 %v670, %v669
    %v685 = vpack.c.b16 %v672, %v671
    %v686 = vpack.c.b16 %v674, %v673
    %v687 = vpack.c.b16 %v676, %v675
    %v688 = vpack.c.b16 %v678, %v677
    %v689 = vpack.c.b16 %v680, %v679
    %v690 = vpack.c.b16 %v682, %v681
    %699 = vmatprep.subr.bf16.mxu0 0
    %700 = vmatpush1.bf16.msra.mxu0 %v683
    %701 = vmatprep.subr.bf16.mxu0 0
    %702 = vmatpush1.bf16.msra.mxu0 %v684
    %703 = vmatprep.subr.bf16.mxu0 0
    %704 = vmatpush1.bf16.msra.mxu0 %v685
    %705 = vmatprep.subr.bf16.mxu0 0
    %706 = vmatpush1.bf16.msra.mxu0 %v686
    %707 = vmatprep.subr.bf16.mxu0 0
    %708 = vmatpush1.bf16.msra.mxu0 %v687
    %709 = vmatprep.subr.bf16.mxu0 0
    %710 = vmatpush1.bf16.msra.mxu0 %v688
    %711 = vmatprep.subr.bf16.mxu0 0
    %712 = vmatpush1.bf16.msra.mxu0 %v689
    %713 = vmatprep.subr.bf16.mxu0 0
    %714 = vmatpush1.bf16.msra.mxu0 %v690
    %715 = vmatprep.subr.bf16.mxu0 0
    %716 = vmatpush1.bf16.msra.mxu0 0
    %717 = vmatprep.subr.bf16.mxu0 0
    %718 = vmatpush1.bf16.msra.mxu0 0
    %719 = vmatprep.subr.bf16.mxu0 0
    %720 = vmatpush1.bf16.msra.mxu0 0
    %721 = vmatprep.subr.bf16.mxu0 0
    %722 = vmatpush1.bf16.msra.mxu0 0
    %723 = vmatprep.subr.bf16.mxu0 0
    %724 = vmatpush1.bf16.msra.mxu0 0
    %725 = vmatprep.subr.bf16.mxu0 0
    %726 = vmatpush1.bf16.msra.mxu0 0
    %727 = vmatprep.subr.bf16.mxu0 0
    %728 = vmatpush1.bf16.msra.mxu0 0
    %729 = vmatprep.subr.bf16.mxu0 0
    %730 = vmatpush1.bf16.msra.mxu0 0
    %731 = vmatprep.mubr.bf16.mxu0 0
    %732 = vmatmul.mubr.bf16.gmra.mrb[0].mxu0 %v627
    %v733 = vpop.f32.mrb[0].mxu0
    %v734 = vadd.f32 %v649, %v733
    %v735 = vpop.f32.mrb[0].mxu0
    %v736 = vpop.f32.mrb[0].mxu0
    %v737 = vpop.f32.mrb[0].mxu0
    %738 = vdwg.mxu0
    %739 = vst [vmem:[#allocation2] sm:$0x3] %v734
    // Predicated region
    $region30: #{dropnet_forward.5} parent=1 // pred_check
      _
    $region31: #{dropnet_forward.5} parent=1 // pred_check_branch
      %741 = sbr.rel (0) target = $region33
    $region32: #{dropnet_forward.5} parent=1 // pred_region
      %s743 = ssub.s32 32, 32
      %744 = vsyncadd [#allocation3], %s743
      %s746 = sshll.u32 [#allocation2], 4
      %s747 = int_to_ptr.vmem [resolvable:$true] %s746
      %749 = dma.vmem_to_hbm [thread:$0]  %s747, 32, %s7, [#allocation3]
    $region33: #{dropnet_forward.5} parent=1 // pred_fallthru
      _
    // Predicated region
    $region34: #{dropnet_forward.5} parent=1 // pred_check
      _
    $region35: #{dropnet_forward.5} parent=1 // pred_check_branch
      %751 = sbr.rel (0) target = $region37
    $region36: #{dropnet_forward.5} parent=1 // pred_region
      %752 = dma.done [#allocation3], 32
    $region37: #{dropnet_forward.5} parent=1 // pred_fallthru
      _
    %753 = vsyncpa [#allocation3], 1

</llo_original>
